<compile_context>
chip_gen: v7x
topology: tpu7x:2x2x1
jax: 0.10.0
libtpu: 0.0.40
codegen_flags: <defaults>
</compile_context>

<pallas_src>
import functools

import jax
import jax.numpy as jnp
from jax import lax
from jax.experimental import pallas as pl
from jax.experimental.pallas import tpu as pltpu


def _dmt3_kernel(x_ref, w_ref, gamma_ref, beta_ref, o_ref, acc_ref, *, H, W):
    """3x3 conv (pad=1, no bias) + train-mode BN + ReLU for one Cout tile.

    x_ref:     (M, Cin)        channels-last input rows, M = N*H*W
    w_ref:     (3, 3, Cin, Ct) HWIO weight tile
    gamma_ref: (1, Ct)
    beta_ref:  (1, Ct)
    o_ref:     (M, Ct)
    acc_ref:   (M, Ct) f32 VMEM scratch accumulator
    """
    M = x_ref.shape[0]
    x = x_ref[...]                                   # (M, Cin), shared LHS

    # Per-output-row (y, x) coordinates. H and W are powers of two in this
    # module's usage, so only shifts/ands are emitted on the fast path.
    row = lax.broadcasted_iota(jnp.int32, (M, 1), 0)
    if W & (W - 1) == 0:
        xs = jnp.bitwise_and(row, W - 1)
        yq = jnp.right_shift(row, W.bit_length() - 1)
    else:
        xs = row % W
        yq = row // W
    if H & (H - 1) == 0:
        ys = jnp.bitwise_and(yq, H - 1)
    else:
        ys = yq % H

    # Hoisted boundary masks: 4 comparisons, reused by the 8 non-center taps.
    # `None` marks a direction that never leaves the image for that tap index.
    y_mask = {0: ys >= 1, 1: None, 2: ys <= H - 2}
    x_mask = {0: xs >= 1, 1: None, 2: xs <= W - 2}

    # 9 taps: matmul first (aligned shapes only), then shift the result rows
    # with pltpu.roll and zero rows whose source pixel is out of bounds.
    taps = [(dy, dx) for dy in range(3) for dx in range(3)]
    for t, (dy, dx) in enumerate(taps):
        contrib = jnp.dot(x, w_ref[dy, dx], preferred_element_type=jnp.float32)
        delta = (dy - 1) * W + (dx - 1)              # flat row offset of tap
        if delta != 0:
            contrib = pltpu.roll(contrib, shift=(-delta) % M, axis=0)
        masks = [m for m in (y_mask[dy], x_mask[dx]) if m is not None]
        if masks:                                    # center tap: no select
            valid = masks[0] if len(masks) == 1 else (masks[0] & masks[1])
            contrib = jnp.where(valid, contrib, 0.0)
        if t == 0:
            acc_ref[...] = contrib
        else:
            acc_ref[...] += contrib

    # BatchNorm2d, training-mode batch statistics (biased var, eps=1e-5).
    # gamma * inv_std folded into one per-channel scale; then ReLU.
    acc = acc_ref[...]
    mean = jnp.mean(acc, axis=0, keepdims=True)      # (1, Ct)
    centered = acc - mean
    var = jnp.mean(centered * centered, axis=0, keepdims=True)
    scale = gamma_ref[...] * lax.rsqrt(var + 1e-5)
    y = centered * scale + beta_ref[...]
    o_ref[...] = jnp.maximum(y, 0.0).astype(o_ref.dtype)
    # TODO(synk): running_mean / running_var buffer updates (training-time side
    # effect of nn.BatchNorm2d) are not materialized; only the forward output is.


def block_of_dmt3(x_nchw, w_oihw, bias, gamma, beta):
    """NCHW in / NCHW out forward matching the PyTorch module.

    `bias` is accepted for interface parity but never reaches the kernel: under
    training-mode BatchNorm the conv bias cancels exactly (mean subtraction),
    so it cannot affect the forward output.
    """
    del bias
    N, Cin, H, W = x_nchw.shape
    Cout = w_oihw.shape[0]
    M = N * H * W
    assert M % 8 == 0, "N*H*W must be a multiple of 8 for (8,128) tiling"

    # Cout tiling: blocks of 128 lanes -> megacore parallelism on v7x and
    # pipelined (double-buffered) weight DMA on every generation.
    Ct = 128 if (Cout % 128 == 0 and Cout > 128) else Cout
    grid = (Cout // Ct,)

    # Only the layout ops forced by the NCHW/OIHW module interface remain here;
    # no jnp.pad (conv boundaries are masked inside the kernel).
    x2d = jnp.transpose(x_nchw, (0, 2, 3, 1)).reshape(M, Cin)
    w_hwio = jnp.transpose(w_oihw, (2, 3, 1, 0))      # OIHW -> HWIO
    g2 = gamma.reshape(1, Cout)
    be2 = beta.reshape(1, Cout)

    kernel = functools.partial(_dmt3_kernel, H=H, W=W)

    itemsize = jnp.dtype(x_nchw.dtype).itemsize
    cost = pl.CostEstimate(
        flops=2 * M * Cin * Cout * 9 + 8 * M * Cout,
        transcendentals=Cout,
        bytes_accessed=(M * Cin + 9 * Cin * Cout + 2 * Cout + M * Cout) * itemsize,
    )

    out2d = pl.pallas_call(
        kernel,
        out_shape=jax.ShapeDtypeStruct((M, Cout), x_nchw.dtype),
        grid_spec=pltpu.PrefetchScalarGridSpec(
            num_scalar_prefetch=0,
            grid=grid,
            in_specs=[
                pl.BlockSpec((M, Cin), lambda j: (0, 0)),
                pl.BlockSpec((3, 3, Cin, Ct), lambda j: (0, 0, 0, j)),
                pl.BlockSpec((1, Ct), lambda j: (0, j)),
                pl.BlockSpec((1, Ct), lambda j: (0, j)),
            ],
            out_specs=pl.BlockSpec((M, Ct), lambda j: (0, j)),
            scratch_shapes=[pltpu.VMEM((M, Ct), jnp.float32)],
        ),
        compiler_params=pltpu.CompilerParams(
            dimension_semantics=("parallel",)),
        cost_estimate=cost,
    )(x2d, w_hwio, g2, be2)

    return jnp.transpose(out2d.reshape(N, H, W, Cout), (0, 3, 1, 2))


def _reference(x_nchw, w_oihw, bias, gamma, beta):
    """Pure-JAX reference of the PyTorch forward (train-mode BN)."""
    y = lax.conv_general_dilated(
        x_nchw, w_oihw, window_strides=(1, 1), padding="SAME",
        dimension_numbers=("NCHW", "OIHW", "NCHW"))
    y = y + bias[None, :, None, None]
    mean = jnp.mean(y, axis=(0, 2, 3), keepdims=True)
    var = jnp.mean((y - mean) ** 2, axis=(0, 2, 3), keepdims=True)
    y = (y - mean) / jnp.sqrt(var + 1e-5)
    y = y * gamma[None, :, None, None] + beta[None, :, None, None]
    return jnp.maximum(y, 0.0)


if __name__ == "__main__":
    key = jax.random.PRNGKey(0)
    kx, kw, kb, kg, kbe = jax.random.split(key, 5)

    # Channels fixed at 256 by the module; small batch/spatial dims.
    N, C, H, W = 2, 256, 8, 8
    x = jax.random.normal(kx, (N, C, H, W), jnp.float32)
    w = 0.02 * jax.random.normal(kw, (256, 256, 3, 3), jnp.float32)   # OIHW
    b = 0.10 * jax.random.normal(kb, (256,), jnp.float32)
    gamma = 1.0 + 0.1 * jax.random.normal(kg, (256,), jnp.float32)
    beta = 0.1 * jax.random.normal(kbe, (256,), jnp.float32)

    out = jax.jit(block_of_dmt3)(x, w, b, gamma, beta)
    out = jax.block_until_ready(out)

    ref = _reference(x, w, b, gamma, beta)
    assert out.shape == (N, C, H, W), out.shape
    max_err = float(jnp.max(jnp.abs(out - ref)))
    assert jnp.allclose(out, ref, atol=1e-3, rtol=1e-3), max_err

    print("KERNEL_OK")
</pallas_src>

<mosaic_0001>
module attributes {stable_mosaic.version = 11 : i64} {
  func.func @_dmt3_kernel(%arg0: i32, %arg1: memref<128x256xf32, #tpu.memory_space<vmem>>, %arg2: memref<3x3x256x128xf32, #tpu.memory_space<vmem>>, %arg3: memref<1x128xf32, #tpu.memory_space<vmem>>, %arg4: memref<1x128xf32, #tpu.memory_space<vmem>>, %arg5: memref<128x128xf32, #tpu.memory_space<vmem>>, %arg6: memref<128x128xf32, #tpu.memory_space<vmem>>) attributes {dimension_semantics = [#tpu.dimension_semantics<parallel>], iteration_bounds = array<i64: 2>, scalar_prefetch = 0 : i64, scratch_operands = 1 : i64, tpu.core_type = #tpu.core_type<tc>, window_params = [{pipeline_mode = #tpu.pipeline_mode<synchronous>, transform_indices = @transform_0, window_bounds = array<i64: 128, 256>}, {transform_indices = @transform_1, window_bounds = array<i64: 3, 3, 256, 128>}, {transform_indices = @transform_2, window_bounds = array<i64: 1, 128>}, {transform_indices = @transform_3, window_bounds = array<i64: 1, 128>}, {transform_indices = @transform_4, window_bounds = array<i64: 128, 128>}]} {
    %c0 = arith.constant 0 : index
    %c0_0 = arith.constant 0 : index
    %0 = vector.load %arg1[%c0, %c0_0] : memref<128x256xf32, #tpu.memory_space<vmem>>, vector<128x256xf32>
    %1 = tpu.iota {dimensions = array<i32: 0>} : vector<128x1xi32>
    %c7_i32 = arith.constant 7 : i32
    %2 = vector.broadcast %c7_i32 : i32 to vector<128x1xi32>
    %3 = arith.andi %1, %2 : vector<128x1xi32>
    %c3_i32 = arith.constant 3 : i32
    %4 = vector.broadcast %c3_i32 : i32 to vector<128x1xi32>
    %5 = arith.shrsi %1, %4 : vector<128x1xi32>
    %c7_i32_1 = arith.constant 7 : i32
    %6 = vector.broadcast %c7_i32_1 : i32 to vector<128x1xi32>
    %7 = arith.andi %5, %6 : vector<128x1xi32>
    %c1_i32 = arith.constant 1 : i32
    %8 = vector.broadcast %c1_i32 : i32 to vector<128x1xi32>
    %9 = arith.cmpi sge, %7, %8 : vector<128x1xi32>
    %c6_i32 = arith.constant 6 : i32
    %10 = vector.broadcast %c6_i32 : i32 to vector<128x1xi32>
    %11 = arith.cmpi sle, %7, %10 : vector<128x1xi32>
    %c1_i32_2 = arith.constant 1 : i32
    %12 = vector.broadcast %c1_i32_2 : i32 to vector<128x1xi32>
    %13 = arith.cmpi sge, %3, %12 : vector<128x1xi32>
    %c6_i32_3 = arith.constant 6 : i32
    %14 = vector.broadcast %c6_i32_3 : i32 to vector<128x1xi32>
    %15 = arith.cmpi sle, %3, %14 : vector<128x1xi32>
    %c0_4 = arith.constant 0 : index
    %c0_5 = arith.constant 0 : index
    %c0_6 = arith.constant 0 : index
    %c0_7 = arith.constant 0 : index
    %16 = vector.load %arg2[%c0_4, %c0_5, %c0_6, %c0_7] : memref<3x3x256x128xf32, #tpu.memory_space<vmem>>, vector<1x1x256x128xf32>
    %17 = vector.shape_cast %16 : vector<1x1x256x128xf32> to vector<256x128xf32>
    %cst = arith.constant dense<0.000000e+00> : vector<128x128xf32>
    %18 = tpu.matmul %0, %17, %cst {dimension_numbers = #tpu.dot_dimension_numbers<[1], [0], [0], [1], [0, 0, 1, 1], [], []>} : vector<128x256xf32>, vector<256x128xf32>, vector<128x128xf32> -> vector<128x128xf32>
    %c9_i32 = arith.constant 9 : i32
    %19 = tpu.dynamic_rotate %18 by %c9_i32 dim 0 : vector<128x128xf32>, i32 -> vector<128x128xf32>
    %20 = arith.andi %9, %13 : vector<128x1xi1>
    %cst_8 = arith.constant 0.000000e+00 : f32
    %21 = vector.shape_cast %20 : vector<128x1xi1> to vector<128x1xi1>
    %22 = vector.broadcast %21 : vector<128x1xi1> to vector<128x128xi1>
    %23 = vector.broadcast %cst_8 : f32 to vector<128x128xf32>
    %24 = arith.select %22, %19, %23 : vector<128x128xi1>, vector<128x128xf32>
    %c0_9 = arith.constant 0 : index
    %c0_10 = arith.constant 0 : index
    %25 = vector.load %arg6[%c0_9, %c0_10] : memref<128x128xf32, #tpu.memory_space<vmem>>, vector<128x128xf32>
    tpu.vector_store %arg6[%c0_9, %c0_10], %24 {strides = array<i32>} : memref<128x128xf32, #tpu.memory_space<vmem>>, vector<128x128xf32>,
    %c0_11 = arith.constant 0 : index
    %c1 = arith.constant 1 : index
    %c0_12 = arith.constant 0 : index
    %c0_13 = arith.constant 0 : index
    %26 = vector.load %arg2[%c0_11, %c1, %c0_12, %c0_13] : memref<3x3x256x128xf32, #tpu.memory_space<vmem>>, vector<1x1x256x128xf32>
    %27 = vector.shape_cast %26 : vector<1x1x256x128xf32> to vector<256x128xf32>
    %cst_14 = arith.constant dense<0.000000e+00> : vector<128x128xf32>
    %28 = tpu.matmul %0, %27, %cst_14 {dimension_numbers = #tpu.dot_dimension_numbers<[1], [0], [0], [1], [0, 0, 1, 1], [], []>} : vector<128x256xf32>, vector<256x128xf32>, vector<128x128xf32> -> vector<128x128xf32>
    %c8_i32 = arith.constant 8 : i32
    %29 = tpu.dynamic_rotate %28 by %c8_i32 dim 0 : vector<128x128xf32>, i32 -> vector<128x128xf32>
    %cst_15 = arith.constant 0.000000e+00 : f32
    %30 = vector.shape_cast %9 : vector<128x1xi1> to vector<128x1xi1>
    %31 = vector.broadcast %30 : vector<128x1xi1> to vector<128x128xi1>
    %32 = vector.broadcast %cst_15 : f32 to vector<128x128xf32>
    %33 = arith.select %31, %29, %32 : vector<128x128xi1>, vector<128x128xf32>
    %c0_16 = arith.constant 0 : index
    %c0_17 = arith.constant 0 : index
    %34 = vector.load %arg6[%c0_16, %c0_17] : memref<128x128xf32, #tpu.memory_space<vmem>>, vector<128x128xf32>
    %35 = arith.addf %34, %33 : vector<128x128xf32>
    %c0_18 = arith.constant 0 : index
    %c0_19 = arith.constant 0 : index
    %36 = vector.load %arg6[%c0_18, %c0_19] : memref<128x128xf32, #tpu.memory_space<vmem>>, vector<128x128xf32>
    tpu.vector_store %arg6[%c0_18, %c0_19], %35 {strides = array<i32>} : memref<128x128xf32, #tpu.memory_space<vmem>>, vector<128x128xf32>,
    %c0_20 = arith.constant 0 : index
    %c2 = arith.constant 2 : index
    %c0_21 = arith.constant 0 : index
    %c0_22 = arith.constant 0 : index
    %37 = vector.load %arg2[%c0_20, %c2, %c0_21, %c0_22] : memref<3x3x256x128xf32, #tpu.memory_space<vmem>>, vector<1x1x256x128xf32>
    %38 = vector.shape_cast %37 : vector<1x1x256x128xf32> to vector<256x128xf32>
    %cst_23 = arith.constant dense<0.000000e+00> : vector<128x128xf32>
    %39 = tpu.matmul %0, %38, %cst_23 {dimension_numbers = #tpu.dot_dimension_numbers<[1], [0], [0], [1], [0, 0, 1, 1], [], []>} : vector<128x256xf32>, vector<256x128xf32>, vector<128x128xf32> -> vector<128x128xf32>
    %c7_i32_24 = arith.constant 7 : i32
    %40 = tpu.dynamic_rotate %39 by %c7_i32_24 dim 0 : vector<128x128xf32>, i32 -> vector<128x128xf32>
    %41 = arith.andi %9, %15 : vector<128x1xi1>
    %cst_25 = arith.constant 0.000000e+00 : f32
    %42 = vector.shape_cast %41 : vector<128x1xi1> to vector<128x1xi1>
    %43 = vector.broadcast %42 : vector<128x1xi1> to vector<128x128xi1>
    %44 = vector.broadcast %cst_25 : f32 to vector<128x128xf32>
    %45 = arith.select %43, %40, %44 : vector<128x128xi1>, vector<128x128xf32>
    %c0_26 = arith.constant 0 : index
    %c0_27 = arith.constant 0 : index
    %46 = vector.load %arg6[%c0_26, %c0_27] : memref<128x128xf32, #tpu.memory_space<vmem>>, vector<128x128xf32>
    %47 = arith.addf %46, %45 : vector<128x128xf32>
    %c0_28 = arith.constant 0 : index
    %c0_29 = arith.constant 0 : index
    %48 = vector.load %arg6[%c0_28, %c0_29] : memref<128x128xf32, #tpu.memory_space<vmem>>, vector<128x128xf32>
    tpu.vector_store %arg6[%c0_28, %c0_29], %47 {strides = array<i32>} : memref<128x128xf32, #tpu.memory_space<vmem>>, vector<128x128xf32>,
    %c1_30 = arith.constant 1 : index
    %c0_31 = arith.constant 0 : index
    %c0_32 = arith.constant 0 : index
    %c0_33 = arith.constant 0 : index
    %49 = vector.load %arg2[%c1_30, %c0_31, %c0_32, %c0_33] : memref<3x3x256x128xf32, #tpu.memory_space<vmem>>, vector<1x1x256x128xf32>
    %50 = vector.shape_cast %49 : vector<1x1x256x128xf32> to vector<256x128xf32>
    %cst_34 = arith.constant dense<0.000000e+00> : vector<128x128xf32>
    %51 = tpu.matmul %0, %50, %cst_34 {dimension_numbers = #tpu.dot_dimension_numbers<[1], [0], [0], [1], [0, 0, 1, 1], [], []>} : vector<128x256xf32>, vector<256x128xf32>, vector<128x128xf32> -> vector<128x128xf32>
    %c1_i32_35 = arith.constant 1 : i32
    %52 = tpu.dynamic_rotate %51 by %c1_i32_35 dim 0 : vector<128x128xf32>, i32 -> vector<128x128xf32>
    %cst_36 = arith.constant 0.000000e+00 : f32
    %53 = vector.shape_cast %13 : vector<128x1xi1> to vector<128x1xi1>
    %54 = vector.broadcast %53 : vector<128x1xi1> to vector<128x128xi1>
    %55 = vector.broadcast %cst_36 : f32 to vector<128x128xf32>
    %56 = arith.select %54, %52, %55 : vector<128x128xi1>, vector<128x128xf32>
    %c0_37 = arith.constant 0 : index
    %c0_38 = arith.constant 0 : index
    %57 = vector.load %arg6[%c0_37, %c0_38] : memref<128x128xf32, #tpu.memory_space<vmem>>, vector<128x128xf32>
    %58 = arith.addf %57, %56 : vector<128x128xf32>
    %c0_39 = arith.constant 0 : index
    %c0_40 = arith.constant 0 : index
    %59 = vector.load %arg6[%c0_39, %c0_40] : memref<128x128xf32, #tpu.memory_space<vmem>>, vector<128x128xf32>
    tpu.vector_store %arg6[%c0_39, %c0_40], %58 {strides = array<i32>} : memref<128x128xf32, #tpu.memory_space<vmem>>, vector<128x128xf32>,
    %c1_41 = arith.constant 1 : index
    %c1_42 = arith.constant 1 : index
    %c0_43 = arith.constant 0 : index
    %c0_44 = arith.constant 0 : index
    %60 = vector.load %arg2[%c1_41, %c1_42, %c0_43, %c0_44] : memref<3x3x256x128xf32, #tpu.memory_space<vmem>>, vector<1x1x256x128xf32>
    %61 = vector.shape_cast %60 : vector<1x1x256x128xf32> to vector<256x128xf32>
    %cst_45 = arith.constant dense<0.000000e+00> : vector<128x128xf32>
    %62 = tpu.matmul %0, %61, %cst_45 {dimension_numbers = #tpu.dot_dimension_numbers<[1], [0], [0], [1], [0, 0, 1, 1], [], []>} : vector<128x256xf32>, vector<256x128xf32>, vector<128x128xf32> -> vector<128x128xf32>
    %c0_46 = arith.constant 0 : index
    %c0_47 = arith.constant 0 : index
    %63 = vector.load %arg6[%c0_46, %c0_47] : memref<128x128xf32, #tpu.memory_space<vmem>>, vector<128x128xf32>
    %64 = arith.addf %63, %62 : vector<128x128xf32>
    %c0_48 = arith.constant 0 : index
    %c0_49 = arith.constant 0 : index
    %65 = vector.load %arg6[%c0_48, %c0_49] : memref<128x128xf32, #tpu.memory_space<vmem>>, vector<128x128xf32>
    tpu.vector_store %arg6[%c0_48, %c0_49], %64 {strides = array<i32>} : memref<128x128xf32, #tpu.memory_space<vmem>>, vector<128x128xf32>,
    %c1_50 = arith.constant 1 : index
    %c2_51 = arith.constant 2 : index
    %c0_52 = arith.constant 0 : index
    %c0_53 = arith.constant 0 : index
    %66 = vector.load %arg2[%c1_50, %c2_51, %c0_52, %c0_53] : memref<3x3x256x128xf32, #tpu.memory_space<vmem>>, vector<1x1x256x128xf32>
    %67 = vector.shape_cast %66 : vector<1x1x256x128xf32> to vector<256x128xf32>
    %cst_54 = arith.constant dense<0.000000e+00> : vector<128x128xf32>
    %68 = tpu.matmul %0, %67, %cst_54 {dimension_numbers = #tpu.dot_dimension_numbers<[1], [0], [0], [1], [0, 0, 1, 1], [], []>} : vector<128x256xf32>, vector<256x128xf32>, vector<128x128xf32> -> vector<128x128xf32>
    %c127_i32 = arith.constant 127 : i32
    %69 = tpu.dynamic_rotate %68 by %c127_i32 dim 0 : vector<128x128xf32>, i32 -> vector<128x128xf32>
    %cst_55 = arith.constant 0.000000e+00 : f32
    %70 = vector.shape_cast %15 : vector<128x1xi1> to vector<128x1xi1>
    %71 = vector.broadcast %70 : vector<128x1xi1> to vector<128x128xi1>
    %72 = vector.broadcast %cst_55 : f32 to vector<128x128xf32>
    %73 = arith.select %71, %69, %72 : vector<128x128xi1>, vector<128x128xf32>
    %c0_56 = arith.constant 0 : index
    %c0_57 = arith.constant 0 : index
    %74 = vector.load %arg6[%c0_56, %c0_57] : memref<128x128xf32, #tpu.memory_space<vmem>>, vector<128x128xf32>
    %75 = arith.addf %74, %73 : vector<128x128xf32>
    %c0_58 = arith.constant 0 : index
    %c0_59 = arith.constant 0 : index
    %76 = vector.load %arg6[%c0_58, %c0_59] : memref<128x128xf32, #tpu.memory_space<vmem>>, vector<128x128xf32>
    tpu.vector_store %arg6[%c0_58, %c0_59], %75 {strides = array<i32>} : memref<128x128xf32, #tpu.memory_space<vmem>>, vector<128x128xf32>,
    %c2_60 = arith.constant 2 : index
    %c0_61 = arith.constant 0 : index
    %c0_62 = arith.constant 0 : index
    %c0_63 = arith.constant 0 : index
    %77 = vector.load %arg2[%c2_60, %c0_61, %c0_62, %c0_63] : memref<3x3x256x128xf32, #tpu.memory_space<vmem>>, vector<1x1x256x128xf32>
    %78 = vector.shape_cast %77 : vector<1x1x256x128xf32> to vector<256x128xf32>
    %cst_64 = arith.constant dense<0.000000e+00> : vector<128x128xf32>
    %79 = tpu.matmul %0, %78, %cst_64 {dimension_numbers = #tpu.dot_dimension_numbers<[1], [0], [0], [1], [0, 0, 1, 1], [], []>} : vector<128x256xf32>, vector<256x128xf32>, vector<128x128xf32> -> vector<128x128xf32>
    %c121_i32 = arith.constant 121 : i32
    %80 = tpu.dynamic_rotate %79 by %c121_i32 dim 0 : vector<128x128xf32>, i32 -> vector<128x128xf32>
    %81 = arith.andi %11, %13 : vector<128x1xi1>
    %cst_65 = arith.constant 0.000000e+00 : f32
    %82 = vector.shape_cast %81 : vector<128x1xi1> to vector<128x1xi1>
    %83 = vector.broadcast %82 : vector<128x1xi1> to vector<128x128xi1>
    %84 = vector.broadcast %cst_65 : f32 to vector<128x128xf32>
    %85 = arith.select %83, %80, %84 : vector<128x128xi1>, vector<128x128xf32>
    %c0_66 = arith.constant 0 : index
    %c0_67 = arith.constant 0 : index
    %86 = vector.load %arg6[%c0_66, %c0_67] : memref<128x128xf32, #tpu.memory_space<vmem>>, vector<128x128xf32>
    %87 = arith.addf %86, %85 : vector<128x128xf32>
    %c0_68 = arith.constant 0 : index
    %c0_69 = arith.constant 0 : index
    %88 = vector.load %arg6[%c0_68, %c0_69] : memref<128x128xf32, #tpu.memory_space<vmem>>, vector<128x128xf32>
    tpu.vector_store %arg6[%c0_68, %c0_69], %87 {strides = array<i32>} : memref<128x128xf32, #tpu.memory_space<vmem>>, vector<128x128xf32>,
    %c2_70 = arith.constant 2 : index
    %c1_71 = arith.constant 1 : index
    %c0_72 = arith.constant 0 : index
    %c0_73 = arith.constant 0 : index
    %89 = vector.load %arg2[%c2_70, %c1_71, %c0_72, %c0_73] : memref<3x3x256x128xf32, #tpu.memory_space<vmem>>, vector<1x1x256x128xf32>
    %90 = vector.shape_cast %89 : vector<1x1x256x128xf32> to vector<256x128xf32>
    %cst_74 = arith.constant dense<0.000000e+00> : vector<128x128xf32>
    %91 = tpu.matmul %0, %90, %cst_74 {dimension_numbers = #tpu.dot_dimension_numbers<[1], [0], [0], [1], [0, 0, 1, 1], [], []>} : vector<128x256xf32>, vector<256x128xf32>, vector<128x128xf32> -> vector<128x128xf32>
    %c120_i32 = arith.constant 120 : i32
    %92 = tpu.dynamic_rotate %91 by %c120_i32 dim 0 : vector<128x128xf32>, i32 -> vector<128x128xf32>
    %cst_75 = arith.constant 0.000000e+00 : f32
    %93 = vector.shape_cast %11 : vector<128x1xi1> to vector<128x1xi1>
    %94 = vector.broadcast %93 : vector<128x1xi1> to vector<128x128xi1>
    %95 = vector.broadcast %cst_75 : f32 to vector<128x128xf32>
    %96 = arith.select %94, %92, %95 : vector<128x128xi1>, vector<128x128xf32>
    %c0_76 = arith.constant 0 : index
    %c0_77 = arith.constant 0 : index
    %97 = vector.load %arg6[%c0_76, %c0_77] : memref<128x128xf32, #tpu.memory_space<vmem>>, vector<128x128xf32>
    %98 = arith.addf %97, %96 : vector<128x128xf32>
    %c0_78 = arith.constant 0 : index
    %c0_79 = arith.constant 0 : index
    %99 = vector.load %arg6[%c0_78, %c0_79] : memref<128x128xf32, #tpu.memory_space<vmem>>, vector<128x128xf32>
    tpu.vector_store %arg6[%c0_78, %c0_79], %98 {strides = array<i32>} : memref<128x128xf32, #tpu.memory_space<vmem>>, vector<128x128xf32>,
    %c2_80 = arith.constant 2 : index
    %c2_81 = arith.constant 2 : index
    %c0_82 = arith.constant 0 : index
    %c0_83 = arith.constant 0 : index
    %100 = vector.load %arg2[%c2_80, %c2_81, %c0_82, %c0_83] : memref<3x3x256x128xf32, #tpu.memory_space<vmem>>, vector<1x1x256x128xf32>
    %101 = vector.shape_cast %100 : vector<1x1x256x128xf32> to vector<256x128xf32>
    %cst_84 = arith.constant dense<0.000000e+00> : vector<128x128xf32>
    %102 = tpu.matmul %0, %101, %cst_84 {dimension_numbers = #tpu.dot_dimension_numbers<[1], [0], [0], [1], [0, 0, 1, 1], [], []>} : vector<128x256xf32>, vector<256x128xf32>, vector<128x128xf32> -> vector<128x128xf32>
    %c119_i32 = arith.constant 119 : i32
    %103 = tpu.dynamic_rotate %102 by %c119_i32 dim 0 : vector<128x128xf32>, i32 -> vector<128x128xf32>
    %104 = arith.andi %11, %15 : vector<128x1xi1>
    %cst_85 = arith.constant 0.000000e+00 : f32
    %105 = vector.shape_cast %104 : vector<128x1xi1> to vector<128x1xi1>
    %106 = vector.broadcast %105 : vector<128x1xi1> to vector<128x128xi1>
    %107 = vector.broadcast %cst_85 : f32 to vector<128x128xf32>
    %108 = arith.select %106, %103, %107 : vector<128x128xi1>, vector<128x128xf32>
    %c0_86 = arith.constant 0 : index
    %c0_87 = arith.constant 0 : index
    %109 = vector.load %arg6[%c0_86, %c0_87] : memref<128x128xf32, #tpu.memory_space<vmem>>, vector<128x128xf32>
    %110 = arith.addf %109, %108 : vector<128x128xf32>
    %c0_88 = arith.constant 0 : index
    %c0_89 = arith.constant 0 : index
    %111 = vector.load %arg6[%c0_88, %c0_89] : memref<128x128xf32, #tpu.memory_space<vmem>>, vector<128x128xf32>
    tpu.vector_store %arg6[%c0_88, %c0_89], %110 {strides = array<i32>} : memref<128x128xf32, #tpu.memory_space<vmem>>, vector<128x128xf32>,
    %c0_90 = arith.constant 0 : index
    %c0_91 = arith.constant 0 : index
    %112 = vector.load %arg6[%c0_90, %c0_91] : memref<128x128xf32, #tpu.memory_space<vmem>>, vector<128x128xf32>
    %cst_92 = arith.constant dense<0.000000e+00> : vector<128xf32>
    %113 = vector.multi_reduction <add>, %112, %cst_92 [0] : vector<128x128xf32> to vector<128xf32>
    %114 = vector.shape_cast %113 : vector<128xf32> to vector<1x128xf32>
    %cst_93 = arith.constant 1.280000e+02 : f32
    %115 = vector.broadcast %cst_93 : f32 to vector<1x128xf32>
    %116 = arith.divf %114, %115 : vector<1x128xf32>
    %117 = vector.broadcast %116 : vector<1x128xf32> to vector<128x128xf32>
    %118 = arith.subf %112, %117 : vector<128x128xf32>
    %119 = arith.mulf %118, %118 : vector<128x128xf32>
    %cst_94 = arith.constant dense<0.000000e+00> : vector<128xf32>
    %120 = vector.multi_reduction <add>, %119, %cst_94 [0] : vector<128x128xf32> to vector<128xf32>
    %121 = vector.shape_cast %120 : vector<128xf32> to vector<1x128xf32>
    %cst_95 = arith.constant 1.280000e+02 : f32
    %122 = vector.broadcast %cst_95 : f32 to vector<1x128xf32>
    %123 = arith.divf %121, %122 : vector<1x128xf32>
    %c0_96 = arith.constant 0 : index
    %c0_97 = arith.constant 0 : index
    %124 = vector.load %arg3[%c0_96, %c0_97] : memref<1x128xf32, #tpu.memory_space<vmem>>, vector<1x128xf32>
    %cst_98 = arith.constant 9.99999974E-6 : f32
    %125 = vector.broadcast %cst_98 : f32 to vector<1x128xf32>
    %126 = arith.addf %123, %125 : vector<1x128xf32>
    %127 = math.rsqrt %126 : vector<1x128xf32>
    %128 = arith.mulf %124, %127 : vector<1x128xf32>
    %129 = vector.broadcast %128 : vector<1x128xf32> to vector<128x128xf32>
    %130 = arith.mulf %118, %129 : vector<128x128xf32>
    %c0_99 = arith.constant 0 : index
    %c0_100 = arith.constant 0 : index
    %131 = vector.load %arg4[%c0_99, %c0_100] : memref<1x128xf32, #tpu.memory_space<vmem>>, vector<1x128xf32>
    %132 = vector.broadcast %131 : vector<1x128xf32> to vector<128x128xf32>
    %133 = arith.addf %130, %132 : vector<128x128xf32>
    %cst_101 = arith.constant 0.000000e+00 : f32
    %134 = vector.broadcast %cst_101 : f32 to vector<128x128xf32>
    %135 = arith.maximumf %133, %134 : vector<128x128xf32>
    %c0_102 = arith.constant 0 : index
    %c0_103 = arith.constant 0 : index
    %136 = vector.load %arg5[%c0_102, %c0_103] : memref<128x128xf32, #tpu.memory_space<vmem>>, vector<128x128xf32>
    tpu.vector_store %arg5[%c0_102, %c0_103], %135 {strides = array<i32>} : memref<128x128xf32, #tpu.memory_space<vmem>>, vector<128x128xf32>,
    return
  }
  func.func @transform_0(%arg0: i32) -> (i32, i32) {
    %c0_i32 = arith.constant 0 : i32
    %c0_i32_0 = arith.constant 0 : i32
    %c0_i32_1 = arith.constant 0 : i32
    return %c0_i32, %c0_i32_0 : i32, i32
  }
  func.func @transform_1(%arg0: i32) -> (i32, i32, i32, i32) {
    %c0_i32 = arith.constant 0 : i32
    %c0_i32_0 = arith.constant 0 : i32
    %c0_i32_1 = arith.constant 0 : i32
    %c0_i32_2 = arith.constant 0 : i32
    return %c0_i32, %c0_i32_0, %c0_i32_1, %arg0 : i32, i32, i32, i32
  }
  func.func @transform_2(%arg0: i32) -> (i32, i32) {
    %c0_i32 = arith.constant 0 : i32
    %c0_i32_0 = arith.constant 0 : i32
    return %c0_i32, %arg0 : i32, i32
  }
  func.func @transform_3(%arg0: i32) -> (i32, i32) {
    %c0_i32 = arith.constant 0 : i32
    %c0_i32_0 = arith.constant 0 : i32
    return %c0_i32, %arg0 : i32, i32
  }
  func.func @transform_4(%arg0: i32) -> (i32, i32) {
    %c0_i32 = arith.constant 0 : i32
    %c0_i32_0 = arith.constant 0 : i32
    return %c0_i32, %arg0 : i32, i32
  }
}

</mosaic_0001>

<llo_original>
// kernel: block_of_dmt3.1
$region0: #{block_of_dmt3.1}
  #allocation0 [shape = 'u32[]', space=smem, size = 0x4, offset = 0x4, fixed_abs, tag = 'smem constant byte address 0x4 - core index']
  #allocation1 [shape = 'u32[144,128]{1,0:T(1,128)}', space=vmem, size = 0x12000, scoped, tag = 'internal scratch']
  #allocation2 [shape = 'f32[128,128]{1,0:T(8,128)}', space=vmem, size = 0x10000, scoped, tag = 'scratch operand']
  %s0 = inlined_call_operand.vmem [shape: f32[128,256], index: 0, kind: input, shape index: {}]
  %s1 = inlined_call_operand.vmem [shape: f32[3,3,256,256], index: 1, kind: input, shape index: {}]
  %s2 = inlined_call_operand.vmem [shape: f32[1,256], index: 2, kind: input, shape index: {}]
  %s3 = inlined_call_operand.vmem [shape: f32[1,256], index: 3, kind: input, shape index: {}]
  %s4 = inlined_call_operand.hbm [shape: f32[128,256], index: 4, kind: output, shape index: {}]
  %s5 = sld [smem:[#allocation0]]
  $region87: #{block_of_dmt3.1} parent=0
    _
  %s7 = ssub.s32 1, %s5
  %s8 = scalar_select 0, %s7, %s5
  $region1: #{block_of_dmt3.1} parent=0
    #allocation3 [shape = 'u8[2359296]{0}', space=vmem, size = 0x240000, scoped, tag = 'input window, operand 1']
    #allocation4 [shape = 'u8[131072]{0}', space=vmem, size = 0x20000, scoped, tag = 'output window, operand 0']
    #allocation5 [shape = 's32[2]{0}', space=sflag, size = 0x8, scoped, tag = 'scoped memory for block_of_dmt3.1']
    %9 = vsyncpa [#allocation5], 0
    %s10 = scalar_lea.sflag [#allocation5], 1
    %11 = vsyncpa %s10, 0
    loop: start=0, step=1, limit=4
    $region2: #{block_of_dmt3.1} parent=1 // loop_pre_header
      _
    $region3: #{block_of_dmt3.1} parent=1 // loop_header
      %s13 = sphi 0, %s17
      %p14 = scmp.ge.s32.totalorder %s13, 4
      %s21 = sphi 0, %s21
      %s23 = sphi 0, %s21
      %s24 = sphi 0, %s23
      %s38 = sphi 0, %s24
      %s44 = sphi 0, %s46
      %s47 = sphi 0, %s44
      %s48 = sphi 0, %s47
      %s64 = sphi 0, %s48
      %s70 = sphi 0, %s72
      %s73 = sphi 0, %s70
      %s74 = sphi 0, %s73
      %s90 = sphi 0, %s74
      %s96 = sphi 0, %s98
      %s99 = sphi 0, %s96
      %s100 = sphi 0, %s99
      %s116 = sphi 0, %s100
      %s122 = sphi 0, %s124
      %s125 = sphi 0, %s122
      %s126 = sphi 0, %s125
      %s142 = sphi 0, %s126
    $region4: #{block_of_dmt3.1} parent=1 // loop_header_branch
      %16 = sbr.rel (%p14) target = $region8
    $region5: #{block_of_dmt3.1} parent=1 // loop_body
      %s18 = ssub.s32 %s13, 1
      %s19 = ssub.s32 %s13, 2
      %s20 = sadd.s32 %s13, 1
      %s22 = sadd.s32 %s21, 1
      %p25 = scmp.eq.s32.totalorder %s13, 1
      %p26 = scmp.ne.s32.totalorder %s21, %s23
      %p27 = scmp.eq.s32.totalorder %s13, 0
      %p28 = por %p26, %p27
      %p29 = scmp.ne.s32.totalorder %s21, %s23
      %p30 = scmp.eq.s32.totalorder %s18, 1
      %p31 = por %p29, %p30
      %p32 = scmp.ne.s32.totalorder %s23, %s24
      %p33 = scmp.eq.s32.totalorder %s18, 0
      %p34 = por %p32, %p33
      %p35 = scmp.ne.s32.totalorder %s23, %s24
      %p36 = scmp.eq.s32.totalorder %s19, 1
      %p37 = por %p35, %p36
      %p39 = scmp.ne.s32.totalorder %s24, %s38
      %p40 = scmp.eq.s32.totalorder %s19, 0
      %p41 = por %p39, %p40
      %s42 = ssub.s32 %s13, %s20
      %p43 = scmp.eq.s32.totalorder %s42, 0
      %s45 = sadd.s32 %s44, 1
      %s46 = scalar_select %p43, %s44, %s45
      %p49 = pneg %p43
      %p50 = scmp.eq.s32.totalorder %s13, 1
      %p51 = por %p49, %p50
      %p52 = scmp.ne.s32.totalorder %s44, %s47
      %p53 = scmp.eq.s32.totalorder %s13, 0
      %p54 = por %p52, %p53
      %p55 = scmp.ne.s32.totalorder %s44, %s47
      %p56 = scmp.eq.s32.totalorder %s18, 1
      %p57 = por %p55, %p56
      %p58 = scmp.ne.s32.totalorder %s47, %s48
      %p59 = scmp.eq.s32.totalorder %s18, 0
      %p60 = por %p58, %p59
      %p61 = scmp.ne.s32.totalorder %s47, %s48
      %p62 = scmp.eq.s32.totalorder %s19, 1
      %p63 = por %p61, %p62
      %p65 = scmp.ne.s32.totalorder %s48, %s64
      %p66 = scmp.eq.s32.totalorder %s19, 0
      %p67 = por %p65, %p66
      %s68 = ssub.s32 %s13, %s20
      %p69 = scmp.eq.s32.totalorder %s68, 0
      %s71 = sadd.s32 %s70, 1
      %s72 = scalar_select %p69, %s70, %s71
      %p75 = pneg %p69
      %p76 = scmp.eq.s32.totalorder %s13, 1
      %p77 = por %p75, %p76
      %p78 = scmp.ne.s32.totalorder %s70, %s73
      %p79 = scmp.eq.s32.totalorder %s13, 0
      %p80 = por %p78, %p79
      %p81 = scmp.ne.s32.totalorder %s70, %s73
      %p82 = scmp.eq.s32.totalorder %s18, 1
      %p83 = por %p81, %p82
      %p84 = scmp.ne.s32.totalorder %s73, %s74
      %p85 = scmp.eq.s32.totalorder %s18, 0
      %p86 = por %p84, %p85
      %p87 = scmp.ne.s32.totalorder %s73, %s74
      %p88 = scmp.eq.s32.totalorder %s19, 1
      %p89 = por %p87, %p88
      %p91 = scmp.ne.s32.totalorder %s74, %s90
      %p92 = scmp.eq.s32.totalorder %s19, 0
      %p93 = por %p91, %p92
      %s94 = ssub.s32 %s13, %s20
      %p95 = scmp.eq.s32.totalorder %s94, 0
      %s97 = sadd.s32 %s96, 1
      %s98 = scalar_select %p95, %s96, %s97
      %p101 = pneg %p95
      %p102 = scmp.eq.s32.totalorder %s13, 1
      %p103 = por %p101, %p102
      %p104 = scmp.ne.s32.totalorder %s96, %s99
      %p105 = scmp.eq.s32.totalorder %s13, 0
      %p106 = por %p104, %p105
      %p107 = scmp.ne.s32.totalorder %s96, %s99
      %p108 = scmp.eq.s32.totalorder %s18, 1
      %p109 = por %p107, %p108
      %p110 = scmp.ne.s32.totalorder %s99, %s100
      %p111 = scmp.eq.s32.totalorder %s18, 0
      %p112 = por %p110, %p111
      %p113 = scmp.ne.s32.totalorder %s99, %s100
      %p114 = scmp.eq.s32.totalorder %s19, 1
      %p115 = por %p113, %p114
      %p117 = scmp.ne.s32.totalorder %s100, %s116
      %p118 = scmp.eq.s32.totalorder %s19, 0
      %p119 = por %p117, %p118
      %s120 = ssub.s32 %s13, %s20
      %p121 = scmp.eq.s32.totalorder %s120, 0
      %s123 = sadd.s32 %s122, 1
      %s124 = scalar_select %p121, %s122, %s123
      %p127 = pneg %p121
      %p128 = scmp.eq.s32.totalorder %s13, 1
      %p129 = por %p127, %p128
      %p130 = scmp.ne.s32.totalorder %s122, %s125
      %p131 = scmp.eq.s32.totalorder %s13, 0
      %p132 = por %p130, %p131
      %p133 = scmp.ne.s32.totalorder %s122, %s125
      %p134 = scmp.eq.s32.totalorder %s18, 1
      %p135 = por %p133, %p134
      %p136 = scmp.ne.s32.totalorder %s125, %s126
      %p137 = scmp.eq.s32.totalorder %s18, 0
      %p138 = por %p136, %p137
      %p139 = scmp.ne.s32.totalorder %s125, %s126
      %p140 = scmp.eq.s32.totalorder %s19, 1
      %p141 = por %p139, %p140
      %p143 = scmp.ne.s32.totalorder %s126, %s142
      %p144 = scmp.eq.s32.totalorder %s19, 0
      %p145 = por %p143, %p144
      %p146 = scmp.le.s32.totalorder 1, %s13
      %p147 = scmp.lt.s32.totalorder %s13, 3
      %p148 = pnand %p146, %p147
      %p149 = pneg %p148
      // Predicated region
      $region9: #{block_of_dmt3.1} parent=5 // pred_check
        _
      $region10: #{block_of_dmt3.1} parent=5 // pred_check_branch
        %151 = sbr.rel (%p148) target = $region12
      $region11: #{block_of_dmt3.1} parent=5 // pred_region
        %s152 = ssub.s32 %s13, 1
        // Predicated region
        $region13: #{block_of_dmt3.1} parent=11 // pred_check
          %p153 = pneg %p34
        $region14: #{block_of_dmt3.1} parent=11 // pred_check_branch
          %155 = sbr.rel (%p153) target = $region16
        $region15: #{block_of_dmt3.1} parent=11 // pred_region
          _
        $region16: #{block_of_dmt3.1} parent=11 // pred_fallthru
          _
      $region12: #{block_of_dmt3.1} parent=5 // pred_fallthru
        _
      %p156 = scmp.lt.s32.totalorder %s13, 2
      // Predicated region
      $region17: #{block_of_dmt3.1} parent=5 // pred_check
        %p157 = pneg %p156
      $region18: #{block_of_dmt3.1} parent=5 // pred_check_branch
        %159 = sbr.rel (%p157) target = $region20
      $region19: #{block_of_dmt3.1} parent=5 // pred_region
        // Predicated region
        $region21: #{block_of_dmt3.1} parent=19 // pred_check
          %p160 = pneg %p54
        $region22: #{block_of_dmt3.1} parent=19 // pred_check_branch
          %162 = sbr.rel (%p160) target = $region24
        $region23: #{block_of_dmt3.1} parent=19 // pred_region
          %s163 = sand.u32 %s44, 1
          %s164 = sand.u32 %s44, 1
          %s165 = smul.addr %s164, 2304
          %s166 = scalar_lea.vmem [#allocation3], %s165
          %s167 = smul.addr %s13, 8
          %s168 = scalar_lea.vmem %s1, %s167
          // Predicated region
          $region25: #{block_of_dmt3.1} parent=23 // pred_check
            _
          $region26: #{block_of_dmt3.1} parent=23 // pred_check_branch
            %170 = sbr.rel (0) target = $region28
          $region27: #{block_of_dmt3.1} parent=23 // pred_region
            // Predicated region
            $region29: #{block_of_dmt3.1} parent=27 // pred_check
              _
            $region30: #{block_of_dmt3.1} parent=27 // pred_check_branch
              %172 = sbr.rel (0) target = $region32
            $region31: #{block_of_dmt3.1} parent=27 // pred_region
              // Predicated region
              $region44: #{block_of_dmt3.1} parent=31 // pred_check
                _
              $region45: #{block_of_dmt3.1} parent=31 // pred_check_branch
                %761 = sbr.rel (0) target = $region47
              $region46: #{block_of_dmt3.1} parent=31 // pred_region
                loop: start=0, step=1, limit=1
                $region48: #{block_of_dmt3.1} parent=46 // loop_pre_header
                  _
                $region49: #{block_of_dmt3.1} parent=46 // loop_header
                  %s763 = sphi 0, %s767
                  %p764 = scmp.ge.s32.totalorder %s763, 1
                  %s768 = sphi %s168, %s168
                  %s769 = sphi %s166, %s166
                $region50: #{block_of_dmt3.1} parent=46 // loop_header_branch
                  %766 = sbr.rel (%p764) target = $region54
                $region51: #{block_of_dmt3.1} parent=46 // loop_body
                  %v770 = vld [vmem:[%s768] sm:$0xff]
                  %771 = vst [vmem:[%s769] sm:$0xff] %v770
                  %v772 = vld [vmem:[%s768 + $0x10] sm:$0xff]
                  %773 = vst [vmem:[%s769 + $0x8] sm:$0xff] %v772
                  %v774 = vld [vmem:[%s768 + $0x20] sm:$0xff]
                  %775 = vst [vmem:[%s769 + $0x10] sm:$0xff] %v774
                  %v776 = vld [vmem:[%s768 + $0x30] sm:$0xff]
                  %777 = vst [vmem:[%s769 + $0x18] sm:$0xff] %v776
                  %v778 = vld [vmem:[%s768 + $0x40] sm:$0xff]
                  %779 = vst [vmem:[%s769 + $0x20] sm:$0xff] %v778
                  %v780 = vld [vmem:[%s768 + $0x50] sm:$0xff]
                  %781 = vst [vmem:[%s769 + $0x28] sm:$0xff] %v780
                  %v782 = vld [vmem:[%s768 + $0x60] sm:$0xff]
                  %783 = vst [vmem:[%s769 + $0x30] sm:$0xff] %v782
                  %v784 = vld [vmem:[%s768 + $0x70] sm:$0xff]
                  %785 = vst [vmem:[%s769 + $0x38] sm:$0xff] %v784
                  %v786 = vld [vmem:[%s768 + $0x80] sm:$0xff]
                  %787 = vst [vmem:[%s769 + $0x40] sm:$0xff] %v786
                  %v788 = vld [vmem:[%s768 + $0x90] sm:$0xff]
                  %789 = vst [vmem:[%s769 + $0x48] sm:$0xff] %v788
                  %v790 = vld [vmem:[%s768 + $0xa0] sm:$0xff]
                  %791 = vst [vmem:[%s769 + $0x50] sm:$0xff] %v790
                  %v792 = vld [vmem:[%s768 + $0xb0] sm:$0xff]
                  %793 = vst [vmem:[%s769 + $0x58] sm:$0xff] %v792
                  %v794 = vld [vmem:[%s768 + $0xc0] sm:$0xff]
                  %795 = vst [vmem:[%s769 + $0x60] sm:$0xff] %v794
                  %v796 = vld [vmem:[%s768 + $0xd0] sm:$0xff]
                  %797 = vst [vmem:[%s769 + $0x68] sm:$0xff] %v796
                  %v798 = vld [vmem:[%s768 + $0xe0] sm:$0xff]
                  %799 = vst [vmem:[%s769 + $0x70] sm:$0xff] %v798
                  %v800 = vld [vmem:[%s768 + $0xf0] sm:$0xff]
                  %801 = vst [vmem:[%s769 + $0x78] sm:$0xff] %v800
                  %v802 = vld [vmem:[%s768 + $0x100] sm:$0xff]
                  %803 = vst [vmem:[%s769 + $0x80] sm:$0xff] %v802
                  %v804 = vld [vmem:[%s768 + $0x110] sm:$0xff]
                  %805 = vst [vmem:[%s769 + $0x88] sm:$0xff] %v804
                  %v806 = vld [vmem:[%s768 + $0x120] sm:$0xff]
                  %807 = vst [vmem:[%s769 + $0x90] sm:$0xff] %v806
                  %v808 = vld [vmem:[%s768 + $0x130] sm:$0xff]
                  %809 = vst [vmem:[%s769 + $0x98] sm:$0xff] %v808
                  %v810 = vld [vmem:[%s768 + $0x140] sm:$0xff]
                  %811 = vst [vmem:[%s769 + $0xa0] sm:$0xff] %v810
                  %v812 = vld [vmem:[%s768 + $0x150] sm:$0xff]
                  %813 = vst [vmem:[%s769 + $0xa8] sm:$0xff] %v812
                  %v814 = vld [vmem:[%s768 + $0x160] sm:$0xff]
                  %815 = vst [vmem:[%s769 + $0xb0] sm:$0xff] %v814
                  %v816 = vld [vmem:[%s768 + $0x170] sm:$0xff]
                  %817 = vst [vmem:[%s769 + $0xb8] sm:$0xff] %v816
                  %v818 = vld [vmem:[%s768 + $0x180] sm:$0xff]
                  %819 = vst [vmem:[%s769 + $0xc0] sm:$0xff] %v818
                  %v820 = vld [vmem:[%s768 + $0x190] sm:$0xff]
                  %821 = vst [vmem:[%s769 + $0xc8] sm:$0xff] %v820
                  %v822 = vld [vmem:[%s768 + $0x1a0] sm:$0xff]
                  %823 = vst [vmem:[%s769 + $0xd0] sm:$0xff] %v822
                  %v824 = vld [vmem:[%s768 + $0x1b0] sm:$0xff]
                  %825 = vst [vmem:[%s769 + $0xd8] sm:$0xff] %v824
                  %v826 = vld [vmem:[%s768 + $0x1c0] sm:$0xff]
                  %827 = vst [vmem:[%s769 + $0xe0] sm:$0xff] %v826
                  %v828 = vld [vmem:[%s768 + $0x1d0] sm:$0xff]
                  %829 = vst [vmem:[%s769 + $0xe8] sm:$0xff] %v828
                  %v830 = vld [vmem:[%s768 + $0x1e0] sm:$0xff]
                  %831 = vst [vmem:[%s769 + $0xf0] sm:$0xff] %v830
                  %v832 = vld [vmem:[%s768 + $0x1f0] sm:$0xff]
                  %833 = vst [vmem:[%s769 + $0xf8] sm:$0xff] %v832
                  %v834 = vld [vmem:[%s768 + $0x200] sm:$0xff]
                  %835 = vst [vmem:[%s769 + $0x100] sm:$0xff] %v834
                  %v836 = vld [vmem:[%s768 + $0x210] sm:$0xff]
                  %837 = vst [vmem:[%s769 + $0x108] sm:$0xff] %v836
                  %v838 = vld [vmem:[%s768 + $0x220] sm:$0xff]
                  %839 = vst [vmem:[%s769 + $0x110] sm:$0xff] %v838
                  %v840 = vld [vmem:[%s768 + $0x230] sm:$0xff]
                  %841 = vst [vmem:[%s769 + $0x118] sm:$0xff] %v840
                  %v842 = vld [vmem:[%s768 + $0x240] sm:$0xff]
                  %843 = vst [vmem:[%s769 + $0x120] sm:$0xff] %v842
                  %v844 = vld [vmem:[%s768 + $0x250] sm:$0xff]
                  %845 = vst [vmem:[%s769 + $0x128] sm:$0xff] %v844
                  %v846 = vld [vmem:[%s768 + $0x260] sm:$0xff]
                  %847 = vst [vmem:[%s769 + $0x130] sm:$0xff] %v846
                  %v848 = vld [vmem:[%s768 + $0x270] sm:$0xff]
                  %849 = vst [vmem:[%s769 + $0x138] sm:$0xff] %v848
                  %v850 = vld [vmem:[%s768 + $0x280] sm:$0xff]
                  %851 = vst [vmem:[%s769 + $0x140] sm:$0xff] %v850
                  %v852 = vld [vmem:[%s768 + $0x290] sm:$0xff]
                  %853 = vst [vmem:[%s769 + $0x148] sm:$0xff] %v852
                  %v854 = vld [vmem:[%s768 + $0x2a0] sm:$0xff]
                  %855 = vst [vmem:[%s769 + $0x150] sm:$0xff] %v854
                  %v856 = vld [vmem:[%s768 + $0x2b0] sm:$0xff]
                  %857 = vst [vmem:[%s769 + $0x158] sm:$0xff] %v856
                  %v858 = vld [vmem:[%s768 + $0x2c0] sm:$0xff]
                  %859 = vst [vmem:[%s769 + $0x160] sm:$0xff] %v858
                  %v860 = vld [vmem:[%s768 + $0x2d0] sm:$0xff]
                  %861 = vst [vmem:[%s769 + $0x168] sm:$0xff] %v860
                  %v862 = vld [vmem:[%s768 + $0x2e0] sm:$0xff]
                  %863 = vst [vmem:[%s769 + $0x170] sm:$0xff] %v862
                  %v864 = vld [vmem:[%s768 + $0x2f0] sm:$0xff]
                  %865 = vst [vmem:[%s769 + $0x178] sm:$0xff] %v864
                  %v866 = vld [vmem:[%s768 + $0x300] sm:$0xff]
                  %867 = vst [vmem:[%s769 + $0x180] sm:$0xff] %v866
                  %v868 = vld [vmem:[%s768 + $0x310] sm:$0xff]
                  %869 = vst [vmem:[%s769 + $0x188] sm:$0xff] %v868
                  %v870 = vld [vmem:[%s768 + $0x320] sm:$0xff]
                  %871 = vst [vmem:[%s769 + $0x190] sm:$0xff] %v870
                  %v872 = vld [vmem:[%s768 + $0x330] sm:$0xff]
                  %873 = vst [vmem:[%s769 + $0x198] sm:$0xff] %v872
                  %v874 = vld [vmem:[%s768 + $0x340] sm:$0xff]
                  %875 = vst [vmem:[%s769 + $0x1a0] sm:$0xff] %v874
                  %v876 = vld [vmem:[%s768 + $0x350] sm:$0xff]
                  %877 = vst [vmem:[%s769 + $0x1a8] sm:$0xff] %v876
                  %v878 = vld [vmem:[%s768 + $0x360] sm:$0xff]
                  %879 = vst [vmem:[%s769 + $0x1b0] sm:$0xff] %v878
                  %v880 = vld [vmem:[%s768 + $0x370] sm:$0xff]
                  %881 = vst [vmem:[%s769 + $0x1b8] sm:$0xff] %v880
                  %v882 = vld [vmem:[%s768 + $0x380] sm:$0xff]
                  %883 = vst [vmem:[%s769 + $0x1c0] sm:$0xff] %v882
                  %v884 = vld [vmem:[%s768 + $0x390] sm:$0xff]
                  %885 = vst [vmem:[%s769 + $0x1c8] sm:$0xff] %v884
                  %v886 = vld [vmem:[%s768 + $0x3a0] sm:$0xff]
                  %887 = vst [vmem:[%s769 + $0x1d0] sm:$0xff] %v886
                  %v888 = vld [vmem:[%s768 + $0x3b0] sm:$0xff]
                  %889 = vst [vmem:[%s769 + $0x1d8] sm:$0xff] %v888
                  %v890 = vld [vmem:[%s768 + $0x3c0] sm:$0xff]
                  %891 = vst [vmem:[%s769 + $0x1e0] sm:$0xff] %v890
                  %v892 = vld [vmem:[%s768 + $0x3d0] sm:$0xff]
                  %893 = vst [vmem:[%s769 + $0x1e8] sm:$0xff] %v892
                  %v894 = vld [vmem:[%s768 + $0x3e0] sm:$0xff]
                  %895 = vst [vmem:[%s769 + $0x1f0] sm:$0xff] %v894
                  %v896 = vld [vmem:[%s768 + $0x3f0] sm:$0xff]
                  %897 = vst [vmem:[%s769 + $0x1f8] sm:$0xff] %v896
                  %v898 = vld [vmem:[%s768 + $0x400] sm:$0xff]
                  %899 = vst [vmem:[%s769 + $0x200] sm:$0xff] %v898
                  %v900 = vld [vmem:[%s768 + $0x410] sm:$0xff]
                  %901 = vst [vmem:[%s769 + $0x208] sm:$0xff] %v900
                  %v902 = vld [vmem:[%s768 + $0x420] sm:$0xff]
                  %903 = vst [vmem:[%s769 + $0x210] sm:$0xff] %v902
                  %v904 = vld [vmem:[%s768 + $0x430] sm:$0xff]
                  %905 = vst [vmem:[%s769 + $0x218] sm:$0xff] %v904
                  %v906 = vld [vmem:[%s768 + $0x440] sm:$0xff]
                  %907 = vst [vmem:[%s769 + $0x220] sm:$0xff] %v906
                  %v908 = vld [vmem:[%s768 + $0x450] sm:$0xff]
                  %909 = vst [vmem:[%s769 + $0x228] sm:$0xff] %v908
                  %v910 = vld [vmem:[%s768 + $0x460] sm:$0xff]
                  %911 = vst [vmem:[%s769 + $0x230] sm:$0xff] %v910
                  %v912 = vld [vmem:[%s768 + $0x470] sm:$0xff]
                  %913 = vst [vmem:[%s769 + $0x238] sm:$0xff] %v912
                  %v914 = vld [vmem:[%s768 + $0x480] sm:$0xff]
                  %915 = vst [vmem:[%s769 + $0x240] sm:$0xff] %v914
                  %v916 = vld [vmem:[%s768 + $0x490] sm:$0xff]
                  %917 = vst [vmem:[%s769 + $0x248] sm:$0xff] %v916
                  %v918 = vld [vmem:[%s768 + $0x4a0] sm:$0xff]
                  %919 = vst [vmem:[%s769 + $0x250] sm:$0xff] %v918
                  %v920 = vld [vmem:[%s768 + $0x4b0] sm:$0xff]
                  %921 = vst [vmem:[%s769 + $0x258] sm:$0xff] %v920
                  %v922 = vld [vmem:[%s768 + $0x4c0] sm:$0xff]
                  %923 = vst [vmem:[%s769 + $0x260] sm:$0xff] %v922
                  %v924 = vld [vmem:[%s768 + $0x4d0] sm:$0xff]
                  %925 = vst [vmem:[%s769 + $0x268] sm:$0xff] %v924
                  %v926 = vld [vmem:[%s768 + $0x4e0] sm:$0xff]
                  %927 = vst [vmem:[%s769 + $0x270] sm:$0xff] %v926
                  %v928 = vld [vmem:[%s768 + $0x4f0] sm:$0xff]
                  %929 = vst [vmem:[%s769 + $0x278] sm:$0xff] %v928
                  %v930 = vld [vmem:[%s768 + $0x500] sm:$0xff]
                  %931 = vst [vmem:[%s769 + $0x280] sm:$0xff] %v930
                  %v932 = vld [vmem:[%s768 + $0x510] sm:$0xff]
                  %933 = vst [vmem:[%s769 + $0x288] sm:$0xff] %v932
                  %v934 = vld [vmem:[%s768 + $0x520] sm:$0xff]
                  %935 = vst [vmem:[%s769 + $0x290] sm:$0xff] %v934
                  %v936 = vld [vmem:[%s768 + $0x530] sm:$0xff]
                  %937 = vst [vmem:[%s769 + $0x298] sm:$0xff] %v936
                  %v938 = vld [vmem:[%s768 + $0x540] sm:$0xff]
                  %939 = vst [vmem:[%s769 + $0x2a0] sm:$0xff] %v938
                  %v940 = vld [vmem:[%s768 + $0x550] sm:$0xff]
                  %941 = vst [vmem:[%s769 + $0x2a8] sm:$0xff] %v940
                  %v942 = vld [vmem:[%s768 + $0x560] sm:$0xff]
                  %943 = vst [vmem:[%s769 + $0x2b0] sm:$0xff] %v942
                  %v944 = vld [vmem:[%s768 + $0x570] sm:$0xff]
                  %945 = vst [vmem:[%s769 + $0x2b8] sm:$0xff] %v944
                  %v946 = vld [vmem:[%s768 + $0x580] sm:$0xff]
                  %947 = vst [vmem:[%s769 + $0x2c0] sm:$0xff] %v946
                  %v948 = vld [vmem:[%s768 + $0x590] sm:$0xff]
                  %949 = vst [vmem:[%s769 + $0x2c8] sm:$0xff] %v948
                  %v950 = vld [vmem:[%s768 + $0x5a0] sm:$0xff]
                  %951 = vst [vmem:[%s769 + $0x2d0] sm:$0xff] %v950
                  %v952 = vld [vmem:[%s768 + $0x5b0] sm:$0xff]
                  %953 = vst [vmem:[%s769 + $0x2d8] sm:$0xff] %v952
                  %v954 = vld [vmem:[%s768 + $0x5c0] sm:$0xff]
                  %955 = vst [vmem:[%s769 + $0x2e0] sm:$0xff] %v954
                  %v956 = vld [vmem:[%s768 + $0x5d0] sm:$0xff]
                  %957 = vst [vmem:[%s769 + $0x2e8] sm:$0xff] %v956
                  %v958 = vld [vmem:[%s768 + $0x5e0] sm:$0xff]
                  %959 = vst [vmem:[%s769 + $0x2f0] sm:$0xff] %v958
                  %v960 = vld [vmem:[%s768 + $0x5f0] sm:$0xff]
                  %961 = vst [vmem:[%s769 + $0x2f8] sm:$0xff] %v960
                  %v962 = vld [vmem:[%s768 + $0x600] sm:$0xff]
                  %963 = vst [vmem:[%s769 + $0x300] sm:$0xff] %v962
                  %v964 = vld [vmem:[%s768 + $0x610] sm:$0xff]
                  %965 = vst [vmem:[%s769 + $0x308] sm:$0xff] %v964
                  %v966 = vld [vmem:[%s768 + $0x620] sm:$0xff]
                  %967 = vst [vmem:[%s769 + $0x310] sm:$0xff] %v966
                  %v968 = vld [vmem:[%s768 + $0x630] sm:$0xff]
                  %969 = vst [vmem:[%s769 + $0x318] sm:$0xff] %v968
                  %v970 = vld [vmem:[%s768 + $0x640] sm:$0xff]
                  %971 = vst [vmem:[%s769 + $0x320] sm:$0xff] %v970
                  %v972 = vld [vmem:[%s768 + $0x650] sm:$0xff]
                  %973 = vst [vmem:[%s769 + $0x328] sm:$0xff] %v972
                  %v974 = vld [vmem:[%s768 + $0x660] sm:$0xff]
                  %975 = vst [vmem:[%s769 + $0x330] sm:$0xff] %v974
                  %v976 = vld [vmem:[%s768 + $0x670] sm:$0xff]
                  %977 = vst [vmem:[%s769 + $0x338] sm:$0xff] %v976
                  %v978 = vld [vmem:[%s768 + $0x680] sm:$0xff]
                  %979 = vst [vmem:[%s769 + $0x340] sm:$0xff] %v978
                  %v980 = vld [vmem:[%s768 + $0x690] sm:$0xff]
                  %981 = vst [vmem:[%s769 + $0x348] sm:$0xff] %v980
                  %v982 = vld [vmem:[%s768 + $0x6a0] sm:$0xff]
                  %983 = vst [vmem:[%s769 + $0x350] sm:$0xff] %v982
                  %v984 = vld [vmem:[%s768 + $0x6b0] sm:$0xff]
                  %985 = vst [vmem:[%s769 + $0x358] sm:$0xff] %v984
                  %v986 = vld [vmem:[%s768 + $0x6c0] sm:$0xff]
                  %987 = vst [vmem:[%s769 + $0x360] sm:$0xff] %v986
                  %v988 = vld [vmem:[%s768 + $0x6d0] sm:$0xff]
                  %989 = vst [vmem:[%s769 + $0x368] sm:$0xff] %v988
                  %v990 = vld [vmem:[%s768 + $0x6e0] sm:$0xff]
                  %991 = vst [vmem:[%s769 + $0x370] sm:$0xff] %v990
                  %v992 = vld [vmem:[%s768 + $0x6f0] sm:$0xff]
                  %993 = vst [vmem:[%s769 + $0x378] sm:$0xff] %v992
                  %v994 = vld [vmem:[%s768 + $0x700] sm:$0xff]
                  %995 = vst [vmem:[%s769 + $0x380] sm:$0xff] %v994
                  %v996 = vld [vmem:[%s768 + $0x710] sm:$0xff]
                  %997 = vst [vmem:[%s769 + $0x388] sm:$0xff] %v996
                  %v998 = vld [vmem:[%s768 + $0x720] sm:$0xff]
                  %999 = vst [vmem:[%s769 + $0x390] sm:$0xff] %v998
                  %v1000 = vld [vmem:[%s768 + $0x730] sm:$0xff]
                  %1001 = vst [vmem:[%s769 + $0x398] sm:$0xff] %v1000
                  %v1002 = vld [vmem:[%s768 + $0x740] sm:$0xff]
                  %1003 = vst [vmem:[%s769 + $0x3a0] sm:$0xff] %v1002
                  %v1004 = vld [vmem:[%s768 + $0x750] sm:$0xff]
                  %1005 = vst [vmem:[%s769 + $0x3a8] sm:$0xff] %v1004
                  %v1006 = vld [vmem:[%s768 + $0x760] sm:$0xff]
                  %1007 = vst [vmem:[%s769 + $0x3b0] sm:$0xff] %v1006
                  %v1008 = vld [vmem:[%s768 + $0x770] sm:$0xff]
                  %1009 = vst [vmem:[%s769 + $0x3b8] sm:$0xff] %v1008
                  %v1010 = vld [vmem:[%s768 + $0x780] sm:$0xff]
                  %1011 = vst [vmem:[%s769 + $0x3c0] sm:$0xff] %v1010
                  %v1012 = vld [vmem:[%s768 + $0x790] sm:$0xff]
                  %1013 = vst [vmem:[%s769 + $0x3c8] sm:$0xff] %v1012
                  %v1014 = vld [vmem:[%s768 + $0x7a0] sm:$0xff]
                  %1015 = vst [vmem:[%s769 + $0x3d0] sm:$0xff] %v1014
                  %v1016 = vld [vmem:[%s768 + $0x7b0] sm:$0xff]
                  %1017 = vst [vmem:[%s769 + $0x3d8] sm:$0xff] %v1016
                  %v1018 = vld [vmem:[%s768 + $0x7c0] sm:$0xff]
                  %1019 = vst [vmem:[%s769 + $0x3e0] sm:$0xff] %v1018
                  %v1020 = vld [vmem:[%s768 + $0x7d0] sm:$0xff]
                  %1021 = vst [vmem:[%s769 + $0x3e8] sm:$0xff] %v1020
                  %v1022 = vld [vmem:[%s768 + $0x7e0] sm:$0xff]
                  %1023 = vst [vmem:[%s769 + $0x3f0] sm:$0xff] %v1022
                  %v1024 = vld [vmem:[%s768 + $0x7f0] sm:$0xff]
                  %1025 = vst [vmem:[%s769 + $0x3f8] sm:$0xff] %v1024
                  %v1026 = vld [vmem:[%s768 + $0x800] sm:$0xff]
                  %1027 = vst [vmem:[%s769 + $0x400] sm:$0xff] %v1026
                  %v1028 = vld [vmem:[%s768 + $0x810] sm:$0xff]
                  %1029 = vst [vmem:[%s769 + $0x408] sm:$0xff] %v1028
                  %v1030 = vld [vmem:[%s768 + $0x820] sm:$0xff]
                  %1031 = vst [vmem:[%s769 + $0x410] sm:$0xff] %v1030
                  %v1032 = vld [vmem:[%s768 + $0x830] sm:$0xff]
                  %1033 = vst [vmem:[%s769 + $0x418] sm:$0xff] %v1032
                  %v1034 = vld [vmem:[%s768 + $0x840] sm:$0xff]
                  %1035 = vst [vmem:[%s769 + $0x420] sm:$0xff] %v1034
                  %v1036 = vld [vmem:[%s768 + $0x850] sm:$0xff]
                  %1037 = vst [vmem:[%s769 + $0x428] sm:$0xff] %v1036
                  %v1038 = vld [vmem:[%s768 + $0x860] sm:$0xff]
                  %1039 = vst [vmem:[%s769 + $0x430] sm:$0xff] %v1038
                  %v1040 = vld [vmem:[%s768 + $0x870] sm:$0xff]
                  %1041 = vst [vmem:[%s769 + $0x438] sm:$0xff] %v1040
                  %v1042 = vld [vmem:[%s768 + $0x880] sm:$0xff]
                  %1043 = vst [vmem:[%s769 + $0x440] sm:$0xff] %v1042
                  %v1044 = vld [vmem:[%s768 + $0x890] sm:$0xff]
                  %1045 = vst [vmem:[%s769 + $0x448] sm:$0xff] %v1044
                  %v1046 = vld [vmem:[%s768 + $0x8a0] sm:$0xff]
                  %1047 = vst [vmem:[%s769 + $0x450] sm:$0xff] %v1046
                  %v1048 = vld [vmem:[%s768 + $0x8b0] sm:$0xff]
                  %1049 = vst [vmem:[%s769 + $0x458] sm:$0xff] %v1048
                  %v1050 = vld [vmem:[%s768 + $0x8c0] sm:$0xff]
                  %1051 = vst [vmem:[%s769 + $0x460] sm:$0xff] %v1050
                  %v1052 = vld [vmem:[%s768 + $0x8d0] sm:$0xff]
                  %1053 = vst [vmem:[%s769 + $0x468] sm:$0xff] %v1052
                  %v1054 = vld [vmem:[%s768 + $0x8e0] sm:$0xff]
                  %1055 = vst [vmem:[%s769 + $0x470] sm:$0xff] %v1054
                  %v1056 = vld [vmem:[%s768 + $0x8f0] sm:$0xff]
                  %1057 = vst [vmem:[%s769 + $0x478] sm:$0xff] %v1056
                  %v1058 = vld [vmem:[%s768 + $0x900] sm:$0xff]
                  %1059 = vst [vmem:[%s769 + $0x480] sm:$0xff] %v1058
                  %v1060 = vld [vmem:[%s768 + $0x910] sm:$0xff]
                  %1061 = vst [vmem:[%s769 + $0x488] sm:$0xff] %v1060
                  %v1062 = vld [vmem:[%s768 + $0x920] sm:$0xff]
                  %1063 = vst [vmem:[%s769 + $0x490] sm:$0xff] %v1062
                  %v1064 = vld [vmem:[%s768 + $0x930] sm:$0xff]
                  %1065 = vst [vmem:[%s769 + $0x498] sm:$0xff] %v1064
                  %v1066 = vld [vmem:[%s768 + $0x940] sm:$0xff]
                  %1067 = vst [vmem:[%s769 + $0x4a0] sm:$0xff] %v1066
                  %v1068 = vld [vmem:[%s768 + $0x950] sm:$0xff]
                  %1069 = vst [vmem:[%s769 + $0x4a8] sm:$0xff] %v1068
                  %v1070 = vld [vmem:[%s768 + $0x960] sm:$0xff]
                  %1071 = vst [vmem:[%s769 + $0x4b0] sm:$0xff] %v1070
                  %v1072 = vld [vmem:[%s768 + $0x970] sm:$0xff]
                  %1073 = vst [vmem:[%s769 + $0x4b8] sm:$0xff] %v1072
                  %v1074 = vld [vmem:[%s768 + $0x980] sm:$0xff]
                  %1075 = vst [vmem:[%s769 + $0x4c0] sm:$0xff] %v1074
                  %v1076 = vld [vmem:[%s768 + $0x990] sm:$0xff]
                  %1077 = vst [vmem:[%s769 + $0x4c8] sm:$0xff] %v1076
                  %v1078 = vld [vmem:[%s768 + $0x9a0] sm:$0xff]
                  %1079 = vst [vmem:[%s769 + $0x4d0] sm:$0xff] %v1078
                  %v1080 = vld [vmem:[%s768 + $0x9b0] sm:$0xff]
                  %1081 = vst [vmem:[%s769 + $0x4d8] sm:$0xff] %v1080
                  %v1082 = vld [vmem:[%s768 + $0x9c0] sm:$0xff]
                  %1083 = vst [vmem:[%s769 + $0x4e0] sm:$0xff] %v1082
                  %v1084 = vld [vmem:[%s768 + $0x9d0] sm:$0xff]
                  %1085 = vst [vmem:[%s769 + $0x4e8] sm:$0xff] %v1084
                  %v1086 = vld [vmem:[%s768 + $0x9e0] sm:$0xff]
                  %1087 = vst [vmem:[%s769 + $0x4f0] sm:$0xff] %v1086
                  %v1088 = vld [vmem:[%s768 + $0x9f0] sm:$0xff]
                  %1089 = vst [vmem:[%s769 + $0x4f8] sm:$0xff] %v1088
                  %v1090 = vld [vmem:[%s768 + $0xa00] sm:$0xff]
                  %1091 = vst [vmem:[%s769 + $0x500] sm:$0xff] %v1090
                  %v1092 = vld [vmem:[%s768 + $0xa10] sm:$0xff]
                  %1093 = vst [vmem:[%s769 + $0x508] sm:$0xff] %v1092
                  %v1094 = vld [vmem:[%s768 + $0xa20] sm:$0xff]
                  %1095 = vst [vmem:[%s769 + $0x510] sm:$0xff] %v1094
                  %v1096 = vld [vmem:[%s768 + $0xa30] sm:$0xff]
                  %1097 = vst [vmem:[%s769 + $0x518] sm:$0xff] %v1096
                  %v1098 = vld [vmem:[%s768 + $0xa40] sm:$0xff]
                  %1099 = vst [vmem:[%s769 + $0x520] sm:$0xff] %v1098
                  %v1100 = vld [vmem:[%s768 + $0xa50] sm:$0xff]
                  %1101 = vst [vmem:[%s769 + $0x528] sm:$0xff] %v1100
                  %v1102 = vld [vmem:[%s768 + $0xa60] sm:$0xff]
                  %1103 = vst [vmem:[%s769 + $0x530] sm:$0xff] %v1102
                  %v1104 = vld [vmem:[%s768 + $0xa70] sm:$0xff]
                  %1105 = vst [vmem:[%s769 + $0x538] sm:$0xff] %v1104
                  %v1106 = vld [vmem:[%s768 + $0xa80] sm:$0xff]
                  %1107 = vst [vmem:[%s769 + $0x540] sm:$0xff] %v1106
                  %v1108 = vld [vmem:[%s768 + $0xa90] sm:$0xff]
                  %1109 = vst [vmem:[%s769 + $0x548] sm:$0xff] %v1108
                  %v1110 = vld [vmem:[%s768 + $0xaa0] sm:$0xff]
                  %1111 = vst [vmem:[%s769 + $0x550] sm:$0xff] %v1110
                  %v1112 = vld [vmem:[%s768 + $0xab0] sm:$0xff]
                  %1113 = vst [vmem:[%s769 + $0x558] sm:$0xff] %v1112
                  %v1114 = vld [vmem:[%s768 + $0xac0] sm:$0xff]
                  %1115 = vst [vmem:[%s769 + $0x560] sm:$0xff] %v1114
                  %v1116 = vld [vmem:[%s768 + $0xad0] sm:$0xff]
                  %1117 = vst [vmem:[%s769 + $0x568] sm:$0xff] %v1116
                  %v1118 = vld [vmem:[%s768 + $0xae0] sm:$0xff]
                  %1119 = vst [vmem:[%s769 + $0x570] sm:$0xff] %v1118
                  %v1120 = vld [vmem:[%s768 + $0xaf0] sm:$0xff]
                  %1121 = vst [vmem:[%s769 + $0x578] sm:$0xff] %v1120
                  %v1122 = vld [vmem:[%s768 + $0xb00] sm:$0xff]
                  %1123 = vst [vmem:[%s769 + $0x580] sm:$0xff] %v1122
                  %v1124 = vld [vmem:[%s768 + $0xb10] sm:$0xff]
                  %1125 = vst [vmem:[%s769 + $0x588] sm:$0xff] %v1124
                  %v1126 = vld [vmem:[%s768 + $0xb20] sm:$0xff]
                  %1127 = vst [vmem:[%s769 + $0x590] sm:$0xff] %v1126
                  %v1128 = vld [vmem:[%s768 + $0xb30] sm:$0xff]
                  %1129 = vst [vmem:[%s769 + $0x598] sm:$0xff] %v1128
                  %v1130 = vld [vmem:[%s768 + $0xb40] sm:$0xff]
                  %1131 = vst [vmem:[%s769 + $0x5a0] sm:$0xff] %v1130
                  %v1132 = vld [vmem:[%s768 + $0xb50] sm:$0xff]
                  %1133 = vst [vmem:[%s769 + $0x5a8] sm:$0xff] %v1132
                  %v1134 = vld [vmem:[%s768 + $0xb60] sm:$0xff]
                  %1135 = vst [vmem:[%s769 + $0x5b0] sm:$0xff] %v1134
                  %v1136 = vld [vmem:[%s768 + $0xb70] sm:$0xff]
                  %1137 = vst [vmem:[%s769 + $0x5b8] sm:$0xff] %v1136
                  %v1138 = vld [vmem:[%s768 + $0xb80] sm:$0xff]
                  %1139 = vst [vmem:[%s769 + $0x5c0] sm:$0xff] %v1138
                  %v1140 = vld [vmem:[%s768 + $0xb90] sm:$0xff]
                  %1141 = vst [vmem:[%s769 + $0x5c8] sm:$0xff] %v1140
                  %v1142 = vld [vmem:[%s768 + $0xba0] sm:$0xff]
                  %1143 = vst [vmem:[%s769 + $0x5d0] sm:$0xff] %v1142
                  %v1144 = vld [vmem:[%s768 + $0xbb0] sm:$0xff]
                  %1145 = vst [vmem:[%s769 + $0x5d8] sm:$0xff] %v1144
                  %v1146 = vld [vmem:[%s768 + $0xbc0] sm:$0xff]
                  %1147 = vst [vmem:[%s769 + $0x5e0] sm:$0xff] %v1146
                  %v1148 = vld [vmem:[%s768 + $0xbd0] sm:$0xff]
                  %1149 = vst [vmem:[%s769 + $0x5e8] sm:$0xff] %v1148
                  %v1150 = vld [vmem:[%s768 + $0xbe0] sm:$0xff]
                  %1151 = vst [vmem:[%s769 + $0x5f0] sm:$0xff] %v1150
                  %v1152 = vld [vmem:[%s768 + $0xbf0] sm:$0xff]
                  %1153 = vst [vmem:[%s769 + $0x5f8] sm:$0xff] %v1152
                  %v1154 = vld [vmem:[%s768 + $0xc00] sm:$0xff]
                  %1155 = vst [vmem:[%s769 + $0x600] sm:$0xff] %v1154
                  %v1156 = vld [vmem:[%s768 + $0xc10] sm:$0xff]
                  %1157 = vst [vmem:[%s769 + $0x608] sm:$0xff] %v1156
                  %v1158 = vld [vmem:[%s768 + $0xc20] sm:$0xff]
                  %1159 = vst [vmem:[%s769 + $0x610] sm:$0xff] %v1158
                  %v1160 = vld [vmem:[%s768 + $0xc30] sm:$0xff]
                  %1161 = vst [vmem:[%s769 + $0x618] sm:$0xff] %v1160
                  %v1162 = vld [vmem:[%s768 + $0xc40] sm:$0xff]
                  %1163 = vst [vmem:[%s769 + $0x620] sm:$0xff] %v1162
                  %v1164 = vld [vmem:[%s768 + $0xc50] sm:$0xff]
                  %1165 = vst [vmem:[%s769 + $0x628] sm:$0xff] %v1164
                  %v1166 = vld [vmem:[%s768 + $0xc60] sm:$0xff]
                  %1167 = vst [vmem:[%s769 + $0x630] sm:$0xff] %v1166
                  %v1168 = vld [vmem:[%s768 + $0xc70] sm:$0xff]
                  %1169 = vst [vmem:[%s769 + $0x638] sm:$0xff] %v1168
                  %v1170 = vld [vmem:[%s768 + $0xc80] sm:$0xff]
                  %1171 = vst [vmem:[%s769 + $0x640] sm:$0xff] %v1170
                  %v1172 = vld [vmem:[%s768 + $0xc90] sm:$0xff]
                  %1173 = vst [vmem:[%s769 + $0x648] sm:$0xff] %v1172
                  %v1174 = vld [vmem:[%s768 + $0xca0] sm:$0xff]
                  %1175 = vst [vmem:[%s769 + $0x650] sm:$0xff] %v1174
                  %v1176 = vld [vmem:[%s768 + $0xcb0] sm:$0xff]
                  %1177 = vst [vmem:[%s769 + $0x658] sm:$0xff] %v1176
                  %v1178 = vld [vmem:[%s768 + $0xcc0] sm:$0xff]
                  %1179 = vst [vmem:[%s769 + $0x660] sm:$0xff] %v1178
                  %v1180 = vld [vmem:[%s768 + $0xcd0] sm:$0xff]
                  %1181 = vst [vmem:[%s769 + $0x668] sm:$0xff] %v1180
                  %v1182 = vld [vmem:[%s768 + $0xce0] sm:$0xff]
                  %1183 = vst [vmem:[%s769 + $0x670] sm:$0xff] %v1182
                  %v1184 = vld [vmem:[%s768 + $0xcf0] sm:$0xff]
                  %1185 = vst [vmem:[%s769 + $0x678] sm:$0xff] %v1184
                  %v1186 = vld [vmem:[%s768 + $0xd00] sm:$0xff]
                  %1187 = vst [vmem:[%s769 + $0x680] sm:$0xff] %v1186
                  %v1188 = vld [vmem:[%s768 + $0xd10] sm:$0xff]
                  %1189 = vst [vmem:[%s769 + $0x688] sm:$0xff] %v1188
                  %v1190 = vld [vmem:[%s768 + $0xd20] sm:$0xff]
                  %1191 = vst [vmem:[%s769 + $0x690] sm:$0xff] %v1190
                  %v1192 = vld [vmem:[%s768 + $0xd30] sm:$0xff]
                  %1193 = vst [vmem:[%s769 + $0x698] sm:$0xff] %v1192
                  %v1194 = vld [vmem:[%s768 + $0xd40] sm:$0xff]
                  %1195 = vst [vmem:[%s769 + $0x6a0] sm:$0xff] %v1194
                  %v1196 = vld [vmem:[%s768 + $0xd50] sm:$0xff]
                  %1197 = vst [vmem:[%s769 + $0x6a8] sm:$0xff] %v1196
                  %v1198 = vld [vmem:[%s768 + $0xd60] sm:$0xff]
                  %1199 = vst [vmem:[%s769 + $0x6b0] sm:$0xff] %v1198
                  %v1200 = vld [vmem:[%s768 + $0xd70] sm:$0xff]
                  %1201 = vst [vmem:[%s769 + $0x6b8] sm:$0xff] %v1200
                  %v1202 = vld [vmem:[%s768 + $0xd80] sm:$0xff]
                  %1203 = vst [vmem:[%s769 + $0x6c0] sm:$0xff] %v1202
                  %v1204 = vld [vmem:[%s768 + $0xd90] sm:$0xff]
                  %1205 = vst [vmem:[%s769 + $0x6c8] sm:$0xff] %v1204
                  %v1206 = vld [vmem:[%s768 + $0xda0] sm:$0xff]
                  %1207 = vst [vmem:[%s769 + $0x6d0] sm:$0xff] %v1206
                  %v1208 = vld [vmem:[%s768 + $0xdb0] sm:$0xff]
                  %1209 = vst [vmem:[%s769 + $0x6d8] sm:$0xff] %v1208
                  %v1210 = vld [vmem:[%s768 + $0xdc0] sm:$0xff]
                  %1211 = vst [vmem:[%s769 + $0x6e0] sm:$0xff] %v1210
                  %v1212 = vld [vmem:[%s768 + $0xdd0] sm:$0xff]
                  %1213 = vst [vmem:[%s769 + $0x6e8] sm:$0xff] %v1212
                  %v1214 = vld [vmem:[%s768 + $0xde0] sm:$0xff]
                  %1215 = vst [vmem:[%s769 + $0x6f0] sm:$0xff] %v1214
                  %v1216 = vld [vmem:[%s768 + $0xdf0] sm:$0xff]
                  %1217 = vst [vmem:[%s769 + $0x6f8] sm:$0xff] %v1216
                  %v1218 = vld [vmem:[%s768 + $0xe00] sm:$0xff]
                  %1219 = vst [vmem:[%s769 + $0x700] sm:$0xff] %v1218
                  %v1220 = vld [vmem:[%s768 + $0xe10] sm:$0xff]
                  %1221 = vst [vmem:[%s769 + $0x708] sm:$0xff] %v1220
                  %v1222 = vld [vmem:[%s768 + $0xe20] sm:$0xff]
                  %1223 = vst [vmem:[%s769 + $0x710] sm:$0xff] %v1222
                  %v1224 = vld [vmem:[%s768 + $0xe30] sm:$0xff]
                  %1225 = vst [vmem:[%s769 + $0x718] sm:$0xff] %v1224
                  %v1226 = vld [vmem:[%s768 + $0xe40] sm:$0xff]
                  %1227 = vst [vmem:[%s769 + $0x720] sm:$0xff] %v1226
                  %v1228 = vld [vmem:[%s768 + $0xe50] sm:$0xff]
                  %1229 = vst [vmem:[%s769 + $0x728] sm:$0xff] %v1228
                  %v1230 = vld [vmem:[%s768 + $0xe60] sm:$0xff]
                  %1231 = vst [vmem:[%s769 + $0x730] sm:$0xff] %v1230
                  %v1232 = vld [vmem:[%s768 + $0xe70] sm:$0xff]
                  %1233 = vst [vmem:[%s769 + $0x738] sm:$0xff] %v1232
                  %v1234 = vld [vmem:[%s768 + $0xe80] sm:$0xff]
                  %1235 = vst [vmem:[%s769 + $0x740] sm:$0xff] %v1234
                  %v1236 = vld [vmem:[%s768 + $0xe90] sm:$0xff]
                  %1237 = vst [vmem:[%s769 + $0x748] sm:$0xff] %v1236
                  %v1238 = vld [vmem:[%s768 + $0xea0] sm:$0xff]
                  %1239 = vst [vmem:[%s769 + $0x750] sm:$0xff] %v1238
                  %v1240 = vld [vmem:[%s768 + $0xeb0] sm:$0xff]
                  %1241 = vst [vmem:[%s769 + $0x758] sm:$0xff] %v1240
                  %v1242 = vld [vmem:[%s768 + $0xec0] sm:$0xff]
                  %1243 = vst [vmem:[%s769 + $0x760] sm:$0xff] %v1242
                  %v1244 = vld [vmem:[%s768 + $0xed0] sm:$0xff]
                  %1245 = vst [vmem:[%s769 + $0x768] sm:$0xff] %v1244
                  %v1246 = vld [vmem:[%s768 + $0xee0] sm:$0xff]
                  %1247 = vst [vmem:[%s769 + $0x770] sm:$0xff] %v1246
                  %v1248 = vld [vmem:[%s768 + $0xef0] sm:$0xff]
                  %1249 = vst [vmem:[%s769 + $0x778] sm:$0xff] %v1248
                  %v1250 = vld [vmem:[%s768 + $0xf00] sm:$0xff]
                  %1251 = vst [vmem:[%s769 + $0x780] sm:$0xff] %v1250
                  %v1252 = vld [vmem:[%s768 + $0xf10] sm:$0xff]
                  %1253 = vst [vmem:[%s769 + $0x788] sm:$0xff] %v1252
                  %v1254 = vld [vmem:[%s768 + $0xf20] sm:$0xff]
                  %1255 = vst [vmem:[%s769 + $0x790] sm:$0xff] %v1254
                  %v1256 = vld [vmem:[%s768 + $0xf30] sm:$0xff]
                  %1257 = vst [vmem:[%s769 + $0x798] sm:$0xff] %v1256
                  %v1258 = vld [vmem:[%s768 + $0xf40] sm:$0xff]
                  %1259 = vst [vmem:[%s769 + $0x7a0] sm:$0xff] %v1258
                  %v1260 = vld [vmem:[%s768 + $0xf50] sm:$0xff]
                  %1261 = vst [vmem:[%s769 + $0x7a8] sm:$0xff] %v1260
                  %v1262 = vld [vmem:[%s768 + $0xf60] sm:$0xff]
                  %1263 = vst [vmem:[%s769 + $0x7b0] sm:$0xff] %v1262
                  %v1264 = vld [vmem:[%s768 + $0xf70] sm:$0xff]
                  %1265 = vst [vmem:[%s769 + $0x7b8] sm:$0xff] %v1264
                  %v1266 = vld [vmem:[%s768 + $0xf80] sm:$0xff]
                  %1267 = vst [vmem:[%s769 + $0x7c0] sm:$0xff] %v1266
                  %v1268 = vld [vmem:[%s768 + $0xf90] sm:$0xff]
                  %1269 = vst [vmem:[%s769 + $0x7c8] sm:$0xff] %v1268
                  %v1270 = vld [vmem:[%s768 + $0xfa0] sm:$0xff]
                  %1271 = vst [vmem:[%s769 + $0x7d0] sm:$0xff] %v1270
                  %v1272 = vld [vmem:[%s768 + $0xfb0] sm:$0xff]
                  %1273 = vst [vmem:[%s769 + $0x7d8] sm:$0xff] %v1272
                  %v1274 = vld [vmem:[%s768 + $0xfc0] sm:$0xff]
                  %1275 = vst [vmem:[%s769 + $0x7e0] sm:$0xff] %v1274
                  %v1276 = vld [vmem:[%s768 + $0xfd0] sm:$0xff]
                  %1277 = vst [vmem:[%s769 + $0x7e8] sm:$0xff] %v1276
                  %v1278 = vld [vmem:[%s768 + $0xfe0] sm:$0xff]
                  %1279 = vst [vmem:[%s769 + $0x7f0] sm:$0xff] %v1278
                  %v1280 = vld [vmem:[%s768 + $0xff0] sm:$0xff]
                  %1281 = vst [vmem:[%s769 + $0x7f8] sm:$0xff] %v1280
                  %v1282 = vld [vmem:[%s768 + $0x1000] sm:$0xff]
                  %1283 = vst [vmem:[%s769 + $0x800] sm:$0xff] %v1282
                  %v1284 = vld [vmem:[%s768 + $0x1010] sm:$0xff]
                  %1285 = vst [vmem:[%s769 + $0x808] sm:$0xff] %v1284
                  %v1286 = vld [vmem:[%s768 + $0x1020] sm:$0xff]
                  %1287 = vst [vmem:[%s769 + $0x810] sm:$0xff] %v1286
                  %v1288 = vld [vmem:[%s768 + $0x1030] sm:$0xff]
                  %1289 = vst [vmem:[%s769 + $0x818] sm:$0xff] %v1288
                  %v1290 = vld [vmem:[%s768 + $0x1040] sm:$0xff]
                  %1291 = vst [vmem:[%s769 + $0x820] sm:$0xff] %v1290
                  %v1292 = vld [vmem:[%s768 + $0x1050] sm:$0xff]
                  %1293 = vst [vmem:[%s769 + $0x828] sm:$0xff] %v1292
                  %v1294 = vld [vmem:[%s768 + $0x1060] sm:$0xff]
                  %1295 = vst [vmem:[%s769 + $0x830] sm:$0xff] %v1294
                  %v1296 = vld [vmem:[%s768 + $0x1070] sm:$0xff]
                  %1297 = vst [vmem:[%s769 + $0x838] sm:$0xff] %v1296
                  %v1298 = vld [vmem:[%s768 + $0x1080] sm:$0xff]
                  %1299 = vst [vmem:[%s769 + $0x840] sm:$0xff] %v1298
                  %v1300 = vld [vmem:[%s768 + $0x1090] sm:$0xff]
                  %1301 = vst [vmem:[%s769 + $0x848] sm:$0xff] %v1300
                  %v1302 = vld [vmem:[%s768 + $0x10a0] sm:$0xff]
                  %1303 = vst [vmem:[%s769 + $0x850] sm:$0xff] %v1302
                  %v1304 = vld [vmem:[%s768 + $0x10b0] sm:$0xff]
                  %1305 = vst [vmem:[%s769 + $0x858] sm:$0xff] %v1304
                  %v1306 = vld [vmem:[%s768 + $0x10c0] sm:$0xff]
                  %1307 = vst [vmem:[%s769 + $0x860] sm:$0xff] %v1306
                  %v1308 = vld [vmem:[%s768 + $0x10d0] sm:$0xff]
                  %1309 = vst [vmem:[%s769 + $0x868] sm:$0xff] %v1308
                  %v1310 = vld [vmem:[%s768 + $0x10e0] sm:$0xff]
                  %1311 = vst [vmem:[%s769 + $0x870] sm:$0xff] %v1310
                  %v1312 = vld [vmem:[%s768 + $0x10f0] sm:$0xff]
                  %1313 = vst [vmem:[%s769 + $0x878] sm:$0xff] %v1312
                  %v1314 = vld [vmem:[%s768 + $0x1100] sm:$0xff]
                  %1315 = vst [vmem:[%s769 + $0x880] sm:$0xff] %v1314
                  %v1316 = vld [vmem:[%s768 + $0x1110] sm:$0xff]
                  %1317 = vst [vmem:[%s769 + $0x888] sm:$0xff] %v1316
                  %v1318 = vld [vmem:[%s768 + $0x1120] sm:$0xff]
                  %1319 = vst [vmem:[%s769 + $0x890] sm:$0xff] %v1318
                  %v1320 = vld [vmem:[%s768 + $0x1130] sm:$0xff]
                  %1321 = vst [vmem:[%s769 + $0x898] sm:$0xff] %v1320
                  %v1322 = vld [vmem:[%s768 + $0x1140] sm:$0xff]
                  %1323 = vst [vmem:[%s769 + $0x8a0] sm:$0xff] %v1322
                  %v1324 = vld [vmem:[%s768 + $0x1150] sm:$0xff]
                  %1325 = vst [vmem:[%s769 + $0x8a8] sm:$0xff] %v1324
                  %v1326 = vld [vmem:[%s768 + $0x1160] sm:$0xff]
                  %1327 = vst [vmem:[%s769 + $0x8b0] sm:$0xff] %v1326
                  %v1328 = vld [vmem:[%s768 + $0x1170] sm:$0xff]
                  %1329 = vst [vmem:[%s769 + $0x8b8] sm:$0xff] %v1328
                  %v1330 = vld [vmem:[%s768 + $0x1180] sm:$0xff]
                  %1331 = vst [vmem:[%s769 + $0x8c0] sm:$0xff] %v1330
                  %v1332 = vld [vmem:[%s768 + $0x1190] sm:$0xff]
                  %1333 = vst [vmem:[%s769 + $0x8c8] sm:$0xff] %v1332
                  %v1334 = vld [vmem:[%s768 + $0x11a0] sm:$0xff]
                  %1335 = vst [vmem:[%s769 + $0x8d0] sm:$0xff] %v1334
                  %v1336 = vld [vmem:[%s768 + $0x11b0] sm:$0xff]
                  %1337 = vst [vmem:[%s769 + $0x8d8] sm:$0xff] %v1336
                  %v1338 = vld [vmem:[%s768 + $0x11c0] sm:$0xff]
                  %1339 = vst [vmem:[%s769 + $0x8e0] sm:$0xff] %v1338
                  %v1340 = vld [vmem:[%s768 + $0x11d0] sm:$0xff]
                  %1341 = vst [vmem:[%s769 + $0x8e8] sm:$0xff] %v1340
                  %v1342 = vld [vmem:[%s768 + $0x11e0] sm:$0xff]
                  %1343 = vst [vmem:[%s769 + $0x8f0] sm:$0xff] %v1342
                  %v1344 = vld [vmem:[%s768 + $0x11f0] sm:$0xff]
                  %1345 = vst [vmem:[%s769 + $0x8f8] sm:$0xff] %v1344
                $region52: #{block_of_dmt3.1} parent=46 // loop_footer
                  %s767 = sadd.s32 1, %s763
                $region53: #{block_of_dmt3.1} parent=46 // loop_footer_branch
                  %762 = sbr.rel target = $region49
                $region54: #{block_of_dmt3.1} parent=46 // loop_exit
                  _
              $region47: #{block_of_dmt3.1} parent=31 // pred_fallthru
                _
              // Predicated region
              $region55: #{block_of_dmt3.1} parent=31 // pred_check
                _
              $region56: #{block_of_dmt3.1} parent=31 // pred_check_branch
                %1347 = sbr.rel target = $region58
              $region57: #{block_of_dmt3.1} parent=31 // pred_region
                _
              $region58: #{block_of_dmt3.1} parent=31 // pred_fallthru
                _
            $region32: #{block_of_dmt3.1} parent=27 // pred_fallthru
              _
            // Predicated region
            $region33: #{block_of_dmt3.1} parent=27 // pred_check
              _
            $region34: #{block_of_dmt3.1} parent=27 // pred_check_branch
              %174 = sbr.rel target = $region36
            $region35: #{block_of_dmt3.1} parent=27 // pred_region
              loop: start=0, step=1, limit=1
              $region37: #{block_of_dmt3.1} parent=35 // loop_pre_header
                _
              $region38: #{block_of_dmt3.1} parent=35 // loop_header
                %s177 = sphi 0, %s181
                %p178 = scmp.ge.s32.totalorder %s177, 1
                %s182 = sphi %s168, %s168
                %s183 = sphi %s166, %s166
              $region39: #{block_of_dmt3.1} parent=35 // loop_header_branch
                %180 = sbr.rel (%p178) target = $region43
              $region40: #{block_of_dmt3.1} parent=35 // loop_body
                %v184 = vld [vmem:[%s182] sm:$0xff]
                %185 = vst [vmem:[%s183] sm:$0xff] %v184
                %v186 = vld [vmem:[%s182 + $0x10] sm:$0xff]
                %187 = vst [vmem:[%s183 + $0x8] sm:$0xff] %v186
                %v188 = vld [vmem:[%s182 + $0x20] sm:$0xff]
                %189 = vst [vmem:[%s183 + $0x10] sm:$0xff] %v188
                %v190 = vld [vmem:[%s182 + $0x30] sm:$0xff]
                %191 = vst [vmem:[%s183 + $0x18] sm:$0xff] %v190
                %v192 = vld [vmem:[%s182 + $0x40] sm:$0xff]
                %193 = vst [vmem:[%s183 + $0x20] sm:$0xff] %v192
                %v194 = vld [vmem:[%s182 + $0x50] sm:$0xff]
                %195 = vst [vmem:[%s183 + $0x28] sm:$0xff] %v194
                %v196 = vld [vmem:[%s182 + $0x60] sm:$0xff]
                %197 = vst [vmem:[%s183 + $0x30] sm:$0xff] %v196
                %v198 = vld [vmem:[%s182 + $0x70] sm:$0xff]
                %199 = vst [vmem:[%s183 + $0x38] sm:$0xff] %v198
                %v200 = vld [vmem:[%s182 + $0x80] sm:$0xff]
                %201 = vst [vmem:[%s183 + $0x40] sm:$0xff] %v200
                %v202 = vld [vmem:[%s182 + $0x90] sm:$0xff]
                %203 = vst [vmem:[%s183 + $0x48] sm:$0xff] %v202
                %v204 = vld [vmem:[%s182 + $0xa0] sm:$0xff]
                %205 = vst [vmem:[%s183 + $0x50] sm:$0xff] %v204
                %v206 = vld [vmem:[%s182 + $0xb0] sm:$0xff]
                %207 = vst [vmem:[%s183 + $0x58] sm:$0xff] %v206
                %v208 = vld [vmem:[%s182 + $0xc0] sm:$0xff]
                %209 = vst [vmem:[%s183 + $0x60] sm:$0xff] %v208
                %v210 = vld [vmem:[%s182 + $0xd0] sm:$0xff]
                %211 = vst [vmem:[%s183 + $0x68] sm:$0xff] %v210
                %v212 = vld [vmem:[%s182 + $0xe0] sm:$0xff]
                %213 = vst [vmem:[%s183 + $0x70] sm:$0xff] %v212
                %v214 = vld [vmem:[%s182 + $0xf0] sm:$0xff]
                %215 = vst [vmem:[%s183 + $0x78] sm:$0xff] %v214
                %v216 = vld [vmem:[%s182 + $0x100] sm:$0xff]
                %217 = vst [vmem:[%s183 + $0x80] sm:$0xff] %v216
                %v218 = vld [vmem:[%s182 + $0x110] sm:$0xff]
                %219 = vst [vmem:[%s183 + $0x88] sm:$0xff] %v218
                %v220 = vld [vmem:[%s182 + $0x120] sm:$0xff]
                %221 = vst [vmem:[%s183 + $0x90] sm:$0xff] %v220
                %v222 = vld [vmem:[%s182 + $0x130] sm:$0xff]
                %223 = vst [vmem:[%s183 + $0x98] sm:$0xff] %v222
                %v224 = vld [vmem:[%s182 + $0x140] sm:$0xff]
                %225 = vst [vmem:[%s183 + $0xa0] sm:$0xff] %v224
                %v226 = vld [vmem:[%s182 + $0x150] sm:$0xff]
                %227 = vst [vmem:[%s183 + $0xa8] sm:$0xff] %v226
                %v228 = vld [vmem:[%s182 + $0x160] sm:$0xff]
                %229 = vst [vmem:[%s183 + $0xb0] sm:$0xff] %v228
                %v230 = vld [vmem:[%s182 + $0x170] sm:$0xff]
                %231 = vst [vmem:[%s183 + $0xb8] sm:$0xff] %v230
                %v232 = vld [vmem:[%s182 + $0x180] sm:$0xff]
                %233 = vst [vmem:[%s183 + $0xc0] sm:$0xff] %v232
                %v234 = vld [vmem:[%s182 + $0x190] sm:$0xff]
                %235 = vst [vmem:[%s183 + $0xc8] sm:$0xff] %v234
                %v236 = vld [vmem:[%s182 + $0x1a0] sm:$0xff]
                %237 = vst [vmem:[%s183 + $0xd0] sm:$0xff] %v236
                %v238 = vld [vmem:[%s182 + $0x1b0] sm:$0xff]
                %239 = vst [vmem:[%s183 + $0xd8] sm:$0xff] %v238
                %v240 = vld [vmem:[%s182 + $0x1c0] sm:$0xff]
                %241 = vst [vmem:[%s183 + $0xe0] sm:$0xff] %v240
                %v242 = vld [vmem:[%s182 + $0x1d0] sm:$0xff]
                %243 = vst [vmem:[%s183 + $0xe8] sm:$0xff] %v242
                %v244 = vld [vmem:[%s182 + $0x1e0] sm:$0xff]
                %245 = vst [vmem:[%s183 + $0xf0] sm:$0xff] %v244
                %v246 = vld [vmem:[%s182 + $0x1f0] sm:$0xff]
                %247 = vst [vmem:[%s183 + $0xf8] sm:$0xff] %v246
                %v248 = vld [vmem:[%s182 + $0x200] sm:$0xff]
                %249 = vst [vmem:[%s183 + $0x100] sm:$0xff] %v248
                %v250 = vld [vmem:[%s182 + $0x210] sm:$0xff]
                %251 = vst [vmem:[%s183 + $0x108] sm:$0xff] %v250
                %v252 = vld [vmem:[%s182 + $0x220] sm:$0xff]
                %253 = vst [vmem:[%s183 + $0x110] sm:$0xff] %v252
                %v254 = vld [vmem:[%s182 + $0x230] sm:$0xff]
                %255 = vst [vmem:[%s183 + $0x118] sm:$0xff] %v254
                %v256 = vld [vmem:[%s182 + $0x240] sm:$0xff]
                %257 = vst [vmem:[%s183 + $0x120] sm:$0xff] %v256
                %v258 = vld [vmem:[%s182 + $0x250] sm:$0xff]
                %259 = vst [vmem:[%s183 + $0x128] sm:$0xff] %v258
                %v260 = vld [vmem:[%s182 + $0x260] sm:$0xff]
                %261 = vst [vmem:[%s183 + $0x130] sm:$0xff] %v260
                %v262 = vld [vmem:[%s182 + $0x270] sm:$0xff]
                %263 = vst [vmem:[%s183 + $0x138] sm:$0xff] %v262
                %v264 = vld [vmem:[%s182 + $0x280] sm:$0xff]
                %265 = vst [vmem:[%s183 + $0x140] sm:$0xff] %v264
                %v266 = vld [vmem:[%s182 + $0x290] sm:$0xff]
                %267 = vst [vmem:[%s183 + $0x148] sm:$0xff] %v266
                %v268 = vld [vmem:[%s182 + $0x2a0] sm:$0xff]
                %269 = vst [vmem:[%s183 + $0x150] sm:$0xff] %v268
                %v270 = vld [vmem:[%s182 + $0x2b0] sm:$0xff]
                %271 = vst [vmem:[%s183 + $0x158] sm:$0xff] %v270
                %v272 = vld [vmem:[%s182 + $0x2c0] sm:$0xff]
                %273 = vst [vmem:[%s183 + $0x160] sm:$0xff] %v272
                %v274 = vld [vmem:[%s182 + $0x2d0] sm:$0xff]
                %275 = vst [vmem:[%s183 + $0x168] sm:$0xff] %v274
                %v276 = vld [vmem:[%s182 + $0x2e0] sm:$0xff]
                %277 = vst [vmem:[%s183 + $0x170] sm:$0xff] %v276
                %v278 = vld [vmem:[%s182 + $0x2f0] sm:$0xff]
                %279 = vst [vmem:[%s183 + $0x178] sm:$0xff] %v278
                %v280 = vld [vmem:[%s182 + $0x300] sm:$0xff]
                %281 = vst [vmem:[%s183 + $0x180] sm:$0xff] %v280
                %v282 = vld [vmem:[%s182 + $0x310] sm:$0xff]
                %283 = vst [vmem:[%s183 + $0x188] sm:$0xff] %v282
                %v284 = vld [vmem:[%s182 + $0x320] sm:$0xff]
                %285 = vst [vmem:[%s183 + $0x190] sm:$0xff] %v284
                %v286 = vld [vmem:[%s182 + $0x330] sm:$0xff]
                %287 = vst [vmem:[%s183 + $0x198] sm:$0xff] %v286
                %v288 = vld [vmem:[%s182 + $0x340] sm:$0xff]
                %289 = vst [vmem:[%s183 + $0x1a0] sm:$0xff] %v288
                %v290 = vld [vmem:[%s182 + $0x350] sm:$0xff]
                %291 = vst [vmem:[%s183 + $0x1a8] sm:$0xff] %v290
                %v292 = vld [vmem:[%s182 + $0x360] sm:$0xff]
                %293 = vst [vmem:[%s183 + $0x1b0] sm:$0xff] %v292
                %v294 = vld [vmem:[%s182 + $0x370] sm:$0xff]
                %295 = vst [vmem:[%s183 + $0x1b8] sm:$0xff] %v294
                %v296 = vld [vmem:[%s182 + $0x380] sm:$0xff]
                %297 = vst [vmem:[%s183 + $0x1c0] sm:$0xff] %v296
                %v298 = vld [vmem:[%s182 + $0x390] sm:$0xff]
                %299 = vst [vmem:[%s183 + $0x1c8] sm:$0xff] %v298
                %v300 = vld [vmem:[%s182 + $0x3a0] sm:$0xff]
                %301 = vst [vmem:[%s183 + $0x1d0] sm:$0xff] %v300
                %v302 = vld [vmem:[%s182 + $0x3b0] sm:$0xff]
                %303 = vst [vmem:[%s183 + $0x1d8] sm:$0xff] %v302
                %v304 = vld [vmem:[%s182 + $0x3c0] sm:$0xff]
                %305 = vst [vmem:[%s183 + $0x1e0] sm:$0xff] %v304
                %v306 = vld [vmem:[%s182 + $0x3d0] sm:$0xff]
                %307 = vst [vmem:[%s183 + $0x1e8] sm:$0xff] %v306
                %v308 = vld [vmem:[%s182 + $0x3e0] sm:$0xff]
                %309 = vst [vmem:[%s183 + $0x1f0] sm:$0xff] %v308
                %v310 = vld [vmem:[%s182 + $0x3f0] sm:$0xff]
                %311 = vst [vmem:[%s183 + $0x1f8] sm:$0xff] %v310
                %v312 = vld [vmem:[%s182 + $0x400] sm:$0xff]
                %313 = vst [vmem:[%s183 + $0x200] sm:$0xff] %v312
                %v314 = vld [vmem:[%s182 + $0x410] sm:$0xff]
                %315 = vst [vmem:[%s183 + $0x208] sm:$0xff] %v314
                %v316 = vld [vmem:[%s182 + $0x420] sm:$0xff]
                %317 = vst [vmem:[%s183 + $0x210] sm:$0xff] %v316
                %v318 = vld [vmem:[%s182 + $0x430] sm:$0xff]
                %319 = vst [vmem:[%s183 + $0x218] sm:$0xff] %v318
                %v320 = vld [vmem:[%s182 + $0x440] sm:$0xff]
                %321 = vst [vmem:[%s183 + $0x220] sm:$0xff] %v320
                %v322 = vld [vmem:[%s182 + $0x450] sm:$0xff]
                %323 = vst [vmem:[%s183 + $0x228] sm:$0xff] %v322
                %v324 = vld [vmem:[%s182 + $0x460] sm:$0xff]
                %325 = vst [vmem:[%s183 + $0x230] sm:$0xff] %v324
                %v326 = vld [vmem:[%s182 + $0x470] sm:$0xff]
                %327 = vst [vmem:[%s183 + $0x238] sm:$0xff] %v326
                %v328 = vld [vmem:[%s182 + $0x480] sm:$0xff]
                %329 = vst [vmem:[%s183 + $0x240] sm:$0xff] %v328
                %v330 = vld [vmem:[%s182 + $0x490] sm:$0xff]
                %331 = vst [vmem:[%s183 + $0x248] sm:$0xff] %v330
                %v332 = vld [vmem:[%s182 + $0x4a0] sm:$0xff]
                %333 = vst [vmem:[%s183 + $0x250] sm:$0xff] %v332
                %v334 = vld [vmem:[%s182 + $0x4b0] sm:$0xff]
                %335 = vst [vmem:[%s183 + $0x258] sm:$0xff] %v334
                %v336 = vld [vmem:[%s182 + $0x4c0] sm:$0xff]
                %337 = vst [vmem:[%s183 + $0x260] sm:$0xff] %v336
                %v338 = vld [vmem:[%s182 + $0x4d0] sm:$0xff]
                %339 = vst [vmem:[%s183 + $0x268] sm:$0xff] %v338
                %v340 = vld [vmem:[%s182 + $0x4e0] sm:$0xff]
                %341 = vst [vmem:[%s183 + $0x270] sm:$0xff] %v340
                %v342 = vld [vmem:[%s182 + $0x4f0] sm:$0xff]
                %343 = vst [vmem:[%s183 + $0x278] sm:$0xff] %v342
                %v344 = vld [vmem:[%s182 + $0x500] sm:$0xff]
                %345 = vst [vmem:[%s183 + $0x280] sm:$0xff] %v344
                %v346 = vld [vmem:[%s182 + $0x510] sm:$0xff]
                %347 = vst [vmem:[%s183 + $0x288] sm:$0xff] %v346
                %v348 = vld [vmem:[%s182 + $0x520] sm:$0xff]
                %349 = vst [vmem:[%s183 + $0x290] sm:$0xff] %v348
                %v350 = vld [vmem:[%s182 + $0x530] sm:$0xff]
                %351 = vst [vmem:[%s183 + $0x298] sm:$0xff] %v350
                %v352 = vld [vmem:[%s182 + $0x540] sm:$0xff]
                %353 = vst [vmem:[%s183 + $0x2a0] sm:$0xff] %v352
                %v354 = vld [vmem:[%s182 + $0x550] sm:$0xff]
                %355 = vst [vmem:[%s183 + $0x2a8] sm:$0xff] %v354
                %v356 = vld [vmem:[%s182 + $0x560] sm:$0xff]
                %357 = vst [vmem:[%s183 + $0x2b0] sm:$0xff] %v356
                %v358 = vld [vmem:[%s182 + $0x570] sm:$0xff]
                %359 = vst [vmem:[%s183 + $0x2b8] sm:$0xff] %v358
                %v360 = vld [vmem:[%s182 + $0x580] sm:$0xff]
                %361 = vst [vmem:[%s183 + $0x2c0] sm:$0xff] %v360
                %v362 = vld [vmem:[%s182 + $0x590] sm:$0xff]
                %363 = vst [vmem:[%s183 + $0x2c8] sm:$0xff] %v362
                %v364 = vld [vmem:[%s182 + $0x5a0] sm:$0xff]
                %365 = vst [vmem:[%s183 + $0x2d0] sm:$0xff] %v364
                %v366 = vld [vmem:[%s182 + $0x5b0] sm:$0xff]
                %367 = vst [vmem:[%s183 + $0x2d8] sm:$0xff] %v366
                %v368 = vld [vmem:[%s182 + $0x5c0] sm:$0xff]
                %369 = vst [vmem:[%s183 + $0x2e0] sm:$0xff] %v368
                %v370 = vld [vmem:[%s182 + $0x5d0] sm:$0xff]
                %371 = vst [vmem:[%s183 + $0x2e8] sm:$0xff] %v370
                %v372 = vld [vmem:[%s182 + $0x5e0] sm:$0xff]
                %373 = vst [vmem:[%s183 + $0x2f0] sm:$0xff] %v372
                %v374 = vld [vmem:[%s182 + $0x5f0] sm:$0xff]
                %375 = vst [vmem:[%s183 + $0x2f8] sm:$0xff] %v374
                %v376 = vld [vmem:[%s182 + $0x600] sm:$0xff]
                %377 = vst [vmem:[%s183 + $0x300] sm:$0xff] %v376
                %v378 = vld [vmem:[%s182 + $0x610] sm:$0xff]
                %379 = vst [vmem:[%s183 + $0x308] sm:$0xff] %v378
                %v380 = vld [vmem:[%s182 + $0x620] sm:$0xff]
                %381 = vst [vmem:[%s183 + $0x310] sm:$0xff] %v380
                %v382 = vld [vmem:[%s182 + $0x630] sm:$0xff]
                %383 = vst [vmem:[%s183 + $0x318] sm:$0xff] %v382
                %v384 = vld [vmem:[%s182 + $0x640] sm:$0xff]
                %385 = vst [vmem:[%s183 + $0x320] sm:$0xff] %v384
                %v386 = vld [vmem:[%s182 + $0x650] sm:$0xff]
                %387 = vst [vmem:[%s183 + $0x328] sm:$0xff] %v386
                %v388 = vld [vmem:[%s182 + $0x660] sm:$0xff]
                %389 = vst [vmem:[%s183 + $0x330] sm:$0xff] %v388
                %v390 = vld [vmem:[%s182 + $0x670] sm:$0xff]
                %391 = vst [vmem:[%s183 + $0x338] sm:$0xff] %v390
                %v392 = vld [vmem:[%s182 + $0x680] sm:$0xff]
                %393 = vst [vmem:[%s183 + $0x340] sm:$0xff] %v392
                %v394 = vld [vmem:[%s182 + $0x690] sm:$0xff]
                %395 = vst [vmem:[%s183 + $0x348] sm:$0xff] %v394
                %v396 = vld [vmem:[%s182 + $0x6a0] sm:$0xff]
                %397 = vst [vmem:[%s183 + $0x350] sm:$0xff] %v396
                %v398 = vld [vmem:[%s182 + $0x6b0] sm:$0xff]
                %399 = vst [vmem:[%s183 + $0x358] sm:$0xff] %v398
                %v400 = vld [vmem:[%s182 + $0x6c0] sm:$0xff]
                %401 = vst [vmem:[%s183 + $0x360] sm:$0xff] %v400
                %v402 = vld [vmem:[%s182 + $0x6d0] sm:$0xff]
                %403 = vst [vmem:[%s183 + $0x368] sm:$0xff] %v402
                %v404 = vld [vmem:[%s182 + $0x6e0] sm:$0xff]
                %405 = vst [vmem:[%s183 + $0x370] sm:$0xff] %v404
                %v406 = vld [vmem:[%s182 + $0x6f0] sm:$0xff]
                %407 = vst [vmem:[%s183 + $0x378] sm:$0xff] %v406
                %v408 = vld [vmem:[%s182 + $0x700] sm:$0xff]
                %409 = vst [vmem:[%s183 + $0x380] sm:$0xff] %v408
                %v410 = vld [vmem:[%s182 + $0x710] sm:$0xff]
                %411 = vst [vmem:[%s183 + $0x388] sm:$0xff] %v410
                %v412 = vld [vmem:[%s182 + $0x720] sm:$0xff]
                %413 = vst [vmem:[%s183 + $0x390] sm:$0xff] %v412
                %v414 = vld [vmem:[%s182 + $0x730] sm:$0xff]
                %415 = vst [vmem:[%s183 + $0x398] sm:$0xff] %v414
                %v416 = vld [vmem:[%s182 + $0x740] sm:$0xff]
                %417 = vst [vmem:[%s183 + $0x3a0] sm:$0xff] %v416
                %v418 = vld [vmem:[%s182 + $0x750] sm:$0xff]
                %419 = vst [vmem:[%s183 + $0x3a8] sm:$0xff] %v418
                %v420 = vld [vmem:[%s182 + $0x760] sm:$0xff]
                %421 = vst [vmem:[%s183 + $0x3b0] sm:$0xff] %v420
                %v422 = vld [vmem:[%s182 + $0x770] sm:$0xff]
                %423 = vst [vmem:[%s183 + $0x3b8] sm:$0xff] %v422
                %v424 = vld [vmem:[%s182 + $0x780] sm:$0xff]
                %425 = vst [vmem:[%s183 + $0x3c0] sm:$0xff] %v424
                %v426 = vld [vmem:[%s182 + $0x790] sm:$0xff]
                %427 = vst [vmem:[%s183 + $0x3c8] sm:$0xff] %v426
                %v428 = vld [vmem:[%s182 + $0x7a0] sm:$0xff]
                %429 = vst [vmem:[%s183 + $0x3d0] sm:$0xff] %v428
                %v430 = vld [vmem:[%s182 + $0x7b0] sm:$0xff]
                %431 = vst [vmem:[%s183 + $0x3d8] sm:$0xff] %v430
                %v432 = vld [vmem:[%s182 + $0x7c0] sm:$0xff]
                %433 = vst [vmem:[%s183 + $0x3e0] sm:$0xff] %v432
                %v434 = vld [vmem:[%s182 + $0x7d0] sm:$0xff]
                %435 = vst [vmem:[%s183 + $0x3e8] sm:$0xff] %v434
                %v436 = vld [vmem:[%s182 + $0x7e0] sm:$0xff]
                %437 = vst [vmem:[%s183 + $0x3f0] sm:$0xff] %v436
                %v438 = vld [vmem:[%s182 + $0x7f0] sm:$0xff]
                %439 = vst [vmem:[%s183 + $0x3f8] sm:$0xff] %v438
                %v440 = vld [vmem:[%s182 + $0x800] sm:$0xff]
                %441 = vst [vmem:[%s183 + $0x400] sm:$0xff] %v440
                %v442 = vld [vmem:[%s182 + $0x810] sm:$0xff]
                %443 = vst [vmem:[%s183 + $0x408] sm:$0xff] %v442
                %v444 = vld [vmem:[%s182 + $0x820] sm:$0xff]
                %445 = vst [vmem:[%s183 + $0x410] sm:$0xff] %v444
                %v446 = vld [vmem:[%s182 + $0x830] sm:$0xff]
                %447 = vst [vmem:[%s183 + $0x418] sm:$0xff] %v446
                %v448 = vld [vmem:[%s182 + $0x840] sm:$0xff]
                %449 = vst [vmem:[%s183 + $0x420] sm:$0xff] %v448
                %v450 = vld [vmem:[%s182 + $0x850] sm:$0xff]
                %451 = vst [vmem:[%s183 + $0x428] sm:$0xff] %v450
                %v452 = vld [vmem:[%s182 + $0x860] sm:$0xff]
                %453 = vst [vmem:[%s183 + $0x430] sm:$0xff] %v452
                %v454 = vld [vmem:[%s182 + $0x870] sm:$0xff]
                %455 = vst [vmem:[%s183 + $0x438] sm:$0xff] %v454
                %v456 = vld [vmem:[%s182 + $0x880] sm:$0xff]
                %457 = vst [vmem:[%s183 + $0x440] sm:$0xff] %v456
                %v458 = vld [vmem:[%s182 + $0x890] sm:$0xff]
                %459 = vst [vmem:[%s183 + $0x448] sm:$0xff] %v458
                %v460 = vld [vmem:[%s182 + $0x8a0] sm:$0xff]
                %461 = vst [vmem:[%s183 + $0x450] sm:$0xff] %v460
                %v462 = vld [vmem:[%s182 + $0x8b0] sm:$0xff]
                %463 = vst [vmem:[%s183 + $0x458] sm:$0xff] %v462
                %v464 = vld [vmem:[%s182 + $0x8c0] sm:$0xff]
                %465 = vst [vmem:[%s183 + $0x460] sm:$0xff] %v464
                %v466 = vld [vmem:[%s182 + $0x8d0] sm:$0xff]
                %467 = vst [vmem:[%s183 + $0x468] sm:$0xff] %v466
                %v468 = vld [vmem:[%s182 + $0x8e0] sm:$0xff]
                %469 = vst [vmem:[%s183 + $0x470] sm:$0xff] %v468
                %v470 = vld [vmem:[%s182 + $0x8f0] sm:$0xff]
                %471 = vst [vmem:[%s183 + $0x478] sm:$0xff] %v470
                %v472 = vld [vmem:[%s182 + $0x900] sm:$0xff]
                %473 = vst [vmem:[%s183 + $0x480] sm:$0xff] %v472
                %v474 = vld [vmem:[%s182 + $0x910] sm:$0xff]
                %475 = vst [vmem:[%s183 + $0x488] sm:$0xff] %v474
                %v476 = vld [vmem:[%s182 + $0x920] sm:$0xff]
                %477 = vst [vmem:[%s183 + $0x490] sm:$0xff] %v476
                %v478 = vld [vmem:[%s182 + $0x930] sm:$0xff]
                %479 = vst [vmem:[%s183 + $0x498] sm:$0xff] %v478
                %v480 = vld [vmem:[%s182 + $0x940] sm:$0xff]
                %481 = vst [vmem:[%s183 + $0x4a0] sm:$0xff] %v480
                %v482 = vld [vmem:[%s182 + $0x950] sm:$0xff]
                %483 = vst [vmem:[%s183 + $0x4a8] sm:$0xff] %v482
                %v484 = vld [vmem:[%s182 + $0x960] sm:$0xff]
                %485 = vst [vmem:[%s183 + $0x4b0] sm:$0xff] %v484
                %v486 = vld [vmem:[%s182 + $0x970] sm:$0xff]
                %487 = vst [vmem:[%s183 + $0x4b8] sm:$0xff] %v486
                %v488 = vld [vmem:[%s182 + $0x980] sm:$0xff]
                %489 = vst [vmem:[%s183 + $0x4c0] sm:$0xff] %v488
                %v490 = vld [vmem:[%s182 + $0x990] sm:$0xff]
                %491 = vst [vmem:[%s183 + $0x4c8] sm:$0xff] %v490
                %v492 = vld [vmem:[%s182 + $0x9a0] sm:$0xff]
                %493 = vst [vmem:[%s183 + $0x4d0] sm:$0xff] %v492
                %v494 = vld [vmem:[%s182 + $0x9b0] sm:$0xff]
                %495 = vst [vmem:[%s183 + $0x4d8] sm:$0xff] %v494
                %v496 = vld [vmem:[%s182 + $0x9c0] sm:$0xff]
                %497 = vst [vmem:[%s183 + $0x4e0] sm:$0xff] %v496
                %v498 = vld [vmem:[%s182 + $0x9d0] sm:$0xff]
                %499 = vst [vmem:[%s183 + $0x4e8] sm:$0xff] %v498
                %v500 = vld [vmem:[%s182 + $0x9e0] sm:$0xff]
                %501 = vst [vmem:[%s183 + $0x4f0] sm:$0xff] %v500
                %v502 = vld [vmem:[%s182 + $0x9f0] sm:$0xff]
                %503 = vst [vmem:[%s183 + $0x4f8] sm:$0xff] %v502
                %v504 = vld [vmem:[%s182 + $0xa00] sm:$0xff]
                %505 = vst [vmem:[%s183 + $0x500] sm:$0xff] %v504
                %v506 = vld [vmem:[%s182 + $0xa10] sm:$0xff]
                %507 = vst [vmem:[%s183 + $0x508] sm:$0xff] %v506
                %v508 = vld [vmem:[%s182 + $0xa20] sm:$0xff]
                %509 = vst [vmem:[%s183 + $0x510] sm:$0xff] %v508
                %v510 = vld [vmem:[%s182 + $0xa30] sm:$0xff]
                %511 = vst [vmem:[%s183 + $0x518] sm:$0xff] %v510
                %v512 = vld [vmem:[%s182 + $0xa40] sm:$0xff]
                %513 = vst [vmem:[%s183 + $0x520] sm:$0xff] %v512
                %v514 = vld [vmem:[%s182 + $0xa50] sm:$0xff]
                %515 = vst [vmem:[%s183 + $0x528] sm:$0xff] %v514
                %v516 = vld [vmem:[%s182 + $0xa60] sm:$0xff]
                %517 = vst [vmem:[%s183 + $0x530] sm:$0xff] %v516
                %v518 = vld [vmem:[%s182 + $0xa70] sm:$0xff]
                %519 = vst [vmem:[%s183 + $0x538] sm:$0xff] %v518
                %v520 = vld [vmem:[%s182 + $0xa80] sm:$0xff]
                %521 = vst [vmem:[%s183 + $0x540] sm:$0xff] %v520
                %v522 = vld [vmem:[%s182 + $0xa90] sm:$0xff]
                %523 = vst [vmem:[%s183 + $0x548] sm:$0xff] %v522
                %v524 = vld [vmem:[%s182 + $0xaa0] sm:$0xff]
                %525 = vst [vmem:[%s183 + $0x550] sm:$0xff] %v524
                %v526 = vld [vmem:[%s182 + $0xab0] sm:$0xff]
                %527 = vst [vmem:[%s183 + $0x558] sm:$0xff] %v526
                %v528 = vld [vmem:[%s182 + $0xac0] sm:$0xff]
                %529 = vst [vmem:[%s183 + $0x560] sm:$0xff] %v528
                %v530 = vld [vmem:[%s182 + $0xad0] sm:$0xff]
                %531 = vst [vmem:[%s183 + $0x568] sm:$0xff] %v530
                %v532 = vld [vmem:[%s182 + $0xae0] sm:$0xff]
                %533 = vst [vmem:[%s183 + $0x570] sm:$0xff] %v532
                %v534 = vld [vmem:[%s182 + $0xaf0] sm:$0xff]
                %535 = vst [vmem:[%s183 + $0x578] sm:$0xff] %v534
                %v536 = vld [vmem:[%s182 + $0xb00] sm:$0xff]
                %537 = vst [vmem:[%s183 + $0x580] sm:$0xff] %v536
                %v538 = vld [vmem:[%s182 + $0xb10] sm:$0xff]
                %539 = vst [vmem:[%s183 + $0x588] sm:$0xff] %v538
                %v540 = vld [vmem:[%s182 + $0xb20] sm:$0xff]
                %541 = vst [vmem:[%s183 + $0x590] sm:$0xff] %v540
                %v542 = vld [vmem:[%s182 + $0xb30] sm:$0xff]
                %543 = vst [vmem:[%s183 + $0x598] sm:$0xff] %v542
                %v544 = vld [vmem:[%s182 + $0xb40] sm:$0xff]
                %545 = vst [vmem:[%s183 + $0x5a0] sm:$0xff] %v544
                %v546 = vld [vmem:[%s182 + $0xb50] sm:$0xff]
                %547 = vst [vmem:[%s183 + $0x5a8] sm:$0xff] %v546
                %v548 = vld [vmem:[%s182 + $0xb60] sm:$0xff]
                %549 = vst [vmem:[%s183 + $0x5b0] sm:$0xff] %v548
                %v550 = vld [vmem:[%s182 + $0xb70] sm:$0xff]
                %551 = vst [vmem:[%s183 + $0x5b8] sm:$0xff] %v550
                %v552 = vld [vmem:[%s182 + $0xb80] sm:$0xff]
                %553 = vst [vmem:[%s183 + $0x5c0] sm:$0xff] %v552
                %v554 = vld [vmem:[%s182 + $0xb90] sm:$0xff]
                %555 = vst [vmem:[%s183 + $0x5c8] sm:$0xff] %v554
                %v556 = vld [vmem:[%s182 + $0xba0] sm:$0xff]
                %557 = vst [vmem:[%s183 + $0x5d0] sm:$0xff] %v556
                %v558 = vld [vmem:[%s182 + $0xbb0] sm:$0xff]
                %559 = vst [vmem:[%s183 + $0x5d8] sm:$0xff] %v558
                %v560 = vld [vmem:[%s182 + $0xbc0] sm:$0xff]
                %561 = vst [vmem:[%s183 + $0x5e0] sm:$0xff] %v560
                %v562 = vld [vmem:[%s182 + $0xbd0] sm:$0xff]
                %563 = vst [vmem:[%s183 + $0x5e8] sm:$0xff] %v562
                %v564 = vld [vmem:[%s182 + $0xbe0] sm:$0xff]
                %565 = vst [vmem:[%s183 + $0x5f0] sm:$0xff] %v564
                %v566 = vld [vmem:[%s182 + $0xbf0] sm:$0xff]
                %567 = vst [vmem:[%s183 + $0x5f8] sm:$0xff] %v566
                %v568 = vld [vmem:[%s182 + $0xc00] sm:$0xff]
                %569 = vst [vmem:[%s183 + $0x600] sm:$0xff] %v568
                %v570 = vld [vmem:[%s182 + $0xc10] sm:$0xff]
                %571 = vst [vmem:[%s183 + $0x608] sm:$0xff] %v570
                %v572 = vld [vmem:[%s182 + $0xc20] sm:$0xff]
                %573 = vst [vmem:[%s183 + $0x610] sm:$0xff] %v572
                %v574 = vld [vmem:[%s182 + $0xc30] sm:$0xff]
                %575 = vst [vmem:[%s183 + $0x618] sm:$0xff] %v574
                %v576 = vld [vmem:[%s182 + $0xc40] sm:$0xff]
                %577 = vst [vmem:[%s183 + $0x620] sm:$0xff] %v576
                %v578 = vld [vmem:[%s182 + $0xc50] sm:$0xff]
                %579 = vst [vmem:[%s183 + $0x628] sm:$0xff] %v578
                %v580 = vld [vmem:[%s182 + $0xc60] sm:$0xff]
                %581 = vst [vmem:[%s183 + $0x630] sm:$0xff] %v580
                %v582 = vld [vmem:[%s182 + $0xc70] sm:$0xff]
                %583 = vst [vmem:[%s183 + $0x638] sm:$0xff] %v582
                %v584 = vld [vmem:[%s182 + $0xc80] sm:$0xff]
                %585 = vst [vmem:[%s183 + $0x640] sm:$0xff] %v584
                %v586 = vld [vmem:[%s182 + $0xc90] sm:$0xff]
                %587 = vst [vmem:[%s183 + $0x648] sm:$0xff] %v586
                %v588 = vld [vmem:[%s182 + $0xca0] sm:$0xff]
                %589 = vst [vmem:[%s183 + $0x650] sm:$0xff] %v588
                %v590 = vld [vmem:[%s182 + $0xcb0] sm:$0xff]
                %591 = vst [vmem:[%s183 + $0x658] sm:$0xff] %v590
                %v592 = vld [vmem:[%s182 + $0xcc0] sm:$0xff]
                %593 = vst [vmem:[%s183 + $0x660] sm:$0xff] %v592
                %v594 = vld [vmem:[%s182 + $0xcd0] sm:$0xff]
                %595 = vst [vmem:[%s183 + $0x668] sm:$0xff] %v594
                %v596 = vld [vmem:[%s182 + $0xce0] sm:$0xff]
                %597 = vst [vmem:[%s183 + $0x670] sm:$0xff] %v596
                %v598 = vld [vmem:[%s182 + $0xcf0] sm:$0xff]
                %599 = vst [vmem:[%s183 + $0x678] sm:$0xff] %v598
                %v600 = vld [vmem:[%s182 + $0xd00] sm:$0xff]
                %601 = vst [vmem:[%s183 + $0x680] sm:$0xff] %v600
                %v602 = vld [vmem:[%s182 + $0xd10] sm:$0xff]
                %603 = vst [vmem:[%s183 + $0x688] sm:$0xff] %v602
                %v604 = vld [vmem:[%s182 + $0xd20] sm:$0xff]
                %605 = vst [vmem:[%s183 + $0x690] sm:$0xff] %v604
                %v606 = vld [vmem:[%s182 + $0xd30] sm:$0xff]
                %607 = vst [vmem:[%s183 + $0x698] sm:$0xff] %v606
                %v608 = vld [vmem:[%s182 + $0xd40] sm:$0xff]
                %609 = vst [vmem:[%s183 + $0x6a0] sm:$0xff] %v608
                %v610 = vld [vmem:[%s182 + $0xd50] sm:$0xff]
                %611 = vst [vmem:[%s183 + $0x6a8] sm:$0xff] %v610
                %v612 = vld [vmem:[%s182 + $0xd60] sm:$0xff]
                %613 = vst [vmem:[%s183 + $0x6b0] sm:$0xff] %v612
                %v614 = vld [vmem:[%s182 + $0xd70] sm:$0xff]
                %615 = vst [vmem:[%s183 + $0x6b8] sm:$0xff] %v614
                %v616 = vld [vmem:[%s182 + $0xd80] sm:$0xff]
                %617 = vst [vmem:[%s183 + $0x6c0] sm:$0xff] %v616
                %v618 = vld [vmem:[%s182 + $0xd90] sm:$0xff]
                %619 = vst [vmem:[%s183 + $0x6c8] sm:$0xff] %v618
                %v620 = vld [vmem:[%s182 + $0xda0] sm:$0xff]
                %621 = vst [vmem:[%s183 + $0x6d0] sm:$0xff] %v620
                %v622 = vld [vmem:[%s182 + $0xdb0] sm:$0xff]
                %623 = vst [vmem:[%s183 + $0x6d8] sm:$0xff] %v622
                %v624 = vld [vmem:[%s182 + $0xdc0] sm:$0xff]
                %625 = vst [vmem:[%s183 + $0x6e0] sm:$0xff] %v624
                %v626 = vld [vmem:[%s182 + $0xdd0] sm:$0xff]
                %627 = vst [vmem:[%s183 + $0x6e8] sm:$0xff] %v626
                %v628 = vld [vmem:[%s182 + $0xde0] sm:$0xff]
                %629 = vst [vmem:[%s183 + $0x6f0] sm:$0xff] %v628
                %v630 = vld [vmem:[%s182 + $0xdf0] sm:$0xff]
                %631 = vst [vmem:[%s183 + $0x6f8] sm:$0xff] %v630
                %v632 = vld [vmem:[%s182 + $0xe00] sm:$0xff]
                %633 = vst [vmem:[%s183 + $0x700] sm:$0xff] %v632
                %v634 = vld [vmem:[%s182 + $0xe10] sm:$0xff]
                %635 = vst [vmem:[%s183 + $0x708] sm:$0xff] %v634
                %v636 = vld [vmem:[%s182 + $0xe20] sm:$0xff]
                %637 = vst [vmem:[%s183 + $0x710] sm:$0xff] %v636
                %v638 = vld [vmem:[%s182 + $0xe30] sm:$0xff]
                %639 = vst [vmem:[%s183 + $0x718] sm:$0xff] %v638
                %v640 = vld [vmem:[%s182 + $0xe40] sm:$0xff]
                %641 = vst [vmem:[%s183 + $0x720] sm:$0xff] %v640
                %v642 = vld [vmem:[%s182 + $0xe50] sm:$0xff]
                %643 = vst [vmem:[%s183 + $0x728] sm:$0xff] %v642
                %v644 = vld [vmem:[%s182 + $0xe60] sm:$0xff]
                %645 = vst [vmem:[%s183 + $0x730] sm:$0xff] %v644
                %v646 = vld [vmem:[%s182 + $0xe70] sm:$0xff]
                %647 = vst [vmem:[%s183 + $0x738] sm:$0xff] %v646
                %v648 = vld [vmem:[%s182 + $0xe80] sm:$0xff]
                %649 = vst [vmem:[%s183 + $0x740] sm:$0xff] %v648
                %v650 = vld [vmem:[%s182 + $0xe90] sm:$0xff]
                %651 = vst [vmem:[%s183 + $0x748] sm:$0xff] %v650
                %v652 = vld [vmem:[%s182 + $0xea0] sm:$0xff]
                %653 = vst [vmem:[%s183 + $0x750] sm:$0xff] %v652
                %v654 = vld [vmem:[%s182 + $0xeb0] sm:$0xff]
                %655 = vst [vmem:[%s183 + $0x758] sm:$0xff] %v654
                %v656 = vld [vmem:[%s182 + $0xec0] sm:$0xff]
                %657 = vst [vmem:[%s183 + $0x760] sm:$0xff] %v656
                %v658 = vld [vmem:[%s182 + $0xed0] sm:$0xff]
                %659 = vst [vmem:[%s183 + $0x768] sm:$0xff] %v658
                %v660 = vld [vmem:[%s182 + $0xee0] sm:$0xff]
                %661 = vst [vmem:[%s183 + $0x770] sm:$0xff] %v660
                %v662 = vld [vmem:[%s182 + $0xef0] sm:$0xff]
                %663 = vst [vmem:[%s183 + $0x778] sm:$0xff] %v662
                %v664 = vld [vmem:[%s182 + $0xf00] sm:$0xff]
                %665 = vst [vmem:[%s183 + $0x780] sm:$0xff] %v664
                %v666 = vld [vmem:[%s182 + $0xf10] sm:$0xff]
                %667 = vst [vmem:[%s183 + $0x788] sm:$0xff] %v666
                %v668 = vld [vmem:[%s182 + $0xf20] sm:$0xff]
                %669 = vst [vmem:[%s183 + $0x790] sm:$0xff] %v668
                %v670 = vld [vmem:[%s182 + $0xf30] sm:$0xff]
                %671 = vst [vmem:[%s183 + $0x798] sm:$0xff] %v670
                %v672 = vld [vmem:[%s182 + $0xf40] sm:$0xff]
                %673 = vst [vmem:[%s183 + $0x7a0] sm:$0xff] %v672
                %v674 = vld [vmem:[%s182 + $0xf50] sm:$0xff]
                %675 = vst [vmem:[%s183 + $0x7a8] sm:$0xff] %v674
                %v676 = vld [vmem:[%s182 + $0xf60] sm:$0xff]
                %677 = vst [vmem:[%s183 + $0x7b0] sm:$0xff] %v676
                %v678 = vld [vmem:[%s182 + $0xf70] sm:$0xff]
                %679 = vst [vmem:[%s183 + $0x7b8] sm:$0xff] %v678
                %v680 = vld [vmem:[%s182 + $0xf80] sm:$0xff]
                %681 = vst [vmem:[%s183 + $0x7c0] sm:$0xff] %v680
                %v682 = vld [vmem:[%s182 + $0xf90] sm:$0xff]
                %683 = vst [vmem:[%s183 + $0x7c8] sm:$0xff] %v682
                %v684 = vld [vmem:[%s182 + $0xfa0] sm:$0xff]
                %685 = vst [vmem:[%s183 + $0x7d0] sm:$0xff] %v684
                %v686 = vld [vmem:[%s182 + $0xfb0] sm:$0xff]
                %687 = vst [vmem:[%s183 + $0x7d8] sm:$0xff] %v686
                %v688 = vld [vmem:[%s182 + $0xfc0] sm:$0xff]
                %689 = vst [vmem:[%s183 + $0x7e0] sm:$0xff] %v688
                %v690 = vld [vmem:[%s182 + $0xfd0] sm:$0xff]
                %691 = vst [vmem:[%s183 + $0x7e8] sm:$0xff] %v690
                %v692 = vld [vmem:[%s182 + $0xfe0] sm:$0xff]
                %693 = vst [vmem:[%s183 + $0x7f0] sm:$0xff] %v692
                %v694 = vld [vmem:[%s182 + $0xff0] sm:$0xff]
                %695 = vst [vmem:[%s183 + $0x7f8] sm:$0xff] %v694
                %v696 = vld [vmem:[%s182 + $0x1000] sm:$0xff]
                %697 = vst [vmem:[%s183 + $0x800] sm:$0xff] %v696
                %v698 = vld [vmem:[%s182 + $0x1010] sm:$0xff]
                %699 = vst [vmem:[%s183 + $0x808] sm:$0xff] %v698
                %v700 = vld [vmem:[%s182 + $0x1020] sm:$0xff]
                %701 = vst [vmem:[%s183 + $0x810] sm:$0xff] %v700
                %v702 = vld [vmem:[%s182 + $0x1030] sm:$0xff]
                %703 = vst [vmem:[%s183 + $0x818] sm:$0xff] %v702
                %v704 = vld [vmem:[%s182 + $0x1040] sm:$0xff]
                %705 = vst [vmem:[%s183 + $0x820] sm:$0xff] %v704
                %v706 = vld [vmem:[%s182 + $0x1050] sm:$0xff]
                %707 = vst [vmem:[%s183 + $0x828] sm:$0xff] %v706
                %v708 = vld [vmem:[%s182 + $0x1060] sm:$0xff]
                %709 = vst [vmem:[%s183 + $0x830] sm:$0xff] %v708
                %v710 = vld [vmem:[%s182 + $0x1070] sm:$0xff]
                %711 = vst [vmem:[%s183 + $0x838] sm:$0xff] %v710
                %v712 = vld [vmem:[%s182 + $0x1080] sm:$0xff]
                %713 = vst [vmem:[%s183 + $0x840] sm:$0xff] %v712
                %v714 = vld [vmem:[%s182 + $0x1090] sm:$0xff]
                %715 = vst [vmem:[%s183 + $0x848] sm:$0xff] %v714
                %v716 = vld [vmem:[%s182 + $0x10a0] sm:$0xff]
                %717 = vst [vmem:[%s183 + $0x850] sm:$0xff] %v716
                %v718 = vld [vmem:[%s182 + $0x10b0] sm:$0xff]
                %719 = vst [vmem:[%s183 + $0x858] sm:$0xff] %v718
                %v720 = vld [vmem:[%s182 + $0x10c0] sm:$0xff]
                %721 = vst [vmem:[%s183 + $0x860] sm:$0xff] %v720
                %v722 = vld [vmem:[%s182 + $0x10d0] sm:$0xff]
                %723 = vst [vmem:[%s183 + $0x868] sm:$0xff] %v722
                %v724 = vld [vmem:[%s182 + $0x10e0] sm:$0xff]
                %725 = vst [vmem:[%s183 + $0x870] sm:$0xff] %v724
                %v726 = vld [vmem:[%s182 + $0x10f0] sm:$0xff]
                %727 = vst [vmem:[%s183 + $0x878] sm:$0xff] %v726
                %v728 = vld [vmem:[%s182 + $0x1100] sm:$0xff]
                %729 = vst [vmem:[%s183 + $0x880] sm:$0xff] %v728
                %v730 = vld [vmem:[%s182 + $0x1110] sm:$0xff]
                %731 = vst [vmem:[%s183 + $0x888] sm:$0xff] %v730
                %v732 = vld [vmem:[%s182 + $0x1120] sm:$0xff]
                %733 = vst [vmem:[%s183 + $0x890] sm:$0xff] %v732
                %v734 = vld [vmem:[%s182 + $0x1130] sm:$0xff]
                %735 = vst [vmem:[%s183 + $0x898] sm:$0xff] %v734
                %v736 = vld [vmem:[%s182 + $0x1140] sm:$0xff]
                %737 = vst [vmem:[%s183 + $0x8a0] sm:$0xff] %v736
                %v738 = vld [vmem:[%s182 + $0x1150] sm:$0xff]
                %739 = vst [vmem:[%s183 + $0x8a8] sm:$0xff] %v738
                %v740 = vld [vmem:[%s182 + $0x1160] sm:$0xff]
                %741 = vst [vmem:[%s183 + $0x8b0] sm:$0xff] %v740
                %v742 = vld [vmem:[%s182 + $0x1170] sm:$0xff]
                %743 = vst [vmem:[%s183 + $0x8b8] sm:$0xff] %v742
                %v744 = vld [vmem:[%s182 + $0x1180] sm:$0xff]
                %745 = vst [vmem:[%s183 + $0x8c0] sm:$0xff] %v744
                %v746 = vld [vmem:[%s182 + $0x1190] sm:$0xff]
                %747 = vst [vmem:[%s183 + $0x8c8] sm:$0xff] %v746
                %v748 = vld [vmem:[%s182 + $0x11a0] sm:$0xff]
                %749 = vst [vmem:[%s183 + $0x8d0] sm:$0xff] %v748
                %v750 = vld [vmem:[%s182 + $0x11b0] sm:$0xff]
                %751 = vst [vmem:[%s183 + $0x8d8] sm:$0xff] %v750
                %v752 = vld [vmem:[%s182 + $0x11c0] sm:$0xff]
                %753 = vst [vmem:[%s183 + $0x8e0] sm:$0xff] %v752
                %v754 = vld [vmem:[%s182 + $0x11d0] sm:$0xff]
                %755 = vst [vmem:[%s183 + $0x8e8] sm:$0xff] %v754
                %v756 = vld [vmem:[%s182 + $0x11e0] sm:$0xff]
                %757 = vst [vmem:[%s183 + $0x8f0] sm:$0xff] %v756
                %v758 = vld [vmem:[%s182 + $0x11f0] sm:$0xff]
                %759 = vst [vmem:[%s183 + $0x8f8] sm:$0xff] %v758
              $region41: #{block_of_dmt3.1} parent=35 // loop_footer
                %s181 = sadd.s32 1, %s177
              $region42: #{block_of_dmt3.1} parent=35 // loop_footer_branch
                %176 = sbr.rel target = $region38
              $region43: #{block_of_dmt3.1} parent=35 // loop_exit
                _
            $region36: #{block_of_dmt3.1} parent=27 // pred_fallthru
              _
          $region28: #{block_of_dmt3.1} parent=23 // pred_fallthru
            _
          %1348 = vnop
        $region24: #{block_of_dmt3.1} parent=19 // pred_fallthru
          _
        // Predicated region
        $region59: #{block_of_dmt3.1} parent=19 // pred_check
          %p1349 = pneg %p80
        $region60: #{block_of_dmt3.1} parent=19 // pred_check_branch
          %1351 = sbr.rel (%p1349) target = $region62
        $region61: #{block_of_dmt3.1} parent=19 // pred_region
          %p1352 = scmp.lt.s32.totalorder %s13, 1
          %s1353 = scalar_select %p1352, %s13, 1
          %s1354 = scalar_lea.vmem %s2, %s1353
        $region62: #{block_of_dmt3.1} parent=19 // pred_fallthru
          _
        // Predicated region
        $region63: #{block_of_dmt3.1} parent=19 // pred_check
          %p1355 = pneg %p106
        $region64: #{block_of_dmt3.1} parent=19 // pred_check_branch
          %1357 = sbr.rel (%p1355) target = $region66
        $region65: #{block_of_dmt3.1} parent=19 // pred_region
          %p1358 = scmp.lt.s32.totalorder %s13, 1
          %s1359 = scalar_select %p1358, %s13, 1
          %s1360 = scalar_lea.vmem %s3, %s1359
        $region66: #{block_of_dmt3.1} parent=19 // pred_fallthru
          _
      $region20: #{block_of_dmt3.1} parent=5 // pred_fallthru
        _
      %p1361 = scmp.le.s32.totalorder 1, %s13
      %p1362 = scmp.lt.s32.totalorder %s13, 3
      %p1363 = pnand %p1361, %p1362
      %p1364 = pneg %p1363
      // Predicated region
      $region67: #{block_of_dmt3.1} parent=5 // pred_check
        _
      $region68: #{block_of_dmt3.1} parent=5 // pred_check_branch
        %1366 = sbr.rel (%p1363) target = $region70
      $region69: #{block_of_dmt3.1} parent=5 // pred_region
        %s1367 = ssub.s32 %s13, 1
        %s1368 = sand.u32 %s47, 1
        %s1369 = sand.u32 %s47, 1
        %s1370 = smul.addr %s1369, 2304
        %s1371 = scalar_lea.vmem [#allocation3], %s1370
        // Predicated region
        $region71: #{block_of_dmt3.1} parent=69 // pred_check
          %p1372 = pneg %p60
        $region72: #{block_of_dmt3.1} parent=69 // pred_check_branch
          %1374 = sbr.rel (%p1372) target = $region74
        $region73: #{block_of_dmt3.1} parent=69 // pred_region
          _
        $region74: #{block_of_dmt3.1} parent=69 // pred_fallthru
          _
        %p1375 = pneg %p34
        %p1376 = pneg %p31
        %s1377 = sand.u32 %s47, 1
        %s1378 = sand.u32 %s47, 1
        %s1379 = smul.addr %s1378, 2304
        %s1380 = scalar_lea.vmem [#allocation3], %s1379
        %p1381 = pneg %p60
        %p1382 = pneg %p57
        %p1383 = scmp.lt.s32.totalorder %s18, 1
        %s1384 = scalar_select %p1383, %s18, 1
        %s1385 = scalar_lea.vmem %s2, %s1384
        %p1386 = pneg %p86
        %p1387 = pneg %p83
        %p1388 = scmp.lt.s32.totalorder %s18, 1
        %s1389 = scalar_select %p1388, %s18, 1
        %s1390 = scalar_lea.vmem %s3, %s1389
        %p1391 = pneg %p112
        %p1392 = pneg %p109
        %p1393 = pneg %p138
        %p1394 = pneg %p135
        %s1395 = sand.u32 %s125, 1
        %s1396 = scalar_lea.sflag [#allocation5], %s1395
        %s1397 = sand.u32 %s125, 1
        %s1398 = smul.addr %s1397, 128
        %s1399 = scalar_lea.vmem [#allocation4], %s1398
        %p1400 = scmp.lt.s32.totalorder %s18, 1
        %s1401 = scalar_select %p1400, %s18, 1
        %s1402 = scalar_lea.vmem %s2, %s1401
        %p1403 = scmp.lt.s32.totalorder %s18, 1
        %s1404 = scalar_select %p1403, %s18, 1
        %s1405 = scalar_lea.vmem %s3, %s1404
        %v1406 = vld [vmem:[%s0] sm:$0xff]
        %v1407 = vld [vmem:[%s0 + $0x8] sm:$0xff]
        %v1408 = vld [vmem:[%s0 + $0x10] sm:$0xff]
        %v1409 = vld [vmem:[%s0 + $0x18] sm:$0xff]
        %v1410 = vld [vmem:[%s0 + $0x20] sm:$0xff]
        %v1411 = vld [vmem:[%s0 + $0x28] sm:$0xff]
        %v1412 = vld [vmem:[%s0 + $0x30] sm:$0xff]
        %v1413 = vld [vmem:[%s0 + $0x38] sm:$0xff]
        %v1414 = vld [vmem:[%s0 + $0x40] sm:$0xff]
        %v1415 = vld [vmem:[%s0 + $0x48] sm:$0xff]
        %v1416 = vld [vmem:[%s0 + $0x50] sm:$0xff]
        %v1417 = vld [vmem:[%s0 + $0x58] sm:$0xff]
        %v1418 = vld [vmem:[%s0 + $0x60] sm:$0xff]
        %v1419 = vld [vmem:[%s0 + $0x68] sm:$0xff]
        %v1420 = vld [vmem:[%s0 + $0x70] sm:$0xff]
        %v1421 = vld [vmem:[%s0 + $0x78] sm:$0xff]
        %v1422 = vld [vmem:[%s0 + $0x80] sm:$0xff]
        %v1423 = vld [vmem:[%s0 + $0x88] sm:$0xff]
        %v1424 = vld [vmem:[%s0 + $0x90] sm:$0xff]
        %v1425 = vld [vmem:[%s0 + $0x98] sm:$0xff]
        %v1426 = vld [vmem:[%s0 + $0xa0] sm:$0xff]
        %v1427 = vld [vmem:[%s0 + $0xa8] sm:$0xff]
        %v1428 = vld [vmem:[%s0 + $0xb0] sm:$0xff]
        %v1429 = vld [vmem:[%s0 + $0xb8] sm:$0xff]
        %v1430 = vld [vmem:[%s0 + $0xc0] sm:$0xff]
        %v1431 = vld [vmem:[%s0 + $0xc8] sm:$0xff]
        %v1432 = vld [vmem:[%s0 + $0xd0] sm:$0xff]
        %v1433 = vld [vmem:[%s0 + $0xd8] sm:$0xff]
        %v1434 = vld [vmem:[%s0 + $0xe0] sm:$0xff]
        %v1435 = vld [vmem:[%s0 + $0xe8] sm:$0xff]
        %v1436 = vld [vmem:[%s0 + $0xf0] sm:$0xff]
        %v1437 = vld [vmem:[%s0 + $0xf8] sm:$0xff]
        %v1438 = vlaneseq
        %v1439 = vshrl.u32 %v1438, 7
        %v1440 = vadd.s32 %v1439, 8
        %v1441 = vadd.s32 %v1439, 16
        %v1442 = vadd.s32 %v1439, 24
        %v1443 = vadd.s32 %v1439, 32
        %v1444 = vadd.s32 %v1439, 40
        %v1445 = vadd.s32 %v1439, 48
        %v1446 = vadd.s32 %v1439, 56
        %v1447 = vadd.s32 %v1439, 64
        %v1448 = vadd.s32 %v1439, 72
        %v1449 = vadd.s32 %v1439, 80
        %v1450 = vadd.s32 %v1439, 88
        %v1451 = vadd.s32 %v1439, 96
        %v1452 = vadd.s32 %v1439, 104
        %v1453 = vadd.s32 %v1439, 112
        %v1454 = vadd.s32 %v1439, 120
        %v1455 = vand.u32 %v1439, 7
        %v1456 = vand.u32 %v1440, 7
        %v1457 = vand.u32 %v1441, 7
        %v1458 = vand.u32 %v1442, 7
        %v1459 = vand.u32 %v1443, 7
        %v1460 = vand.u32 %v1444, 7
        %v1461 = vand.u32 %v1445, 7
        %v1462 = vand.u32 %v1446, 7
        %v1463 = vand.u32 %v1447, 7
        %v1464 = vand.u32 %v1448, 7
        %v1465 = vand.u32 %v1449, 7
        %v1466 = vand.u32 %v1450, 7
        %v1467 = vand.u32 %v1451, 7
        %v1468 = vand.u32 %v1452, 7
        %v1469 = vand.u32 %v1453, 7
        %v1470 = vand.u32 %v1454, 7
        %v1471 = vshra.s32 %v1439, 3
        %v1472 = vshra.s32 %v1440, 3
        %v1473 = vshra.s32 %v1441, 3
        %v1474 = vshra.s32 %v1442, 3
        %v1475 = vshra.s32 %v1443, 3
        %v1476 = vshra.s32 %v1444, 3
        %v1477 = vshra.s32 %v1445, 3
        %v1478 = vshra.s32 %v1446, 3
        %v1479 = vshra.s32 %v1447, 3
        %v1480 = vshra.s32 %v1448, 3
        %v1481 = vshra.s32 %v1449, 3
        %v1482 = vshra.s32 %v1450, 3
        %v1483 = vshra.s32 %v1451, 3
        %v1484 = vshra.s32 %v1452, 3
        %v1485 = vshra.s32 %v1453, 3
        %v1486 = vshra.s32 %v1454, 3
        %v1487 = vand.u32 %v1471, 7
        %v1488 = vand.u32 %v1472, 7
        %v1489 = vand.u32 %v1473, 7
        %v1490 = vand.u32 %v1474, 7
        %v1491 = vand.u32 %v1475, 7
        %v1492 = vand.u32 %v1476, 7
        %v1493 = vand.u32 %v1477, 7
        %v1494 = vand.u32 %v1478, 7
        %v1495 = vand.u32 %v1479, 7
        %v1496 = vand.u32 %v1480, 7
        %v1497 = vand.u32 %v1481, 7
        %v1498 = vand.u32 %v1482, 7
        %v1499 = vand.u32 %v1483, 7
        %v1500 = vand.u32 %v1484, 7
        %v1501 = vand.u32 %v1485, 7
        %v1502 = vand.u32 %v1486, 7
        %vm1503 = vcmp.ge.s32.totalorder %v1487, 1
        %vm1504 = vcmp.ge.s32.totalorder %v1488, 1
        %vm1505 = vcmp.ge.s32.totalorder %v1489, 1
        %vm1506 = vcmp.ge.s32.totalorder %v1490, 1
        %vm1507 = vcmp.ge.s32.totalorder %v1491, 1
        %vm1508 = vcmp.ge.s32.totalorder %v1492, 1
        %vm1509 = vcmp.ge.s32.totalorder %v1493, 1
        %vm1510 = vcmp.ge.s32.totalorder %v1494, 1
        %vm1511 = vcmp.ge.s32.totalorder %v1495, 1
        %vm1512 = vcmp.ge.s32.totalorder %v1496, 1
        %vm1513 = vcmp.ge.s32.totalorder %v1497, 1
        %vm1514 = vcmp.ge.s32.totalorder %v1498, 1
        %vm1515 = vcmp.ge.s32.totalorder %v1499, 1
        %vm1516 = vcmp.ge.s32.totalorder %v1500, 1
        %vm1517 = vcmp.ge.s32.totalorder %v1501, 1
        %vm1518 = vcmp.ge.s32.totalorder %v1502, 1
        %vm1519 = vcmp.le.s32.totalorder %v1487, 6
        %vm1520 = vcmp.le.s32.totalorder %v1488, 6
        %vm1521 = vcmp.le.s32.totalorder %v1489, 6
        %vm1522 = vcmp.le.s32.totalorder %v1490, 6
        %vm1523 = vcmp.le.s32.totalorder %v1491, 6
        %vm1524 = vcmp.le.s32.totalorder %v1492, 6
        %vm1525 = vcmp.le.s32.totalorder %v1493, 6
        %vm1526 = vcmp.le.s32.totalorder %v1494, 6
        %vm1527 = vcmp.le.s32.totalorder %v1495, 6
        %vm1528 = vcmp.le.s32.totalorder %v1496, 6
        %vm1529 = vcmp.le.s32.totalorder %v1497, 6
        %vm1530 = vcmp.le.s32.totalorder %v1498, 6
        %vm1531 = vcmp.le.s32.totalorder %v1499, 6
        %vm1532 = vcmp.le.s32.totalorder %v1500, 6
        %vm1533 = vcmp.le.s32.totalorder %v1501, 6
        %vm1534 = vcmp.le.s32.totalorder %v1502, 6
        %vm1535 = vcmp.ge.s32.totalorder %v1455, 1
        %vm1536 = vcmp.ge.s32.totalorder %v1456, 1
        %vm1537 = vcmp.ge.s32.totalorder %v1457, 1
        %vm1538 = vcmp.ge.s32.totalorder %v1458, 1
        %vm1539 = vcmp.ge.s32.totalorder %v1459, 1
        %vm1540 = vcmp.ge.s32.totalorder %v1460, 1
        %vm1541 = vcmp.ge.s32.totalorder %v1461, 1
        %vm1542 = vcmp.ge.s32.totalorder %v1462, 1
        %vm1543 = vcmp.ge.s32.totalorder %v1463, 1
        %vm1544 = vcmp.ge.s32.totalorder %v1464, 1
        %vm1545 = vcmp.ge.s32.totalorder %v1465, 1
        %vm1546 = vcmp.ge.s32.totalorder %v1466, 1
        %vm1547 = vcmp.ge.s32.totalorder %v1467, 1
        %vm1548 = vcmp.ge.s32.totalorder %v1468, 1
        %vm1549 = vcmp.ge.s32.totalorder %v1469, 1
        %vm1550 = vcmp.ge.s32.totalorder %v1470, 1
        %vm1551 = vcmp.le.s32.totalorder %v1455, 6
        %vm1552 = vcmp.le.s32.totalorder %v1456, 6
        %vm1553 = vcmp.le.s32.totalorder %v1457, 6
        %vm1554 = vcmp.le.s32.totalorder %v1458, 6
        %vm1555 = vcmp.le.s32.totalorder %v1459, 6
        %vm1556 = vcmp.le.s32.totalorder %v1460, 6
        %vm1557 = vcmp.le.s32.totalorder %v1461, 6
        %vm1558 = vcmp.le.s32.totalorder %v1462, 6
        %vm1559 = vcmp.le.s32.totalorder %v1463, 6
        %vm1560 = vcmp.le.s32.totalorder %v1464, 6
        %vm1561 = vcmp.le.s32.totalorder %v1465, 6
        %vm1562 = vcmp.le.s32.totalorder %v1466, 6
        %vm1563 = vcmp.le.s32.totalorder %v1467, 6
        %vm1564 = vcmp.le.s32.totalorder %v1468, 6
        %vm1565 = vcmp.le.s32.totalorder %v1469, 6
        %vm1566 = vcmp.le.s32.totalorder %v1470, 6
        %v1567 = vld [vmem:[%s1371] sm:$0xff]
        %v1568 = vld [vmem:[%s1371 + $0x8] sm:$0xff]
        %v1569 = vld [vmem:[%s1371 + $0x10] sm:$0xff]
        %v1570 = vld [vmem:[%s1371 + $0x18] sm:$0xff]
        %v1571 = vld [vmem:[%s1371 + $0x20] sm:$0xff]
        %v1572 = vld [vmem:[%s1371 + $0x28] sm:$0xff]
        %v1573 = vld [vmem:[%s1371 + $0x30] sm:$0xff]
        %v1574 = vld [vmem:[%s1371 + $0x38] sm:$0xff]
        %v1575 = vld [vmem:[%s1371 + $0x40] sm:$0xff]
        %v1576 = vld [vmem:[%s1371 + $0x48] sm:$0xff]
        %v1577 = vld [vmem:[%s1371 + $0x50] sm:$0xff]
        %v1578 = vld [vmem:[%s1371 + $0x58] sm:$0xff]
        %v1579 = vld [vmem:[%s1371 + $0x60] sm:$0xff]
        %v1580 = vld [vmem:[%s1371 + $0x68] sm:$0xff]
        %v1581 = vld [vmem:[%s1371 + $0x70] sm:$0xff]
        %v1582 = vld [vmem:[%s1371 + $0x78] sm:$0xff]
        %v1583 = vld [vmem:[%s1371 + $0x80] sm:$0xff]
        %v1584 = vld [vmem:[%s1371 + $0x88] sm:$0xff]
        %v1585 = vld [vmem:[%s1371 + $0x90] sm:$0xff]
        %v1586 = vld [vmem:[%s1371 + $0x98] sm:$0xff]
        %v1587 = vld [vmem:[%s1371 + $0xa0] sm:$0xff]
        %v1588 = vld [vmem:[%s1371 + $0xa8] sm:$0xff]
        %v1589 = vld [vmem:[%s1371 + $0xb0] sm:$0xff]
        %v1590 = vld [vmem:[%s1371 + $0xb8] sm:$0xff]
        %v1591 = vld [vmem:[%s1371 + $0xc0] sm:$0xff]
        %v1592 = vld [vmem:[%s1371 + $0xc8] sm:$0xff]
        %v1593 = vld [vmem:[%s1371 + $0xd0] sm:$0xff]
        %v1594 = vld [vmem:[%s1371 + $0xd8] sm:$0xff]
        %v1595 = vld [vmem:[%s1371 + $0xe0] sm:$0xff]
        %v1596 = vld [vmem:[%s1371 + $0xe8] sm:$0xff]
        %v1597 = vld [vmem:[%s1371 + $0xf0] sm:$0xff]
        %v1598 = vld [vmem:[%s1371 + $0xf8] sm:$0xff]
        %1599 = vmatprep.subr.mxu0 0.0
        %1600 = vmatpush1.msra.mxu0 %v1567
        %1601 = vmatprep.subr.mxu0 0.0
        %1602 = vmatpush1.msra.mxu0 %v1568
        %1603 = vmatprep.subr.mxu0 0.0
        %1604 = vmatpush1.msra.mxu0 %v1569
        %1605 = vmatprep.subr.mxu0 0.0
        %1606 = vmatpush1.msra.mxu0 %v1570
        %1607 = vmatprep.subr.mxu0 0.0
        %1608 = vmatpush1.msra.mxu0 %v1571
        %1609 = vmatprep.subr.mxu0 0.0
        %1610 = vmatpush1.msra.mxu0 %v1572
        %1611 = vmatprep.subr.mxu0 0.0
        %1612 = vmatpush1.msra.mxu0 %v1573
        %1613 = vmatprep.subr.mxu0 0.0
        %1614 = vmatpush1.msra.mxu0 %v1574
        %1615 = vmatprep.subr.mxu0 0.0
        %1616 = vmatpush1.msra.mxu0 %v1575
        %1617 = vmatprep.subr.mxu0 0.0
        %1618 = vmatpush1.msra.mxu0 %v1576
        %1619 = vmatprep.subr.mxu0 0.0
        %1620 = vmatpush1.msra.mxu0 %v1577
        %1621 = vmatprep.subr.mxu0 0.0
        %1622 = vmatpush1.msra.mxu0 %v1578
        %1623 = vmatprep.subr.mxu0 0.0
        %1624 = vmatpush1.msra.mxu0 %v1579
        %1625 = vmatprep.subr.mxu0 0.0
        %1626 = vmatpush1.msra.mxu0 %v1580
        %1627 = vmatprep.subr.mxu0 0.0
        %1628 = vmatpush1.msra.mxu0 %v1581
        %1629 = vmatprep.subr.mxu0 0.0
        %1630 = vmatpush1.msra.mxu0 %v1582
        %1631 = vmatprep.subr.mxu0 0.0
        %1632 = vmatpush1.msra.mxu0 %v1583
        %1633 = vmatprep.subr.mxu0 0.0
        %1634 = vmatpush1.msra.mxu0 %v1584
        %1635 = vmatprep.subr.mxu0 0.0
        %1636 = vmatpush1.msra.mxu0 %v1585
        %1637 = vmatprep.subr.mxu0 0.0
        %1638 = vmatpush1.msra.mxu0 %v1586
        %1639 = vmatprep.subr.mxu0 0.0
        %1640 = vmatpush1.msra.mxu0 %v1587
        %1641 = vmatprep.subr.mxu0 0.0
        %1642 = vmatpush1.msra.mxu0 %v1588
        %1643 = vmatprep.subr.mxu0 0.0
        %1644 = vmatpush1.msra.mxu0 %v1589
        %1645 = vmatprep.subr.mxu0 0.0
        %1646 = vmatpush1.msra.mxu0 %v1590
        %1647 = vmatprep.subr.mxu0 0.0
        %1648 = vmatpush1.msra.mxu0 %v1591
        %1649 = vmatprep.subr.mxu0 0.0
        %1650 = vmatpush1.msra.mxu0 %v1592
        %1651 = vmatprep.subr.mxu0 0.0
        %1652 = vmatpush1.msra.mxu0 %v1593
        %1653 = vmatprep.subr.mxu0 0.0
        %1654 = vmatpush1.msra.mxu0 %v1594
        %1655 = vmatprep.subr.mxu0 0.0
        %1656 = vmatpush1.msra.mxu0 %v1595
        %1657 = vmatprep.subr.mxu0 0.0
        %1658 = vmatpush1.msra.mxu0 %v1596
        %1659 = vmatprep.subr.mxu0 0.0
        %1660 = vmatpush1.msra.mxu0 %v1597
        %1661 = vmatprep.subr.mxu0 0.0
        %1662 = vmatpush1.msra.mxu0 %v1598
        %1663 = vmatprep.mubr.f32.mxu0 %v1407
        %1664 = vmatmul.mubr.f32.gmra.mrb[0].mxu0 %v1406
        %v1665 = vpop.f32.mrb[0].mxu0
        %v1666 = vadd.f32 0.0, %v1665
        %v1667 = vpop.f32.mrb[0].mxu0
        %1668 = vmatprep.mubr.f32.mxu0 %v1409
        %1669 = vmatmul.mubr.f32.gmra.mrb[0].mxu0 %v1408
        %v1670 = vpop.f32.mrb[0].mxu0
        %v1671 = vadd.f32 0.0, %v1670
        %v1672 = vpop.f32.mrb[0].mxu0
        %1673 = vmatprep.mubr.f32.mxu0 %v1411
        %1674 = vmatmul.mubr.f32.gmra.mrb[0].mxu0 %v1410
        %v1675 = vpop.f32.mrb[0].mxu0
        %v1676 = vadd.f32 0.0, %v1675
        %v1677 = vpop.f32.mrb[0].mxu0
        %1678 = vmatprep.mubr.f32.mxu0 %v1413
        %1679 = vmatmul.mubr.f32.gmra.mrb[0].mxu0 %v1412
        %v1680 = vpop.f32.mrb[0].mxu0
        %v1681 = vadd.f32 0.0, %v1680
        %v1682 = vpop.f32.mrb[0].mxu0
        %1683 = vmatprep.mubr.f32.mxu0 %v1415
        %1684 = vmatmul.mubr.f32.gmra.mrb[0].mxu0 %v1414
        %v1685 = vpop.f32.mrb[0].mxu0
        %v1686 = vadd.f32 0.0, %v1685
        %v1687 = vpop.f32.mrb[0].mxu0
        %1688 = vmatprep.mubr.f32.mxu0 %v1417
        %1689 = vmatmul.mubr.f32.gmra.mrb[0].mxu0 %v1416
        %v1690 = vpop.f32.mrb[0].mxu0
        %v1691 = vadd.f32 0.0, %v1690
        %v1692 = vpop.f32.mrb[0].mxu0
        %1693 = vmatprep.mubr.f32.mxu0 %v1419
        %1694 = vmatmul.mubr.f32.gmra.mrb[0].mxu0 %v1418
        %v1695 = vpop.f32.mrb[0].mxu0
        %v1696 = vadd.f32 0.0, %v1695
        %v1697 = vpop.f32.mrb[0].mxu0
        %1698 = vmatprep.mubr.f32.mxu0 %v1421
        %1699 = vmatmul.mubr.f32.gmra.mrb[0].mxu0 %v1420
        %v1700 = vpop.f32.mrb[0].mxu0
        %v1701 = vadd.f32 0.0, %v1700
        %v1702 = vpop.f32.mrb[0].mxu0
        %1703 = vmatprep.mubr.f32.mxu0 %v1423
        %1704 = vmatmul.mubr.f32.gmra.mrb[0].mxu0 %v1422
        %v1705 = vpop.f32.mrb[0].mxu0
        %v1706 = vadd.f32 0.0, %v1705
        %v1707 = vpop.f32.mrb[0].mxu0
        %1708 = vmatprep.mubr.f32.mxu0 %v1425
        %1709 = vmatmul.mubr.f32.gmra.mrb[0].mxu0 %v1424
        %v1710 = vpop.f32.mrb[0].mxu0
        %v1711 = vadd.f32 0.0, %v1710
        %v1712 = vpop.f32.mrb[0].mxu0
        %1713 = vmatprep.mubr.f32.mxu0 %v1427
        %1714 = vmatmul.mubr.f32.gmra.mrb[0].mxu0 %v1426
        %v1715 = vpop.f32.mrb[0].mxu0
        %v1716 = vadd.f32 0.0, %v1715
        %v1717 = vpop.f32.mrb[0].mxu0
        %1718 = vmatprep.mubr.f32.mxu0 %v1429
        %1719 = vmatmul.mubr.f32.gmra.mrb[0].mxu0 %v1428
        %v1720 = vpop.f32.mrb[0].mxu0
        %v1721 = vadd.f32 0.0, %v1720
        %v1722 = vpop.f32.mrb[0].mxu0
        %1723 = vmatprep.mubr.f32.mxu0 %v1431
        %1724 = vmatmul.mubr.f32.gmra.mrb[0].mxu0 %v1430
        %v1725 = vpop.f32.mrb[0].mxu0
        %v1726 = vadd.f32 0.0, %v1725
        %v1727 = vpop.f32.mrb[0].mxu0
        %1728 = vmatprep.mubr.f32.mxu0 %v1433
        %1729 = vmatmul.mubr.f32.gmra.mrb[0].mxu0 %v1432
        %v1730 = vpop.f32.mrb[0].mxu0
        %v1731 = vadd.f32 0.0, %v1730
        %v1732 = vpop.f32.mrb[0].mxu0
        %1733 = vmatprep.mubr.f32.mxu0 %v1435
        %1734 = vmatmul.mubr.f32.gmra.mrb[0].mxu0 %v1434
        %v1735 = vpop.f32.mrb[0].mxu0
        %v1736 = vadd.f32 0.0, %v1735
        %v1737 = vpop.f32.mrb[0].mxu0
        %1738 = vmatprep.mubr.f32.mxu0 %v1437
        %1739 = vmatmul.mubr.f32.gmra.mrb[0].mxu0 %v1436
        %v1740 = vpop.f32.mrb[0].mxu0
        %v1741 = vadd.f32 0.0, %v1740
        %v1742 = vpop.f32.mrb[0].mxu0
        %1743 = vdwg.mxu0
        %v1744 = vrot.slane %v1666, 7
        %v1745 = vrot.slane %v1671, 7
        %v1746 = vrot.slane %v1676, 7
        %v1747 = vrot.slane %v1681, 7
        %v1748 = vrot.slane %v1686, 7
        %v1749 = vrot.slane %v1691, 7
        %v1750 = vrot.slane %v1696, 7
        %v1751 = vrot.slane %v1701, 7
        %v1752 = vrot.slane %v1706, 7
        %v1753 = vrot.slane %v1711, 7
        %v1754 = vrot.slane %v1716, 7
        %v1755 = vrot.slane %v1721, 7
        %v1756 = vrot.slane %v1726, 7
        %v1757 = vrot.slane %v1731, 7
        %v1758 = vrot.slane %v1736, 7
        %v1759 = vrot.slane %v1741, 7
        %vm1760 = vcmp.lt.s32.totalorder %v1439, 1
        %v1761 = vsel %vm1760, %v1758, %v1759
        %v1762 = vsel %vm1760, %v1757, %v1758
        %v1763 = vsel %vm1760, %v1756, %v1757
        %v1764 = vsel %vm1760, %v1755, %v1756
        %v1765 = vsel %vm1760, %v1754, %v1755
        %v1766 = vsel %vm1760, %v1753, %v1754
        %v1767 = vsel %vm1760, %v1752, %v1753
        %v1768 = vsel %vm1760, %v1751, %v1752
        %v1769 = vsel %vm1760, %v1750, %v1751
        %v1770 = vsel %vm1760, %v1749, %v1750
        %v1771 = vsel %vm1760, %v1748, %v1749
        %v1772 = vsel %vm1760, %v1747, %v1748
        %v1773 = vsel %vm1760, %v1746, %v1747
        %v1774 = vsel %vm1760, %v1745, %v1746
        %v1775 = vsel %vm1760, %v1744, %v1745
        %v1776 = vsel %vm1760, %v1759, %v1744
        %vm1777 = vmand %vm1503, %vm1535
        %vm1778 = vmand %vm1504, %vm1536
        %vm1779 = vmand %vm1505, %vm1537
        %vm1780 = vmand %vm1506, %vm1538
        %vm1781 = vmand %vm1507, %vm1539
        %vm1782 = vmand %vm1508, %vm1540
        %vm1783 = vmand %vm1509, %vm1541
        %vm1784 = vmand %vm1510, %vm1542
        %vm1785 = vmand %vm1511, %vm1543
        %vm1786 = vmand %vm1512, %vm1544
        %vm1787 = vmand %vm1513, %vm1545
        %vm1788 = vmand %vm1514, %vm1546
        %vm1789 = vmand %vm1515, %vm1547
        %vm1790 = vmand %vm1516, %vm1548
        %vm1791 = vmand %vm1517, %vm1549
        %vm1792 = vmand %vm1518, %vm1550
        %v1793 = vsel %vm1777, 1, 0
        %v1794 = vsel %vm1778, 1, 0
        %v1795 = vsel %vm1779, 1, 0
        %v1796 = vsel %vm1780, 1, 0
        %v1797 = vsel %vm1781, 1, 0
        %v1798 = vsel %vm1782, 1, 0
        %v1799 = vsel %vm1783, 1, 0
        %v1800 = vsel %vm1784, 1, 0
        %v1801 = vsel %vm1785, 1, 0
        %v1802 = vsel %vm1786, 1, 0
        %v1803 = vsel %vm1787, 1, 0
        %v1804 = vsel %vm1788, 1, 0
        %v1805 = vsel %vm1789, 1, 0
        %v1806 = vsel %vm1790, 1, 0
        %v1807 = vsel %vm1791, 1, 0
        %v1808 = vsel %vm1792, 1, 0
        %vm1809 = vcmp.eq.s32.totalorder %v1793, 1
        %vm1810 = vcmp.eq.s32.totalorder %v1794, 1
        %vm1811 = vcmp.eq.s32.totalorder %v1795, 1
        %vm1812 = vcmp.eq.s32.totalorder %v1796, 1
        %vm1813 = vcmp.eq.s32.totalorder %v1797, 1
        %vm1814 = vcmp.eq.s32.totalorder %v1798, 1
        %vm1815 = vcmp.eq.s32.totalorder %v1799, 1
        %vm1816 = vcmp.eq.s32.totalorder %v1800, 1
        %vm1817 = vcmp.eq.s32.totalorder %v1801, 1
        %vm1818 = vcmp.eq.s32.totalorder %v1802, 1
        %vm1819 = vcmp.eq.s32.totalorder %v1803, 1
        %vm1820 = vcmp.eq.s32.totalorder %v1804, 1
        %vm1821 = vcmp.eq.s32.totalorder %v1805, 1
        %vm1822 = vcmp.eq.s32.totalorder %v1806, 1
        %vm1823 = vcmp.eq.s32.totalorder %v1807, 1
        %vm1824 = vcmp.eq.s32.totalorder %v1808, 1
        %v1825 = vsel %vm1809, %v1761, 0.0
        %v1826 = vsel %vm1810, %v1776, 0.0
        %v1827 = vsel %vm1811, %v1775, 0.0
        %v1828 = vsel %vm1812, %v1774, 0.0
        %v1829 = vsel %vm1813, %v1773, 0.0
        %v1830 = vsel %vm1814, %v1772, 0.0
        %v1831 = vsel %vm1815, %v1771, 0.0
        %v1832 = vsel %vm1816, %v1770, 0.0
        %v1833 = vsel %vm1817, %v1769, 0.0
        %v1834 = vsel %vm1818, %v1768, 0.0
        %v1835 = vsel %vm1819, %v1767, 0.0
        %v1836 = vsel %vm1820, %v1766, 0.0
        %v1837 = vsel %vm1821, %v1765, 0.0
        %v1838 = vsel %vm1822, %v1764, 0.0
        %v1839 = vsel %vm1823, %v1763, 0.0
        %v1840 = vsel %vm1824, %v1762, 0.0
        %1841 = vst [vmem:[#allocation2] sm:$0xff] %v1825
        %1842 = vst [vmem:[#allocation2 + $0x8] sm:$0xff] %v1826
        %1843 = vst [vmem:[#allocation2 + $0x10] sm:$0xff] %v1827
        %1844 = vst [vmem:[#allocation2 + $0x18] sm:$0xff] %v1828
        %1845 = vst [vmem:[#allocation2 + $0x20] sm:$0xff] %v1829
        %1846 = vst [vmem:[#allocation2 + $0x28] sm:$0xff] %v1830
        %1847 = vst [vmem:[#allocation2 + $0x30] sm:$0xff] %v1831
        %1848 = vst [vmem:[#allocation2 + $0x38] sm:$0xff] %v1832
        %1849 = vst [vmem:[#allocation2 + $0x40] sm:$0xff] %v1833
        %1850 = vst [vmem:[#allocation2 + $0x48] sm:$0xff] %v1834
        %1851 = vst [vmem:[#allocation2 + $0x50] sm:$0xff] %v1835
        %1852 = vst [vmem:[#allocation2 + $0x58] sm:$0xff] %v1836
        %1853 = vst [vmem:[#allocation2 + $0x60] sm:$0xff] %v1837
        %1854 = vst [vmem:[#allocation2 + $0x68] sm:$0xff] %v1838
        %1855 = vst [vmem:[#allocation2 + $0x70] sm:$0xff] %v1839
        %1856 = vst [vmem:[#allocation2 + $0x78] sm:$0xff] %v1840
        %s1857 = scalar_lea.vmem %s1371, 256 [#allocation3]
        %v1858 = vld [vmem:[%s1857] sm:$0xff]
        %v1859 = vld [vmem:[%s1857 + $0x8] sm:$0xff]
        %v1860 = vld [vmem:[%s1857 + $0x10] sm:$0xff]
        %v1861 = vld [vmem:[%s1857 + $0x18] sm:$0xff]
        %v1862 = vld [vmem:[%s1857 + $0x20] sm:$0xff]
        %v1863 = vld [vmem:[%s1857 + $0x28] sm:$0xff]
        %v1864 = vld [vmem:[%s1857 + $0x30] sm:$0xff]
        %v1865 = vld [vmem:[%s1857 + $0x38] sm:$0xff]
        %v1866 = vld [vmem:[%s1857 + $0x40] sm:$0xff]
        %v1867 = vld [vmem:[%s1857 + $0x48] sm:$0xff]
        %v1868 = vld [vmem:[%s1857 + $0x50] sm:$0xff]
        %v1869 = vld [vmem:[%s1857 + $0x58] sm:$0xff]
        %v1870 = vld [vmem:[%s1857 + $0x60] sm:$0xff]
        %v1871 = vld [vmem:[%s1857 + $0x68] sm:$0xff]
        %v1872 = vld [vmem:[%s1857 + $0x70] sm:$0xff]
        %v1873 = vld [vmem:[%s1857 + $0x78] sm:$0xff]
        %v1874 = vld [vmem:[%s1857 + $0x80] sm:$0xff]
        %v1875 = vld [vmem:[%s1857 + $0x88] sm:$0xff]
        %v1876 = vld [vmem:[%s1857 + $0x90] sm:$0xff]
        %v1877 = vld [vmem:[%s1857 + $0x98] sm:$0xff]
        %v1878 = vld [vmem:[%s1857 + $0xa0] sm:$0xff]
        %v1879 = vld [vmem:[%s1857 + $0xa8] sm:$0xff]
        %v1880 = vld [vmem:[%s1857 + $0xb0] sm:$0xff]
        %v1881 = vld [vmem:[%s1857 + $0xb8] sm:$0xff]
        %v1882 = vld [vmem:[%s1857 + $0xc0] sm:$0xff]
        %v1883 = vld [vmem:[%s1857 + $0xc8] sm:$0xff]
        %v1884 = vld [vmem:[%s1857 + $0xd0] sm:$0xff]
        %v1885 = vld [vmem:[%s1857 + $0xd8] sm:$0xff]
        %v1886 = vld [vmem:[%s1857 + $0xe0] sm:$0xff]
        %v1887 = vld [vmem:[%s1857 + $0xe8] sm:$0xff]
        %v1888 = vld [vmem:[%s1857 + $0xf0] sm:$0xff]
        %v1889 = vld [vmem:[%s1857 + $0xf8] sm:$0xff]
        %1890 = vmatprep.subr.mxu0 0.0
        %1891 = vmatpush1.msra.mxu0 %v1858
        %1892 = vmatprep.subr.mxu0 0.0
        %1893 = vmatpush1.msra.mxu0 %v1859
        %1894 = vmatprep.subr.mxu0 0.0
        %1895 = vmatpush1.msra.mxu0 %v1860
        %1896 = vmatprep.subr.mxu0 0.0
        %1897 = vmatpush1.msra.mxu0 %v1861
        %1898 = vmatprep.subr.mxu0 0.0
        %1899 = vmatpush1.msra.mxu0 %v1862
        %1900 = vmatprep.subr.mxu0 0.0
        %1901 = vmatpush1.msra.mxu0 %v1863
        %1902 = vmatprep.subr.mxu0 0.0
        %1903 = vmatpush1.msra.mxu0 %v1864
        %1904 = vmatprep.subr.mxu0 0.0
        %1905 = vmatpush1.msra.mxu0 %v1865
        %1906 = vmatprep.subr.mxu0 0.0
        %1907 = vmatpush1.msra.mxu0 %v1866
        %1908 = vmatprep.subr.mxu0 0.0
        %1909 = vmatpush1.msra.mxu0 %v1867
        %1910 = vmatprep.subr.mxu0 0.0
        %1911 = vmatpush1.msra.mxu0 %v1868
        %1912 = vmatprep.subr.mxu0 0.0
        %1913 = vmatpush1.msra.mxu0 %v1869
        %1914 = vmatprep.subr.mxu0 0.0
        %1915 = vmatpush1.msra.mxu0 %v1870
        %1916 = vmatprep.subr.mxu0 0.0
        %1917 = vmatpush1.msra.mxu0 %v1871
        %1918 = vmatprep.subr.mxu0 0.0
        %1919 = vmatpush1.msra.mxu0 %v1872
        %1920 = vmatprep.subr.mxu0 0.0
        %1921 = vmatpush1.msra.mxu0 %v1873
        %1922 = vmatprep.subr.mxu0 0.0
        %1923 = vmatpush1.msra.mxu0 %v1874
        %1924 = vmatprep.subr.mxu0 0.0
        %1925 = vmatpush1.msra.mxu0 %v1875
        %1926 = vmatprep.subr.mxu0 0.0
        %1927 = vmatpush1.msra.mxu0 %v1876
        %1928 = vmatprep.subr.mxu0 0.0
        %1929 = vmatpush1.msra.mxu0 %v1877
        %1930 = vmatprep.subr.mxu0 0.0
        %1931 = vmatpush1.msra.mxu0 %v1878
        %1932 = vmatprep.subr.mxu0 0.0
        %1933 = vmatpush1.msra.mxu0 %v1879
        %1934 = vmatprep.subr.mxu0 0.0
        %1935 = vmatpush1.msra.mxu0 %v1880
        %1936 = vmatprep.subr.mxu0 0.0
        %1937 = vmatpush1.msra.mxu0 %v1881
        %1938 = vmatprep.subr.mxu0 0.0
        %1939 = vmatpush1.msra.mxu0 %v1882
        %1940 = vmatprep.subr.mxu0 0.0
        %1941 = vmatpush1.msra.mxu0 %v1883
        %1942 = vmatprep.subr.mxu0 0.0
        %1943 = vmatpush1.msra.mxu0 %v1884
        %1944 = vmatprep.subr.mxu0 0.0
        %1945 = vmatpush1.msra.mxu0 %v1885
        %1946 = vmatprep.subr.mxu0 0.0
        %1947 = vmatpush1.msra.mxu0 %v1886
        %1948 = vmatprep.subr.mxu0 0.0
        %1949 = vmatpush1.msra.mxu0 %v1887
        %1950 = vmatprep.subr.mxu0 0.0
        %1951 = vmatpush1.msra.mxu0 %v1888
        %1952 = vmatprep.subr.mxu0 0.0
        %1953 = vmatpush1.msra.mxu0 %v1889
        %1954 = vmatprep.mubr.f32.mxu0 %v1407
        %1955 = vmatmul.mubr.f32.gmra.mrb[0].mxu0 %v1406
        %v1956 = vpop.f32.mrb[0].mxu0
        %v1957 = vadd.f32 0.0, %v1956
        %v1958 = vpop.f32.mrb[0].mxu0
        %1959 = vmatprep.mubr.f32.mxu0 %v1409
        %1960 = vmatmul.mubr.f32.gmra.mrb[0].mxu0 %v1408
        %v1961 = vpop.f32.mrb[0].mxu0
        %v1962 = vadd.f32 0.0, %v1961
        %v1963 = vpop.f32.mrb[0].mxu0
        %1964 = vmatprep.mubr.f32.mxu0 %v1411
        %1965 = vmatmul.mubr.f32.gmra.mrb[0].mxu0 %v1410
        %v1966 = vpop.f32.mrb[0].mxu0
        %v1967 = vadd.f32 0.0, %v1966
        %v1968 = vpop.f32.mrb[0].mxu0
        %1969 = vmatprep.mubr.f32.mxu0 %v1413
        %1970 = vmatmul.mubr.f32.gmra.mrb[0].mxu0 %v1412
        %v1971 = vpop.f32.mrb[0].mxu0
        %v1972 = vadd.f32 0.0, %v1971
        %v1973 = vpop.f32.mrb[0].mxu0
        %1974 = vmatprep.mubr.f32.mxu0 %v1415
        %1975 = vmatmul.mubr.f32.gmra.mrb[0].mxu0 %v1414
        %v1976 = vpop.f32.mrb[0].mxu0
        %v1977 = vadd.f32 0.0, %v1976
        %v1978 = vpop.f32.mrb[0].mxu0
        %1979 = vmatprep.mubr.f32.mxu0 %v1417
        %1980 = vmatmul.mubr.f32.gmra.mrb[0].mxu0 %v1416
        %v1981 = vpop.f32.mrb[0].mxu0
        %v1982 = vadd.f32 0.0, %v1981
        %v1983 = vpop.f32.mrb[0].mxu0
        %1984 = vmatprep.mubr.f32.mxu0 %v1419
        %1985 = vmatmul.mubr.f32.gmra.mrb[0].mxu0 %v1418
        %v1986 = vpop.f32.mrb[0].mxu0
        %v1987 = vadd.f32 0.0, %v1986
        %v1988 = vpop.f32.mrb[0].mxu0
        %1989 = vmatprep.mubr.f32.mxu0 %v1421
        %1990 = vmatmul.mubr.f32.gmra.mrb[0].mxu0 %v1420
        %v1991 = vpop.f32.mrb[0].mxu0
        %v1992 = vadd.f32 0.0, %v1991
        %v1993 = vpop.f32.mrb[0].mxu0
        %1994 = vmatprep.mubr.f32.mxu0 %v1423
        %1995 = vmatmul.mubr.f32.gmra.mrb[0].mxu0 %v1422
        %v1996 = vpop.f32.mrb[0].mxu0
        %v1997 = vadd.f32 0.0, %v1996
        %v1998 = vpop.f32.mrb[0].mxu0
        %1999 = vmatprep.mubr.f32.mxu0 %v1425
        %2000 = vmatmul.mubr.f32.gmra.mrb[0].mxu0 %v1424
        %v2001 = vpop.f32.mrb[0].mxu0
        %v2002 = vadd.f32 0.0, %v2001
        %v2003 = vpop.f32.mrb[0].mxu0
        %2004 = vmatprep.mubr.f32.mxu0 %v1427
        %2005 = vmatmul.mubr.f32.gmra.mrb[0].mxu0 %v1426
        %v2006 = vpop.f32.mrb[0].mxu0
        %v2007 = vadd.f32 0.0, %v2006
        %v2008 = vpop.f32.mrb[0].mxu0
        %2009 = vmatprep.mubr.f32.mxu0 %v1429
        %2010 = vmatmul.mubr.f32.gmra.mrb[0].mxu0 %v1428
        %v2011 = vpop.f32.mrb[0].mxu0
        %v2012 = vadd.f32 0.0, %v2011
        %v2013 = vpop.f32.mrb[0].mxu0
        %2014 = vmatprep.mubr.f32.mxu0 %v1431
        %2015 = vmatmul.mubr.f32.gmra.mrb[0].mxu0 %v1430
        %v2016 = vpop.f32.mrb[0].mxu0
        %v2017 = vadd.f32 0.0, %v2016
        %v2018 = vpop.f32.mrb[0].mxu0
        %2019 = vmatprep.mubr.f32.mxu0 %v1433
        %2020 = vmatmul.mubr.f32.gmra.mrb[0].mxu0 %v1432
        %v2021 = vpop.f32.mrb[0].mxu0
        %v2022 = vadd.f32 0.0, %v2021
        %v2023 = vpop.f32.mrb[0].mxu0
        %2024 = vmatprep.mubr.f32.mxu0 %v1435
        %2025 = vmatmul.mubr.f32.gmra.mrb[0].mxu0 %v1434
        %v2026 = vpop.f32.mrb[0].mxu0
        %v2027 = vadd.f32 0.0, %v2026
        %v2028 = vpop.f32.mrb[0].mxu0
        %2029 = vmatprep.mubr.f32.mxu0 %v1437
        %2030 = vmatmul.mubr.f32.gmra.mrb[0].mxu0 %v1436
        %v2031 = vpop.f32.mrb[0].mxu0
        %v2032 = vadd.f32 0.0, %v2031
        %v2033 = vpop.f32.mrb[0].mxu0
        %2034 = vdwg.mxu0
        %v2035 = vsel %vm1503, 1, 0
        %v2036 = vsel %vm1504, 1, 0
        %v2037 = vsel %vm1505, 1, 0
        %v2038 = vsel %vm1506, 1, 0
        %v2039 = vsel %vm1507, 1, 0
        %v2040 = vsel %vm1508, 1, 0
        %v2041 = vsel %vm1509, 1, 0
        %v2042 = vsel %vm1510, 1, 0
        %v2043 = vsel %vm1511, 1, 0
        %v2044 = vsel %vm1512, 1, 0
        %v2045 = vsel %vm1513, 1, 0
        %v2046 = vsel %vm1514, 1, 0
        %v2047 = vsel %vm1515, 1, 0
        %v2048 = vsel %vm1516, 1, 0
        %v2049 = vsel %vm1517, 1, 0
        %v2050 = vsel %vm1518, 1, 0
        %vm2051 = vcmp.eq.s32.totalorder %v2035, 1
        %vm2052 = vcmp.eq.s32.totalorder %v2036, 1
        %vm2053 = vcmp.eq.s32.totalorder %v2037, 1
        %vm2054 = vcmp.eq.s32.totalorder %v2038, 1
        %vm2055 = vcmp.eq.s32.totalorder %v2039, 1
        %vm2056 = vcmp.eq.s32.totalorder %v2040, 1
        %vm2057 = vcmp.eq.s32.totalorder %v2041, 1
        %vm2058 = vcmp.eq.s32.totalorder %v2042, 1
        %vm2059 = vcmp.eq.s32.totalorder %v2043, 1
        %vm2060 = vcmp.eq.s32.totalorder %v2044, 1
        %vm2061 = vcmp.eq.s32.totalorder %v2045, 1
        %vm2062 = vcmp.eq.s32.totalorder %v2046, 1
        %vm2063 = vcmp.eq.s32.totalorder %v2047, 1
        %vm2064 = vcmp.eq.s32.totalorder %v2048, 1
        %vm2065 = vcmp.eq.s32.totalorder %v2049, 1
        %vm2066 = vcmp.eq.s32.totalorder %v2050, 1
        %v2067 = vsel %vm2051, %v2032, 0.0
        %v2068 = vsel %vm2052, %v1957, 0.0
        %v2069 = vsel %vm2053, %v1962, 0.0
        %v2070 = vsel %vm2054, %v1967, 0.0
        %v2071 = vsel %vm2055, %v1972, 0.0
        %v2072 = vsel %vm2056, %v1977, 0.0
        %v2073 = vsel %vm2057, %v1982, 0.0
        %v2074 = vsel %vm2058, %v1987, 0.0
        %v2075 = vsel %vm2059, %v1992, 0.0
        %v2076 = vsel %vm2060, %v1997, 0.0
        %v2077 = vsel %vm2061, %v2002, 0.0
        %v2078 = vsel %vm2062, %v2007, 0.0
        %v2079 = vsel %vm2063, %v2012, 0.0
        %v2080 = vsel %vm2064, %v2017, 0.0
        %v2081 = vsel %vm2065, %v2022, 0.0
        %v2082 = vsel %vm2066, %v2027, 0.0
        %v2083 = vld [vmem:[#allocation2] sm:$0xff]
        %v2084 = vld [vmem:[#allocation2 + $0x8] sm:$0xff]
        %v2085 = vld [vmem:[#allocation2 + $0x10] sm:$0xff]
        %v2086 = vld [vmem:[#allocation2 + $0x18] sm:$0xff]
        %v2087 = vld [vmem:[#allocation2 + $0x20] sm:$0xff]
        %v2088 = vld [vmem:[#allocation2 + $0x28] sm:$0xff]
        %v2089 = vld [vmem:[#allocation2 + $0x30] sm:$0xff]
        %v2090 = vld [vmem:[#allocation2 + $0x38] sm:$0xff]
        %v2091 = vld [vmem:[#allocation2 + $0x40] sm:$0xff]
        %v2092 = vld [vmem:[#allocation2 + $0x48] sm:$0xff]
        %v2093 = vld [vmem:[#allocation2 + $0x50] sm:$0xff]
        %v2094 = vld [vmem:[#allocation2 + $0x58] sm:$0xff]
        %v2095 = vld [vmem:[#allocation2 + $0x60] sm:$0xff]
        %v2096 = vld [vmem:[#allocation2 + $0x68] sm:$0xff]
        %v2097 = vld [vmem:[#allocation2 + $0x70] sm:$0xff]
        %v2098 = vld [vmem:[#allocation2 + $0x78] sm:$0xff]
        %v2099 = vadd.f32 %v2083, %v2067
        %v2100 = vadd.f32 %v2084, %v2068
        %v2101 = vadd.f32 %v2085, %v2069
        %v2102 = vadd.f32 %v2086, %v2070
        %v2103 = vadd.f32 %v2087, %v2071
        %v2104 = vadd.f32 %v2088, %v2072
        %v2105 = vadd.f32 %v2089, %v2073
        %v2106 = vadd.f32 %v2090, %v2074
        %v2107 = vadd.f32 %v2091, %v2075
        %v2108 = vadd.f32 %v2092, %v2076
        %v2109 = vadd.f32 %v2093, %v2077
        %v2110 = vadd.f32 %v2094, %v2078
        %v2111 = vadd.f32 %v2095, %v2079
        %v2112 = vadd.f32 %v2096, %v2080
        %v2113 = vadd.f32 %v2097, %v2081
        %v2114 = vadd.f32 %v2098, %v2082
        %2115 = vst [vmem:[#allocation2] sm:$0xff] %v2099
        %2116 = vst [vmem:[#allocation2 + $0x8] sm:$0xff] %v2100
        %2117 = vst [vmem:[#allocation2 + $0x10] sm:$0xff] %v2101
        %2118 = vst [vmem:[#allocation2 + $0x18] sm:$0xff] %v2102
        %2119 = vst [vmem:[#allocation2 + $0x20] sm:$0xff] %v2103
        %2120 = vst [vmem:[#allocation2 + $0x28] sm:$0xff] %v2104
        %2121 = vst [vmem:[#allocation2 + $0x30] sm:$0xff] %v2105
        %2122 = vst [vmem:[#allocation2 + $0x38] sm:$0xff] %v2106
        %2123 = vst [vmem:[#allocation2 + $0x40] sm:$0xff] %v2107
        %2124 = vst [vmem:[#allocation2 + $0x48] sm:$0xff] %v2108
        %2125 = vst [vmem:[#allocation2 + $0x50] sm:$0xff] %v2109
        %2126 = vst [vmem:[#allocation2 + $0x58] sm:$0xff] %v2110
        %2127 = vst [vmem:[#allocation2 + $0x60] sm:$0xff] %v2111
        %2128 = vst [vmem:[#allocation2 + $0x68] sm:$0xff] %v2112
        %2129 = vst [vmem:[#allocation2 + $0x70] sm:$0xff] %v2113
        %2130 = vst [vmem:[#allocation2 + $0x78] sm:$0xff] %v2114
        %s2131 = scalar_lea.vmem %s1371, 512 [#allocation3]
        %v2132 = vld [vmem:[%s2131] sm:$0xff]
        %v2133 = vld [vmem:[%s2131 + $0x8] sm:$0xff]
        %v2134 = vld [vmem:[%s2131 + $0x10] sm:$0xff]
        %v2135 = vld [vmem:[%s2131 + $0x18] sm:$0xff]
        %v2136 = vld [vmem:[%s2131 + $0x20] sm:$0xff]
        %v2137 = vld [vmem:[%s2131 + $0x28] sm:$0xff]
        %v2138 = vld [vmem:[%s2131 + $0x30] sm:$0xff]
        %v2139 = vld [vmem:[%s2131 + $0x38] sm:$0xff]
        %v2140 = vld [vmem:[%s2131 + $0x40] sm:$0xff]
        %v2141 = vld [vmem:[%s2131 + $0x48] sm:$0xff]
        %v2142 = vld [vmem:[%s2131 + $0x50] sm:$0xff]
        %v2143 = vld [vmem:[%s2131 + $0x58] sm:$0xff]
        %v2144 = vld [vmem:[%s2131 + $0x60] sm:$0xff]
        %v2145 = vld [vmem:[%s2131 + $0x68] sm:$0xff]
        %v2146 = vld [vmem:[%s2131 + $0x70] sm:$0xff]
        %v2147 = vld [vmem:[%s2131 + $0x78] sm:$0xff]
        %v2148 = vld [vmem:[%s2131 + $0x80] sm:$0xff]
        %v2149 = vld [vmem:[%s2131 + $0x88] sm:$0xff]
        %v2150 = vld [vmem:[%s2131 + $0x90] sm:$0xff]
        %v2151 = vld [vmem:[%s2131 + $0x98] sm:$0xff]
        %v2152 = vld [vmem:[%s2131 + $0xa0] sm:$0xff]
        %v2153 = vld [vmem:[%s2131 + $0xa8] sm:$0xff]
        %v2154 = vld [vmem:[%s2131 + $0xb0] sm:$0xff]
        %v2155 = vld [vmem:[%s2131 + $0xb8] sm:$0xff]
        %v2156 = vld [vmem:[%s2131 + $0xc0] sm:$0xff]
        %v2157 = vld [vmem:[%s2131 + $0xc8] sm:$0xff]
        %v2158 = vld [vmem:[%s2131 + $0xd0] sm:$0xff]
        %v2159 = vld [vmem:[%s2131 + $0xd8] sm:$0xff]
        %v2160 = vld [vmem:[%s2131 + $0xe0] sm:$0xff]
        %v2161 = vld [vmem:[%s2131 + $0xe8] sm:$0xff]
        %v2162 = vld [vmem:[%s2131 + $0xf0] sm:$0xff]
        %v2163 = vld [vmem:[%s2131 + $0xf8] sm:$0xff]
        %2164 = vmatprep.subr.mxu0 0.0
        %2165 = vmatpush1.msra.mxu0 %v2132
        %2166 = vmatprep.subr.mxu0 0.0
        %2167 = vmatpush1.msra.mxu0 %v2133
        %2168 = vmatprep.subr.mxu0 0.0
        %2169 = vmatpush1.msra.mxu0 %v2134
        %2170 = vmatprep.subr.mxu0 0.0
        %2171 = vmatpush1.msra.mxu0 %v2135
        %2172 = vmatprep.subr.mxu0 0.0
        %2173 = vmatpush1.msra.mxu0 %v2136
        %2174 = vmatprep.subr.mxu0 0.0
        %2175 = vmatpush1.msra.mxu0 %v2137
        %2176 = vmatprep.subr.mxu0 0.0
        %2177 = vmatpush1.msra.mxu0 %v2138
        %2178 = vmatprep.subr.mxu0 0.0
        %2179 = vmatpush1.msra.mxu0 %v2139
        %2180 = vmatprep.subr.mxu0 0.0
        %2181 = vmatpush1.msra.mxu0 %v2140
        %2182 = vmatprep.subr.mxu0 0.0
        %2183 = vmatpush1.msra.mxu0 %v2141
        %2184 = vmatprep.subr.mxu0 0.0
        %2185 = vmatpush1.msra.mxu0 %v2142
        %2186 = vmatprep.subr.mxu0 0.0
        %2187 = vmatpush1.msra.mxu0 %v2143
        %2188 = vmatprep.subr.mxu0 0.0
        %2189 = vmatpush1.msra.mxu0 %v2144
        %2190 = vmatprep.subr.mxu0 0.0
        %2191 = vmatpush1.msra.mxu0 %v2145
        %2192 = vmatprep.subr.mxu0 0.0
        %2193 = vmatpush1.msra.mxu0 %v2146
        %2194 = vmatprep.subr.mxu0 0.0
        %2195 = vmatpush1.msra.mxu0 %v2147
        %2196 = vmatprep.subr.mxu0 0.0
        %2197 = vmatpush1.msra.mxu0 %v2148
        %2198 = vmatprep.subr.mxu0 0.0
        %2199 = vmatpush1.msra.mxu0 %v2149
        %2200 = vmatprep.subr.mxu0 0.0
        %2201 = vmatpush1.msra.mxu0 %v2150
        %2202 = vmatprep.subr.mxu0 0.0
        %2203 = vmatpush1.msra.mxu0 %v2151
        %2204 = vmatprep.subr.mxu0 0.0
        %2205 = vmatpush1.msra.mxu0 %v2152
        %2206 = vmatprep.subr.mxu0 0.0
        %2207 = vmatpush1.msra.mxu0 %v2153
        %2208 = vmatprep.subr.mxu0 0.0
        %2209 = vmatpush1.msra.mxu0 %v2154
        %2210 = vmatprep.subr.mxu0 0.0
        %2211 = vmatpush1.msra.mxu0 %v2155
        %2212 = vmatprep.subr.mxu0 0.0
        %2213 = vmatpush1.msra.mxu0 %v2156
        %2214 = vmatprep.subr.mxu0 0.0
        %2215 = vmatpush1.msra.mxu0 %v2157
        %2216 = vmatprep.subr.mxu0 0.0
        %2217 = vmatpush1.msra.mxu0 %v2158
        %2218 = vmatprep.subr.mxu0 0.0
        %2219 = vmatpush1.msra.mxu0 %v2159
        %2220 = vmatprep.subr.mxu0 0.0
        %2221 = vmatpush1.msra.mxu0 %v2160
        %2222 = vmatprep.subr.mxu0 0.0
        %2223 = vmatpush1.msra.mxu0 %v2161
        %2224 = vmatprep.subr.mxu0 0.0
        %2225 = vmatpush1.msra.mxu0 %v2162
        %2226 = vmatprep.subr.mxu0 0.0
        %2227 = vmatpush1.msra.mxu0 %v2163
        %2228 = vmatprep.mubr.f32.mxu0 %v1407
        %2229 = vmatmul.mubr.f32.gmra.mrb[0].mxu0 %v1406
        %v2230 = vpop.f32.mrb[0].mxu0
        %v2231 = vadd.f32 0.0, %v2230
        %v2232 = vpop.f32.mrb[0].mxu0
        %2233 = vmatprep.mubr.f32.mxu0 %v1409
        %2234 = vmatmul.mubr.f32.gmra.mrb[0].mxu0 %v1408
        %v2235 = vpop.f32.mrb[0].mxu0
        %v2236 = vadd.f32 0.0, %v2235
        %v2237 = vpop.f32.mrb[0].mxu0
        %2238 = vmatprep.mubr.f32.mxu0 %v1411
        %2239 = vmatmul.mubr.f32.gmra.mrb[0].mxu0 %v1410
        %v2240 = vpop.f32.mrb[0].mxu0
        %v2241 = vadd.f32 0.0, %v2240
        %v2242 = vpop.f32.mrb[0].mxu0
        %2243 = vmatprep.mubr.f32.mxu0 %v1413
        %2244 = vmatmul.mubr.f32.gmra.mrb[0].mxu0 %v1412
        %v2245 = vpop.f32.mrb[0].mxu0
        %v2246 = vadd.f32 0.0, %v2245
        %v2247 = vpop.f32.mrb[0].mxu0
        %2248 = vmatprep.mubr.f32.mxu0 %v1415
        %2249 = vmatmul.mubr.f32.gmra.mrb[0].mxu0 %v1414
        %v2250 = vpop.f32.mrb[0].mxu0
        %v2251 = vadd.f32 0.0, %v2250
        %v2252 = vpop.f32.mrb[0].mxu0
        %2253 = vmatprep.mubr.f32.mxu0 %v1417
        %2254 = vmatmul.mubr.f32.gmra.mrb[0].mxu0 %v1416
        %v2255 = vpop.f32.mrb[0].mxu0
        %v2256 = vadd.f32 0.0, %v2255
        %v2257 = vpop.f32.mrb[0].mxu0
        %2258 = vmatprep.mubr.f32.mxu0 %v1419
        %2259 = vmatmul.mubr.f32.gmra.mrb[0].mxu0 %v1418
        %v2260 = vpop.f32.mrb[0].mxu0
        %v2261 = vadd.f32 0.0, %v2260
        %v2262 = vpop.f32.mrb[0].mxu0
        %2263 = vmatprep.mubr.f32.mxu0 %v1421
        %2264 = vmatmul.mubr.f32.gmra.mrb[0].mxu0 %v1420
        %v2265 = vpop.f32.mrb[0].mxu0
        %v2266 = vadd.f32 0.0, %v2265
        %v2267 = vpop.f32.mrb[0].mxu0
        %2268 = vmatprep.mubr.f32.mxu0 %v1423
        %2269 = vmatmul.mubr.f32.gmra.mrb[0].mxu0 %v1422
        %v2270 = vpop.f32.mrb[0].mxu0
        %v2271 = vadd.f32 0.0, %v2270
        %v2272 = vpop.f32.mrb[0].mxu0
        %2273 = vmatprep.mubr.f32.mxu0 %v1425
        %2274 = vmatmul.mubr.f32.gmra.mrb[0].mxu0 %v1424
        %v2275 = vpop.f32.mrb[0].mxu0
        %v2276 = vadd.f32 0.0, %v2275
        %v2277 = vpop.f32.mrb[0].mxu0
        %2278 = vmatprep.mubr.f32.mxu0 %v1427
        %2279 = vmatmul.mubr.f32.gmra.mrb[0].mxu0 %v1426
        %v2280 = vpop.f32.mrb[0].mxu0
        %v2281 = vadd.f32 0.0, %v2280
        %v2282 = vpop.f32.mrb[0].mxu0
        %2283 = vmatprep.mubr.f32.mxu0 %v1429
        %2284 = vmatmul.mubr.f32.gmra.mrb[0].mxu0 %v1428
        %v2285 = vpop.f32.mrb[0].mxu0
        %v2286 = vadd.f32 0.0, %v2285
        %v2287 = vpop.f32.mrb[0].mxu0
        %2288 = vmatprep.mubr.f32.mxu0 %v1431
        %2289 = vmatmul.mubr.f32.gmra.mrb[0].mxu0 %v1430
        %v2290 = vpop.f32.mrb[0].mxu0
        %v2291 = vadd.f32 0.0, %v2290
        %v2292 = vpop.f32.mrb[0].mxu0
        %2293 = vmatprep.mubr.f32.mxu0 %v1433
        %2294 = vmatmul.mubr.f32.gmra.mrb[0].mxu0 %v1432
        %v2295 = vpop.f32.mrb[0].mxu0
        %v2296 = vadd.f32 0.0, %v2295
        %v2297 = vpop.f32.mrb[0].mxu0
        %2298 = vmatprep.mubr.f32.mxu0 %v1435
        %2299 = vmatmul.mubr.f32.gmra.mrb[0].mxu0 %v1434
        %v2300 = vpop.f32.mrb[0].mxu0
        %v2301 = vadd.f32 0.0, %v2300
        %v2302 = vpop.f32.mrb[0].mxu0
        %2303 = vmatprep.mubr.f32.mxu0 %v1437
        %2304 = vmatmul.mubr.f32.gmra.mrb[0].mxu0 %v1436
        %v2305 = vpop.f32.mrb[0].mxu0
        %v2306 = vadd.f32 0.0, %v2305
        %v2307 = vpop.f32.mrb[0].mxu0
        %2308 = vdwg.mxu0
        %v2309 = vrot.slane %v2231, 1
        %v2310 = vrot.slane %v2236, 1
        %v2311 = vrot.slane %v2241, 1
        %v2312 = vrot.slane %v2246, 1
        %v2313 = vrot.slane %v2251, 1
        %v2314 = vrot.slane %v2256, 1
        %v2315 = vrot.slane %v2261, 1
        %v2316 = vrot.slane %v2266, 1
        %v2317 = vrot.slane %v2271, 1
        %v2318 = vrot.slane %v2276, 1
        %v2319 = vrot.slane %v2281, 1
        %v2320 = vrot.slane %v2286, 1
        %v2321 = vrot.slane %v2291, 1
        %v2322 = vrot.slane %v2296, 1
        %v2323 = vrot.slane %v2301, 1
        %v2324 = vrot.slane %v2306, 1
        %vm2325 = vcmp.lt.s32.totalorder %v1439, 7
        %v2326 = vsel %vm2325, %v2323, %v2324
        %v2327 = vsel %vm2325, %v2322, %v2323
        %v2328 = vsel %vm2325, %v2321, %v2322
        %v2329 = vsel %vm2325, %v2320, %v2321
        %v2330 = vsel %vm2325, %v2319, %v2320
        %v2331 = vsel %vm2325, %v2318, %v2319
        %v2332 = vsel %vm2325, %v2317, %v2318
        %v2333 = vsel %vm2325, %v2316, %v2317
        %v2334 = vsel %vm2325, %v2315, %v2316
        %v2335 = vsel %vm2325, %v2314, %v2315
        %v2336 = vsel %vm2325, %v2313, %v2314
        %v2337 = vsel %vm2325, %v2312, %v2313
        %v2338 = vsel %vm2325, %v2311, %v2312
        %v2339 = vsel %vm2325, %v2310, %v2311
        %v2340 = vsel %vm2325, %v2309, %v2310
        %v2341 = vsel %vm2325, %v2324, %v2309
        %vm2342 = vmand %vm1503, %vm1551
        %vm2343 = vmand %vm1504, %vm1552
        %vm2344 = vmand %vm1505, %vm1553
        %vm2345 = vmand %vm1506, %vm1554
        %vm2346 = vmand %vm1507, %vm1555
        %vm2347 = vmand %vm1508, %vm1556
        %vm2348 = vmand %vm1509, %vm1557
        %vm2349 = vmand %vm1510, %vm1558
        %vm2350 = vmand %vm1511, %vm1559
        %vm2351 = vmand %vm1512, %vm1560
        %vm2352 = vmand %vm1513, %vm1561
        %vm2353 = vmand %vm1514, %vm1562
        %vm2354 = vmand %vm1515, %vm1563
        %vm2355 = vmand %vm1516, %vm1564
        %vm2356 = vmand %vm1517, %vm1565
        %vm2357 = vmand %vm1518, %vm1566
        %v2358 = vsel %vm2342, 1, 0
        %v2359 = vsel %vm2343, 1, 0
        %v2360 = vsel %vm2344, 1, 0
        %v2361 = vsel %vm2345, 1, 0
        %v2362 = vsel %vm2346, 1, 0
        %v2363 = vsel %vm2347, 1, 0
        %v2364 = vsel %vm2348, 1, 0
        %v2365 = vsel %vm2349, 1, 0
        %v2366 = vsel %vm2350, 1, 0
        %v2367 = vsel %vm2351, 1, 0
        %v2368 = vsel %vm2352, 1, 0
        %v2369 = vsel %vm2353, 1, 0
        %v2370 = vsel %vm2354, 1, 0
        %v2371 = vsel %vm2355, 1, 0
        %v2372 = vsel %vm2356, 1, 0
        %v2373 = vsel %vm2357, 1, 0
        %vm2374 = vcmp.eq.s32.totalorder %v2358, 1
        %vm2375 = vcmp.eq.s32.totalorder %v2359, 1
        %vm2376 = vcmp.eq.s32.totalorder %v2360, 1
        %vm2377 = vcmp.eq.s32.totalorder %v2361, 1
        %vm2378 = vcmp.eq.s32.totalorder %v2362, 1
        %vm2379 = vcmp.eq.s32.totalorder %v2363, 1
        %vm2380 = vcmp.eq.s32.totalorder %v2364, 1
        %vm2381 = vcmp.eq.s32.totalorder %v2365, 1
        %vm2382 = vcmp.eq.s32.totalorder %v2366, 1
        %vm2383 = vcmp.eq.s32.totalorder %v2367, 1
        %vm2384 = vcmp.eq.s32.totalorder %v2368, 1
        %vm2385 = vcmp.eq.s32.totalorder %v2369, 1
        %vm2386 = vcmp.eq.s32.totalorder %v2370, 1
        %vm2387 = vcmp.eq.s32.totalorder %v2371, 1
        %vm2388 = vcmp.eq.s32.totalorder %v2372, 1
        %vm2389 = vcmp.eq.s32.totalorder %v2373, 1
        %v2390 = vsel %vm2374, %v2341, 0.0
        %v2391 = vsel %vm2375, %v2340, 0.0
        %v2392 = vsel %vm2376, %v2339, 0.0
        %v2393 = vsel %vm2377, %v2338, 0.0
        %v2394 = vsel %vm2378, %v2337, 0.0
        %v2395 = vsel %vm2379, %v2336, 0.0
        %v2396 = vsel %vm2380, %v2335, 0.0
        %v2397 = vsel %vm2381, %v2334, 0.0
        %v2398 = vsel %vm2382, %v2333, 0.0
        %v2399 = vsel %vm2383, %v2332, 0.0
        %v2400 = vsel %vm2384, %v2331, 0.0
        %v2401 = vsel %vm2385, %v2330, 0.0
        %v2402 = vsel %vm2386, %v2329, 0.0
        %v2403 = vsel %vm2387, %v2328, 0.0
        %v2404 = vsel %vm2388, %v2327, 0.0
        %v2405 = vsel %vm2389, %v2326, 0.0
        %v2406 = vld [vmem:[#allocation2] sm:$0xff]
        %v2407 = vld [vmem:[#allocation2 + $0x8] sm:$0xff]
        %v2408 = vld [vmem:[#allocation2 + $0x10] sm:$0xff]
        %v2409 = vld [vmem:[#allocation2 + $0x18] sm:$0xff]
        %v2410 = vld [vmem:[#allocation2 + $0x20] sm:$0xff]
        %v2411 = vld [vmem:[#allocation2 + $0x28] sm:$0xff]
        %v2412 = vld [vmem:[#allocation2 + $0x30] sm:$0xff]
        %v2413 = vld [vmem:[#allocation2 + $0x38] sm:$0xff]
        %v2414 = vld [vmem:[#allocation2 + $0x40] sm:$0xff]
        %v2415 = vld [vmem:[#allocation2 + $0x48] sm:$0xff]
        %v2416 = vld [vmem:[#allocation2 + $0x50] sm:$0xff]
        %v2417 = vld [vmem:[#allocation2 + $0x58] sm:$0xff]
        %v2418 = vld [vmem:[#allocation2 + $0x60] sm:$0xff]
        %v2419 = vld [vmem:[#allocation2 + $0x68] sm:$0xff]
        %v2420 = vld [vmem:[#allocation2 + $0x70] sm:$0xff]
        %v2421 = vld [vmem:[#allocation2 + $0x78] sm:$0xff]
        %v2422 = vadd.f32 %v2406, %v2390
        %v2423 = vadd.f32 %v2407, %v2391
        %v2424 = vadd.f32 %v2408, %v2392
        %v2425 = vadd.f32 %v2409, %v2393
        %v2426 = vadd.f32 %v2410, %v2394
        %v2427 = vadd.f32 %v2411, %v2395
        %v2428 = vadd.f32 %v2412, %v2396
        %v2429 = vadd.f32 %v2413, %v2397
        %v2430 = vadd.f32 %v2414, %v2398
        %v2431 = vadd.f32 %v2415, %v2399
        %v2432 = vadd.f32 %v2416, %v2400
        %v2433 = vadd.f32 %v2417, %v2401
        %v2434 = vadd.f32 %v2418, %v2402
        %v2435 = vadd.f32 %v2419, %v2403
        %v2436 = vadd.f32 %v2420, %v2404
        %v2437 = vadd.f32 %v2421, %v2405
        %2438 = vst [vmem:[#allocation2] sm:$0xff] %v2422
        %2439 = vst [vmem:[#allocation2 + $0x8] sm:$0xff] %v2423
        %2440 = vst [vmem:[#allocation2 + $0x10] sm:$0xff] %v2424
        %2441 = vst [vmem:[#allocation2 + $0x18] sm:$0xff] %v2425
        %2442 = vst [vmem:[#allocation2 + $0x20] sm:$0xff] %v2426
        %2443 = vst [vmem:[#allocation2 + $0x28] sm:$0xff] %v2427
        %2444 = vst [vmem:[#allocation2 + $0x30] sm:$0xff] %v2428
        %2445 = vst [vmem:[#allocation2 + $0x38] sm:$0xff] %v2429
        %2446 = vst [vmem:[#allocation2 + $0x40] sm:$0xff] %v2430
        %2447 = vst [vmem:[#allocation2 + $0x48] sm:$0xff] %v2431
        %2448 = vst [vmem:[#allocation2 + $0x50] sm:$0xff] %v2432
        %2449 = vst [vmem:[#allocation2 + $0x58] sm:$0xff] %v2433
        %2450 = vst [vmem:[#allocation2 + $0x60] sm:$0xff] %v2434
        %2451 = vst [vmem:[#allocation2 + $0x68] sm:$0xff] %v2435
        %2452 = vst [vmem:[#allocation2 + $0x70] sm:$0xff] %v2436
        %2453 = vst [vmem:[#allocation2 + $0x78] sm:$0xff] %v2437
        %s2454 = scalar_lea.vmem %s1371, 768 [#allocation3]
        %v2455 = vld [vmem:[%s2454] sm:$0xff]
        %v2456 = vld [vmem:[%s2454 + $0x8] sm:$0xff]
        %v2457 = vld [vmem:[%s2454 + $0x10] sm:$0xff]
        %v2458 = vld [vmem:[%s2454 + $0x18] sm:$0xff]
        %v2459 = vld [vmem:[%s2454 + $0x20] sm:$0xff]
        %v2460 = vld [vmem:[%s2454 + $0x28] sm:$0xff]
        %v2461 = vld [vmem:[%s2454 + $0x30] sm:$0xff]
        %v2462 = vld [vmem:[%s2454 + $0x38] sm:$0xff]
        %v2463 = vld [vmem:[%s2454 + $0x40] sm:$0xff]
        %v2464 = vld [vmem:[%s2454 + $0x48] sm:$0xff]
        %v2465 = vld [vmem:[%s2454 + $0x50] sm:$0xff]
        %v2466 = vld [vmem:[%s2454 + $0x58] sm:$0xff]
        %v2467 = vld [vmem:[%s2454 + $0x60] sm:$0xff]
        %v2468 = vld [vmem:[%s2454 + $0x68] sm:$0xff]
        %v2469 = vld [vmem:[%s2454 + $0x70] sm:$0xff]
        %v2470 = vld [vmem:[%s2454 + $0x78] sm:$0xff]
        %v2471 = vld [vmem:[%s2454 + $0x80] sm:$0xff]
        %v2472 = vld [vmem:[%s2454 + $0x88] sm:$0xff]
        %v2473 = vld [vmem:[%s2454 + $0x90] sm:$0xff]
        %v2474 = vld [vmem:[%s2454 + $0x98] sm:$0xff]
        %v2475 = vld [vmem:[%s2454 + $0xa0] sm:$0xff]
        %v2476 = vld [vmem:[%s2454 + $0xa8] sm:$0xff]
        %v2477 = vld [vmem:[%s2454 + $0xb0] sm:$0xff]
        %v2478 = vld [vmem:[%s2454 + $0xb8] sm:$0xff]
        %v2479 = vld [vmem:[%s2454 + $0xc0] sm:$0xff]
        %v2480 = vld [vmem:[%s2454 + $0xc8] sm:$0xff]
        %v2481 = vld [vmem:[%s2454 + $0xd0] sm:$0xff]
        %v2482 = vld [vmem:[%s2454 + $0xd8] sm:$0xff]
        %v2483 = vld [vmem:[%s2454 + $0xe0] sm:$0xff]
        %v2484 = vld [vmem:[%s2454 + $0xe8] sm:$0xff]
        %v2485 = vld [vmem:[%s2454 + $0xf0] sm:$0xff]
        %v2486 = vld [vmem:[%s2454 + $0xf8] sm:$0xff]
        %2487 = vmatprep.subr.mxu0 0.0
        %2488 = vmatpush1.msra.mxu0 %v2455
        %2489 = vmatprep.subr.mxu0 0.0
        %2490 = vmatpush1.msra.mxu0 %v2456
        %2491 = vmatprep.subr.mxu0 0.0
        %2492 = vmatpush1.msra.mxu0 %v2457
        %2493 = vmatprep.subr.mxu0 0.0
        %2494 = vmatpush1.msra.mxu0 %v2458
        %2495 = vmatprep.subr.mxu0 0.0
        %2496 = vmatpush1.msra.mxu0 %v2459
        %2497 = vmatprep.subr.mxu0 0.0
        %2498 = vmatpush1.msra.mxu0 %v2460
        %2499 = vmatprep.subr.mxu0 0.0
        %2500 = vmatpush1.msra.mxu0 %v2461
        %2501 = vmatprep.subr.mxu0 0.0
        %2502 = vmatpush1.msra.mxu0 %v2462
        %2503 = vmatprep.subr.mxu0 0.0
        %2504 = vmatpush1.msra.mxu0 %v2463
        %2505 = vmatprep.subr.mxu0 0.0
        %2506 = vmatpush1.msra.mxu0 %v2464
        %2507 = vmatprep.subr.mxu0 0.0
        %2508 = vmatpush1.msra.mxu0 %v2465
        %2509 = vmatprep.subr.mxu0 0.0
        %2510 = vmatpush1.msra.mxu0 %v2466
        %2511 = vmatprep.subr.mxu0 0.0
        %2512 = vmatpush1.msra.mxu0 %v2467
        %2513 = vmatprep.subr.mxu0 0.0
        %2514 = vmatpush1.msra.mxu0 %v2468
        %2515 = vmatprep.subr.mxu0 0.0
        %2516 = vmatpush1.msra.mxu0 %v2469
        %2517 = vmatprep.subr.mxu0 0.0
        %2518 = vmatpush1.msra.mxu0 %v2470
        %2519 = vmatprep.subr.mxu0 0.0
        %2520 = vmatpush1.msra.mxu0 %v2471
        %2521 = vmatprep.subr.mxu0 0.0
        %2522 = vmatpush1.msra.mxu0 %v2472
        %2523 = vmatprep.subr.mxu0 0.0
        %2524 = vmatpush1.msra.mxu0 %v2473
        %2525 = vmatprep.subr.mxu0 0.0
        %2526 = vmatpush1.msra.mxu0 %v2474
        %2527 = vmatprep.subr.mxu0 0.0
        %2528 = vmatpush1.msra.mxu0 %v2475
        %2529 = vmatprep.subr.mxu0 0.0
        %2530 = vmatpush1.msra.mxu0 %v2476
        %2531 = vmatprep.subr.mxu0 0.0
        %2532 = vmatpush1.msra.mxu0 %v2477
        %2533 = vmatprep.subr.mxu0 0.0
        %2534 = vmatpush1.msra.mxu0 %v2478
        %2535 = vmatprep.subr.mxu0 0.0
        %2536 = vmatpush1.msra.mxu0 %v2479
        %2537 = vmatprep.subr.mxu0 0.0
        %2538 = vmatpush1.msra.mxu0 %v2480
        %2539 = vmatprep.subr.mxu0 0.0
        %2540 = vmatpush1.msra.mxu0 %v2481
        %2541 = vmatprep.subr.mxu0 0.0
        %2542 = vmatpush1.msra.mxu0 %v2482
        %2543 = vmatprep.subr.mxu0 0.0
        %2544 = vmatpush1.msra.mxu0 %v2483
        %2545 = vmatprep.subr.mxu0 0.0
        %2546 = vmatpush1.msra.mxu0 %v2484
        %2547 = vmatprep.subr.mxu0 0.0
        %2548 = vmatpush1.msra.mxu0 %v2485
        %2549 = vmatprep.subr.mxu0 0.0
        %2550 = vmatpush1.msra.mxu0 %v2486
        %2551 = vmatprep.mubr.f32.mxu0 %v1407
        %2552 = vmatmul.mubr.f32.gmra.mrb[0].mxu0 %v1406
        %v2553 = vpop.f32.mrb[0].mxu0
        %v2554 = vadd.f32 0.0, %v2553
        %v2555 = vpop.f32.mrb[0].mxu0
        %2556 = vmatprep.mubr.f32.mxu0 %v1409
        %2557 = vmatmul.mubr.f32.gmra.mrb[0].mxu0 %v1408
        %v2558 = vpop.f32.mrb[0].mxu0
        %v2559 = vadd.f32 0.0, %v2558
        %v2560 = vpop.f32.mrb[0].mxu0
        %2561 = vmatprep.mubr.f32.mxu0 %v1411
        %2562 = vmatmul.mubr.f32.gmra.mrb[0].mxu0 %v1410
        %v2563 = vpop.f32.mrb[0].mxu0
        %v2564 = vadd.f32 0.0, %v2563
        %v2565 = vpop.f32.mrb[0].mxu0
        %2566 = vmatprep.mubr.f32.mxu0 %v1413
        %2567 = vmatmul.mubr.f32.gmra.mrb[0].mxu0 %v1412
        %v2568 = vpop.f32.mrb[0].mxu0
        %v2569 = vadd.f32 0.0, %v2568
        %v2570 = vpop.f32.mrb[0].mxu0
        %2571 = vmatprep.mubr.f32.mxu0 %v1415
        %2572 = vmatmul.mubr.f32.gmra.mrb[0].mxu0 %v1414
        %v2573 = vpop.f32.mrb[0].mxu0
        %v2574 = vadd.f32 0.0, %v2573
        %v2575 = vpop.f32.mrb[0].mxu0
        %2576 = vmatprep.mubr.f32.mxu0 %v1417
        %2577 = vmatmul.mubr.f32.gmra.mrb[0].mxu0 %v1416
        %v2578 = vpop.f32.mrb[0].mxu0
        %v2579 = vadd.f32 0.0, %v2578
        %v2580 = vpop.f32.mrb[0].mxu0
        %2581 = vmatprep.mubr.f32.mxu0 %v1419
        %2582 = vmatmul.mubr.f32.gmra.mrb[0].mxu0 %v1418
        %v2583 = vpop.f32.mrb[0].mxu0
        %v2584 = vadd.f32 0.0, %v2583
        %v2585 = vpop.f32.mrb[0].mxu0
        %2586 = vmatprep.mubr.f32.mxu0 %v1421
        %2587 = vmatmul.mubr.f32.gmra.mrb[0].mxu0 %v1420
        %v2588 = vpop.f32.mrb[0].mxu0
        %v2589 = vadd.f32 0.0, %v2588
        %v2590 = vpop.f32.mrb[0].mxu0
        %2591 = vmatprep.mubr.f32.mxu0 %v1423
        %2592 = vmatmul.mubr.f32.gmra.mrb[0].mxu0 %v1422
        %v2593 = vpop.f32.mrb[0].mxu0
        %v2594 = vadd.f32 0.0, %v2593
        %v2595 = vpop.f32.mrb[0].mxu0
        %2596 = vmatprep.mubr.f32.mxu0 %v1425
        %2597 = vmatmul.mubr.f32.gmra.mrb[0].mxu0 %v1424
        %v2598 = vpop.f32.mrb[0].mxu0
        %v2599 = vadd.f32 0.0, %v2598
        %v2600 = vpop.f32.mrb[0].mxu0
        %2601 = vmatprep.mubr.f32.mxu0 %v1427
        %2602 = vmatmul.mubr.f32.gmra.mrb[0].mxu0 %v1426
        %v2603 = vpop.f32.mrb[0].mxu0
        %v2604 = vadd.f32 0.0, %v2603
        %v2605 = vpop.f32.mrb[0].mxu0
        %2606 = vmatprep.mubr.f32.mxu0 %v1429
        %2607 = vmatmul.mubr.f32.gmra.mrb[0].mxu0 %v1428
        %v2608 = vpop.f32.mrb[0].mxu0
        %v2609 = vadd.f32 0.0, %v2608
        %v2610 = vpop.f32.mrb[0].mxu0
        %2611 = vmatprep.mubr.f32.mxu0 %v1431
        %2612 = vmatmul.mubr.f32.gmra.mrb[0].mxu0 %v1430
        %v2613 = vpop.f32.mrb[0].mxu0
        %v2614 = vadd.f32 0.0, %v2613
        %v2615 = vpop.f32.mrb[0].mxu0
        %2616 = vmatprep.mubr.f32.mxu0 %v1433
        %2617 = vmatmul.mubr.f32.gmra.mrb[0].mxu0 %v1432
        %v2618 = vpop.f32.mrb[0].mxu0
        %v2619 = vadd.f32 0.0, %v2618
        %v2620 = vpop.f32.mrb[0].mxu0
        %2621 = vmatprep.mubr.f32.mxu0 %v1435
        %2622 = vmatmul.mubr.f32.gmra.mrb[0].mxu0 %v1434
        %v2623 = vpop.f32.mrb[0].mxu0
        %v2624 = vadd.f32 0.0, %v2623
        %v2625 = vpop.f32.mrb[0].mxu0
        %2626 = vmatprep.mubr.f32.mxu0 %v1437
        %2627 = vmatmul.mubr.f32.gmra.mrb[0].mxu0 %v1436
        %v2628 = vpop.f32.mrb[0].mxu0
        %v2629 = vadd.f32 0.0, %v2628
        %v2630 = vpop.f32.mrb[0].mxu0
        %2631 = vdwg.mxu0
        %v2632 = vrot.slane %v2554, 7
        %v2633 = vrot.slane %v2559, 7
        %v2634 = vrot.slane %v2564, 7
        %v2635 = vrot.slane %v2569, 7
        %v2636 = vrot.slane %v2574, 7
        %v2637 = vrot.slane %v2579, 7
        %v2638 = vrot.slane %v2584, 7
        %v2639 = vrot.slane %v2589, 7
        %v2640 = vrot.slane %v2594, 7
        %v2641 = vrot.slane %v2599, 7
        %v2642 = vrot.slane %v2604, 7
        %v2643 = vrot.slane %v2609, 7
        %v2644 = vrot.slane %v2614, 7
        %v2645 = vrot.slane %v2619, 7
        %v2646 = vrot.slane %v2624, 7
        %v2647 = vrot.slane %v2629, 7
        %v2648 = vsel %vm1760, %v2646, %v2647
        %v2649 = vsel %vm1760, %v2645, %v2646
        %v2650 = vsel %vm1760, %v2644, %v2645
        %v2651 = vsel %vm1760, %v2643, %v2644
        %v2652 = vsel %vm1760, %v2642, %v2643
        %v2653 = vsel %vm1760, %v2641, %v2642
        %v2654 = vsel %vm1760, %v2640, %v2641
        %v2655 = vsel %vm1760, %v2639, %v2640
        %v2656 = vsel %vm1760, %v2638, %v2639
        %v2657 = vsel %vm1760, %v2637, %v2638
        %v2658 = vsel %vm1760, %v2636, %v2637
        %v2659 = vsel %vm1760, %v2635, %v2636
        %v2660 = vsel %vm1760, %v2634, %v2635
        %v2661 = vsel %vm1760, %v2633, %v2634
        %v2662 = vsel %vm1760, %v2632, %v2633
        %v2663 = vsel %vm1760, %v2647, %v2632
        %v2664 = vsel %vm1535, 1, 0
        %v2665 = vsel %vm1536, 1, 0
        %v2666 = vsel %vm1537, 1, 0
        %v2667 = vsel %vm1538, 1, 0
        %v2668 = vsel %vm1539, 1, 0
        %v2669 = vsel %vm1540, 1, 0
        %v2670 = vsel %vm1541, 1, 0
        %v2671 = vsel %vm1542, 1, 0
        %v2672 = vsel %vm1543, 1, 0
        %v2673 = vsel %vm1544, 1, 0
        %v2674 = vsel %vm1545, 1, 0
        %v2675 = vsel %vm1546, 1, 0
        %v2676 = vsel %vm1547, 1, 0
        %v2677 = vsel %vm1548, 1, 0
        %v2678 = vsel %vm1549, 1, 0
        %v2679 = vsel %vm1550, 1, 0
        %vm2680 = vcmp.eq.s32.totalorder %v2664, 1
        %vm2681 = vcmp.eq.s32.totalorder %v2665, 1
        %vm2682 = vcmp.eq.s32.totalorder %v2666, 1
        %vm2683 = vcmp.eq.s32.totalorder %v2667, 1
        %vm2684 = vcmp.eq.s32.totalorder %v2668, 1
        %vm2685 = vcmp.eq.s32.totalorder %v2669, 1
        %vm2686 = vcmp.eq.s32.totalorder %v2670, 1
        %vm2687 = vcmp.eq.s32.totalorder %v2671, 1
        %vm2688 = vcmp.eq.s32.totalorder %v2672, 1
        %vm2689 = vcmp.eq.s32.totalorder %v2673, 1
        %vm2690 = vcmp.eq.s32.totalorder %v2674, 1
        %vm2691 = vcmp.eq.s32.totalorder %v2675, 1
        %vm2692 = vcmp.eq.s32.totalorder %v2676, 1
        %vm2693 = vcmp.eq.s32.totalorder %v2677, 1
        %vm2694 = vcmp.eq.s32.totalorder %v2678, 1
        %vm2695 = vcmp.eq.s32.totalorder %v2679, 1
        %v2696 = vsel %vm2680, %v2663, 0.0
        %v2697 = vsel %vm2681, %v2662, 0.0
        %v2698 = vsel %vm2682, %v2661, 0.0
        %v2699 = vsel %vm2683, %v2660, 0.0
        %v2700 = vsel %vm2684, %v2659, 0.0
        %v2701 = vsel %vm2685, %v2658, 0.0
        %v2702 = vsel %vm2686, %v2657, 0.0
        %v2703 = vsel %vm2687, %v2656, 0.0
        %v2704 = vsel %vm2688, %v2655, 0.0
        %v2705 = vsel %vm2689, %v2654, 0.0
        %v2706 = vsel %vm2690, %v2653, 0.0
        %v2707 = vsel %vm2691, %v2652, 0.0
        %v2708 = vsel %vm2692, %v2651, 0.0
        %v2709 = vsel %vm2693, %v2650, 0.0
        %v2710 = vsel %vm2694, %v2649, 0.0
        %v2711 = vsel %vm2695, %v2648, 0.0
        %v2712 = vld [vmem:[#allocation2] sm:$0xff]
        %v2713 = vld [vmem:[#allocation2 + $0x8] sm:$0xff]
        %v2714 = vld [vmem:[#allocation2 + $0x10] sm:$0xff]
        %v2715 = vld [vmem:[#allocation2 + $0x18] sm:$0xff]
        %v2716 = vld [vmem:[#allocation2 + $0x20] sm:$0xff]
        %v2717 = vld [vmem:[#allocation2 + $0x28] sm:$0xff]
        %v2718 = vld [vmem:[#allocation2 + $0x30] sm:$0xff]
        %v2719 = vld [vmem:[#allocation2 + $0x38] sm:$0xff]
        %v2720 = vld [vmem:[#allocation2 + $0x40] sm:$0xff]
        %v2721 = vld [vmem:[#allocation2 + $0x48] sm:$0xff]
        %v2722 = vld [vmem:[#allocation2 + $0x50] sm:$0xff]
        %v2723 = vld [vmem:[#allocation2 + $0x58] sm:$0xff]
        %v2724 = vld [vmem:[#allocation2 + $0x60] sm:$0xff]
        %v2725 = vld [vmem:[#allocation2 + $0x68] sm:$0xff]
        %v2726 = vld [vmem:[#allocation2 + $0x70] sm:$0xff]
        %v2727 = vld [vmem:[#allocation2 + $0x78] sm:$0xff]
        %v2728 = vadd.f32 %v2712, %v2696
        %v2729 = vadd.f32 %v2713, %v2697
        %v2730 = vadd.f32 %v2714, %v2698
        %v2731 = vadd.f32 %v2715, %v2699
        %v2732 = vadd.f32 %v2716, %v2700
        %v2733 = vadd.f32 %v2717, %v2701
        %v2734 = vadd.f32 %v2718, %v2702
        %v2735 = vadd.f32 %v2719, %v2703
        %v2736 = vadd.f32 %v2720, %v2704
        %v2737 = vadd.f32 %v2721, %v2705
        %v2738 = vadd.f32 %v2722, %v2706
        %v2739 = vadd.f32 %v2723, %v2707
        %v2740 = vadd.f32 %v2724, %v2708
        %v2741 = vadd.f32 %v2725, %v2709
        %v2742 = vadd.f32 %v2726, %v2710
        %v2743 = vadd.f32 %v2727, %v2711
        %2744 = vst [vmem:[#allocation2] sm:$0xff] %v2728
        %2745 = vst [vmem:[#allocation2 + $0x8] sm:$0xff] %v2729
        %2746 = vst [vmem:[#allocation2 + $0x10] sm:$0xff] %v2730
        %2747 = vst [vmem:[#allocation2 + $0x18] sm:$0xff] %v2731
        %2748 = vst [vmem:[#allocation2 + $0x20] sm:$0xff] %v2732
        %2749 = vst [vmem:[#allocation2 + $0x28] sm:$0xff] %v2733
        %2750 = vst [vmem:[#allocation2 + $0x30] sm:$0xff] %v2734
        %2751 = vst [vmem:[#allocation2 + $0x38] sm:$0xff] %v2735
        %2752 = vst [vmem:[#allocation2 + $0x40] sm:$0xff] %v2736
        %2753 = vst [vmem:[#allocation2 + $0x48] sm:$0xff] %v2737
        %2754 = vst [vmem:[#allocation2 + $0x50] sm:$0xff] %v2738
        %2755 = vst [vmem:[#allocation2 + $0x58] sm:$0xff] %v2739
        %2756 = vst [vmem:[#allocation2 + $0x60] sm:$0xff] %v2740
        %2757 = vst [vmem:[#allocation2 + $0x68] sm:$0xff] %v2741
        %2758 = vst [vmem:[#allocation2 + $0x70] sm:$0xff] %v2742
        %2759 = vst [vmem:[#allocation2 + $0x78] sm:$0xff] %v2743
        %s2760 = scalar_lea.vmem %s1371, 1024 [#allocation3]
        %v2761 = vld [vmem:[%s2760] sm:$0xff]
        %v2762 = vld [vmem:[%s2760 + $0x8] sm:$0xff]
        %v2763 = vld [vmem:[%s2760 + $0x10] sm:$0xff]
        %v2764 = vld [vmem:[%s2760 + $0x18] sm:$0xff]
        %v2765 = vld [vmem:[%s2760 + $0x20] sm:$0xff]
        %v2766 = vld [vmem:[%s2760 + $0x28] sm:$0xff]
        %v2767 = vld [vmem:[%s2760 + $0x30] sm:$0xff]
        %v2768 = vld [vmem:[%s2760 + $0x38] sm:$0xff]
        %v2769 = vld [vmem:[%s2760 + $0x40] sm:$0xff]
        %v2770 = vld [vmem:[%s2760 + $0x48] sm:$0xff]
        %v2771 = vld [vmem:[%s2760 + $0x50] sm:$0xff]
        %v2772 = vld [vmem:[%s2760 + $0x58] sm:$0xff]
        %v2773 = vld [vmem:[%s2760 + $0x60] sm:$0xff]
        %v2774 = vld [vmem:[%s2760 + $0x68] sm:$0xff]
        %v2775 = vld [vmem:[%s2760 + $0x70] sm:$0xff]
        %v2776 = vld [vmem:[%s2760 + $0x78] sm:$0xff]
        %v2777 = vld [vmem:[%s2760 + $0x80] sm:$0xff]
        %v2778 = vld [vmem:[%s2760 + $0x88] sm:$0xff]
        %v2779 = vld [vmem:[%s2760 + $0x90] sm:$0xff]
        %v2780 = vld [vmem:[%s2760 + $0x98] sm:$0xff]
        %v2781 = vld [vmem:[%s2760 + $0xa0] sm:$0xff]
        %v2782 = vld [vmem:[%s2760 + $0xa8] sm:$0xff]
        %v2783 = vld [vmem:[%s2760 + $0xb0] sm:$0xff]
        %v2784 = vld [vmem:[%s2760 + $0xb8] sm:$0xff]
        %v2785 = vld [vmem:[%s2760 + $0xc0] sm:$0xff]
        %v2786 = vld [vmem:[%s2760 + $0xc8] sm:$0xff]
        %v2787 = vld [vmem:[%s2760 + $0xd0] sm:$0xff]
        %v2788 = vld [vmem:[%s2760 + $0xd8] sm:$0xff]
        %v2789 = vld [vmem:[%s2760 + $0xe0] sm:$0xff]
        %v2790 = vld [vmem:[%s2760 + $0xe8] sm:$0xff]
        %v2791 = vld [vmem:[%s2760 + $0xf0] sm:$0xff]
        %v2792 = vld [vmem:[%s2760 + $0xf8] sm:$0xff]
        %2793 = vmatprep.subr.mxu0 0.0
        %2794 = vmatpush1.msra.mxu0 %v2761
        %2795 = vmatprep.subr.mxu0 0.0
        %2796 = vmatpush1.msra.mxu0 %v2762
        %2797 = vmatprep.subr.mxu0 0.0
        %2798 = vmatpush1.msra.mxu0 %v2763
        %2799 = vmatprep.subr.mxu0 0.0
        %2800 = vmatpush1.msra.mxu0 %v2764
        %2801 = vmatprep.subr.mxu0 0.0
        %2802 = vmatpush1.msra.mxu0 %v2765
        %2803 = vmatprep.subr.mxu0 0.0
        %2804 = vmatpush1.msra.mxu0 %v2766
        %2805 = vmatprep.subr.mxu0 0.0
        %2806 = vmatpush1.msra.mxu0 %v2767
        %2807 = vmatprep.subr.mxu0 0.0
        %2808 = vmatpush1.msra.mxu0 %v2768
        %2809 = vmatprep.subr.mxu0 0.0
        %2810 = vmatpush1.msra.mxu0 %v2769
        %2811 = vmatprep.subr.mxu0 0.0
        %2812 = vmatpush1.msra.mxu0 %v2770
        %2813 = vmatprep.subr.mxu0 0.0
        %2814 = vmatpush1.msra.mxu0 %v2771
        %2815 = vmatprep.subr.mxu0 0.0
        %2816 = vmatpush1.msra.mxu0 %v2772
        %2817 = vmatprep.subr.mxu0 0.0
        %2818 = vmatpush1.msra.mxu0 %v2773
        %2819 = vmatprep.subr.mxu0 0.0
        %2820 = vmatpush1.msra.mxu0 %v2774
        %2821 = vmatprep.subr.mxu0 0.0
        %2822 = vmatpush1.msra.mxu0 %v2775
        %2823 = vmatprep.subr.mxu0 0.0
        %2824 = vmatpush1.msra.mxu0 %v2776
        %2825 = vmatprep.subr.mxu0 0.0
        %2826 = vmatpush1.msra.mxu0 %v2777
        %2827 = vmatprep.subr.mxu0 0.0
        %2828 = vmatpush1.msra.mxu0 %v2778
        %2829 = vmatprep.subr.mxu0 0.0
        %2830 = vmatpush1.msra.mxu0 %v2779
        %2831 = vmatprep.subr.mxu0 0.0
        %2832 = vmatpush1.msra.mxu0 %v2780
        %2833 = vmatprep.subr.mxu0 0.0
        %2834 = vmatpush1.msra.mxu0 %v2781
        %2835 = vmatprep.subr.mxu0 0.0
        %2836 = vmatpush1.msra.mxu0 %v2782
        %2837 = vmatprep.subr.mxu0 0.0
        %2838 = vmatpush1.msra.mxu0 %v2783
        %2839 = vmatprep.subr.mxu0 0.0
        %2840 = vmatpush1.msra.mxu0 %v2784
        %2841 = vmatprep.subr.mxu0 0.0
        %2842 = vmatpush1.msra.mxu0 %v2785
        %2843 = vmatprep.subr.mxu0 0.0
        %2844 = vmatpush1.msra.mxu0 %v2786
        %2845 = vmatprep.subr.mxu0 0.0
        %2846 = vmatpush1.msra.mxu0 %v2787
        %2847 = vmatprep.subr.mxu0 0.0
        %2848 = vmatpush1.msra.mxu0 %v2788
        %2849 = vmatprep.subr.mxu0 0.0
        %2850 = vmatpush1.msra.mxu0 %v2789
        %2851 = vmatprep.subr.mxu0 0.0
        %2852 = vmatpush1.msra.mxu0 %v2790
        %2853 = vmatprep.subr.mxu0 0.0
        %2854 = vmatpush1.msra.mxu0 %v2791
        %2855 = vmatprep.subr.mxu0 0.0
        %2856 = vmatpush1.msra.mxu0 %v2792
        %2857 = vmatprep.mubr.f32.mxu0 %v1407
        %2858 = vmatmul.mubr.f32.gmra.mrb[0].mxu0 %v1406
        %v2859 = vpop.f32.mrb[0].mxu0
        %v2860 = vadd.f32 0.0, %v2859
        %v2861 = vpop.f32.mrb[0].mxu0
        %2862 = vmatprep.mubr.f32.mxu0 %v1409
        %2863 = vmatmul.mubr.f32.gmra.mrb[0].mxu0 %v1408
        %v2864 = vpop.f32.mrb[0].mxu0
        %v2865 = vadd.f32 0.0, %v2864
        %v2866 = vpop.f32.mrb[0].mxu0
        %2867 = vmatprep.mubr.f32.mxu0 %v1411
        %2868 = vmatmul.mubr.f32.gmra.mrb[0].mxu0 %v1410
        %v2869 = vpop.f32.mrb[0].mxu0
        %v2870 = vadd.f32 0.0, %v2869
        %v2871 = vpop.f32.mrb[0].mxu0
        %2872 = vmatprep.mubr.f32.mxu0 %v1413
        %2873 = vmatmul.mubr.f32.gmra.mrb[0].mxu0 %v1412
        %v2874 = vpop.f32.mrb[0].mxu0
        %v2875 = vadd.f32 0.0, %v2874
        %v2876 = vpop.f32.mrb[0].mxu0
        %2877 = vmatprep.mubr.f32.mxu0 %v1415
        %2878 = vmatmul.mubr.f32.gmra.mrb[0].mxu0 %v1414
        %v2879 = vpop.f32.mrb[0].mxu0
        %v2880 = vadd.f32 0.0, %v2879
        %v2881 = vpop.f32.mrb[0].mxu0
        %2882 = vmatprep.mubr.f32.mxu0 %v1417
        %2883 = vmatmul.mubr.f32.gmra.mrb[0].mxu0 %v1416
        %v2884 = vpop.f32.mrb[0].mxu0
        %v2885 = vadd.f32 0.0, %v2884
        %v2886 = vpop.f32.mrb[0].mxu0
        %2887 = vmatprep.mubr.f32.mxu0 %v1419
        %2888 = vmatmul.mubr.f32.gmra.mrb[0].mxu0 %v1418
        %v2889 = vpop.f32.mrb[0].mxu0
        %v2890 = vadd.f32 0.0, %v2889
        %v2891 = vpop.f32.mrb[0].mxu0
        %2892 = vmatprep.mubr.f32.mxu0 %v1421
        %2893 = vmatmul.mubr.f32.gmra.mrb[0].mxu0 %v1420
        %v2894 = vpop.f32.mrb[0].mxu0
        %v2895 = vadd.f32 0.0, %v2894
        %v2896 = vpop.f32.mrb[0].mxu0
        %2897 = vmatprep.mubr.f32.mxu0 %v1423
        %2898 = vmatmul.mubr.f32.gmra.mrb[0].mxu0 %v1422
        %v2899 = vpop.f32.mrb[0].mxu0
        %v2900 = vadd.f32 0.0, %v2899
        %v2901 = vpop.f32.mrb[0].mxu0
        %2902 = vmatprep.mubr.f32.mxu0 %v1425
        %2903 = vmatmul.mubr.f32.gmra.mrb[0].mxu0 %v1424
        %v2904 = vpop.f32.mrb[0].mxu0
        %v2905 = vadd.f32 0.0, %v2904
        %v2906 = vpop.f32.mrb[0].mxu0
        %2907 = vmatprep.mubr.f32.mxu0 %v1427
        %2908 = vmatmul.mubr.f32.gmra.mrb[0].mxu0 %v1426
        %v2909 = vpop.f32.mrb[0].mxu0
        %v2910 = vadd.f32 0.0, %v2909
        %v2911 = vpop.f32.mrb[0].mxu0
        %2912 = vmatprep.mubr.f32.mxu0 %v1429
        %2913 = vmatmul.mubr.f32.gmra.mrb[0].mxu0 %v1428
        %v2914 = vpop.f32.mrb[0].mxu0
        %v2915 = vadd.f32 0.0, %v2914
        %v2916 = vpop.f32.mrb[0].mxu0
        %2917 = vmatprep.mubr.f32.mxu0 %v1431
        %2918 = vmatmul.mubr.f32.gmra.mrb[0].mxu0 %v1430
        %v2919 = vpop.f32.mrb[0].mxu0
        %v2920 = vadd.f32 0.0, %v2919
        %v2921 = vpop.f32.mrb[0].mxu0
        %2922 = vmatprep.mubr.f32.mxu0 %v1433
        %2923 = vmatmul.mubr.f32.gmra.mrb[0].mxu0 %v1432
        %v2924 = vpop.f32.mrb[0].mxu0
        %v2925 = vadd.f32 0.0, %v2924
        %v2926 = vpop.f32.mrb[0].mxu0
        %2927 = vmatprep.mubr.f32.mxu0 %v1435
        %2928 = vmatmul.mubr.f32.gmra.mrb[0].mxu0 %v1434
        %v2929 = vpop.f32.mrb[0].mxu0
        %v2930 = vadd.f32 0.0, %v2929
        %v2931 = vpop.f32.mrb[0].mxu0
        %2932 = vmatprep.mubr.f32.mxu0 %v1437
        %2933 = vmatmul.mubr.f32.gmra.mrb[0].mxu0 %v1436
        %v2934 = vpop.f32.mrb[0].mxu0
        %v2935 = vadd.f32 0.0, %v2934
        %v2936 = vpop.f32.mrb[0].mxu0
        %2937 = vdwg.mxu0
        %v2938 = vld [vmem:[#allocation2] sm:$0xff]
        %v2939 = vld [vmem:[#allocation2 + $0x8] sm:$0xff]
        %v2940 = vld [vmem:[#allocation2 + $0x10] sm:$0xff]
        %v2941 = vld [vmem:[#allocation2 + $0x18] sm:$0xff]
        %v2942 = vld [vmem:[#allocation2 + $0x20] sm:$0xff]
        %v2943 = vld [vmem:[#allocation2 + $0x28] sm:$0xff]
        %v2944 = vld [vmem:[#allocation2 + $0x30] sm:$0xff]
        %v2945 = vld [vmem:[#allocation2 + $0x38] sm:$0xff]
        %v2946 = vld [vmem:[#allocation2 + $0x40] sm:$0xff]
        %v2947 = vld [vmem:[#allocation2 + $0x48] sm:$0xff]
        %v2948 = vld [vmem:[#allocation2 + $0x50] sm:$0xff]
        %v2949 = vld [vmem:[#allocation2 + $0x58] sm:$0xff]
        %v2950 = vld [vmem:[#allocation2 + $0x60] sm:$0xff]
        %v2951 = vld [vmem:[#allocation2 + $0x68] sm:$0xff]
        %v2952 = vld [vmem:[#allocation2 + $0x70] sm:$0xff]
        %v2953 = vld [vmem:[#allocation2 + $0x78] sm:$0xff]
        %v2954 = vadd.f32 %v2938, %v2860
        %v2955 = vadd.f32 %v2939, %v2865
        %v2956 = vadd.f32 %v2940, %v2870
        %v2957 = vadd.f32 %v2941, %v2875
        %v2958 = vadd.f32 %v2942, %v2880
        %v2959 = vadd.f32 %v2943, %v2885
        %v2960 = vadd.f32 %v2944, %v2890
        %v2961 = vadd.f32 %v2945, %v2895
        %v2962 = vadd.f32 %v2946, %v2900
        %v2963 = vadd.f32 %v2947, %v2905
        %v2964 = vadd.f32 %v2948, %v2910
        %v2965 = vadd.f32 %v2949, %v2915
        %v2966 = vadd.f32 %v2950, %v2920
        %v2967 = vadd.f32 %v2951, %v2925
        %v2968 = vadd.f32 %v2952, %v2930
        %v2969 = vadd.f32 %v2953, %v2935
        %2970 = vst [vmem:[#allocation2] sm:$0xff] %v2954
        %2971 = vst [vmem:[#allocation2 + $0x8] sm:$0xff] %v2955
        %2972 = vst [vmem:[#allocation2 + $0x10] sm:$0xff] %v2956
        %2973 = vst [vmem:[#allocation2 + $0x18] sm:$0xff] %v2957
        %2974 = vst [vmem:[#allocation2 + $0x20] sm:$0xff] %v2958
        %2975 = vst [vmem:[#allocation2 + $0x28] sm:$0xff] %v2959
        %2976 = vst [vmem:[#allocation2 + $0x30] sm:$0xff] %v2960
        %2977 = vst [vmem:[#allocation2 + $0x38] sm:$0xff] %v2961
        %2978 = vst [vmem:[#allocation2 + $0x40] sm:$0xff] %v2962
        %2979 = vst [vmem:[#allocation2 + $0x48] sm:$0xff] %v2963
        %2980 = vst [vmem:[#allocation2 + $0x50] sm:$0xff] %v2964
        %2981 = vst [vmem:[#allocation2 + $0x58] sm:$0xff] %v2965
        %2982 = vst [vmem:[#allocation2 + $0x60] sm:$0xff] %v2966
        %2983 = vst [vmem:[#allocation2 + $0x68] sm:$0xff] %v2967
        %2984 = vst [vmem:[#allocation2 + $0x70] sm:$0xff] %v2968
        %2985 = vst [vmem:[#allocation2 + $0x78] sm:$0xff] %v2969
        %s2986 = scalar_lea.vmem %s1371, 1280 [#allocation3]
        %v2987 = vld [vmem:[%s2986] sm:$0xff]
        %v2988 = vld [vmem:[%s2986 + $0x8] sm:$0xff]
        %v2989 = vld [vmem:[%s2986 + $0x10] sm:$0xff]
        %v2990 = vld [vmem:[%s2986 + $0x18] sm:$0xff]
        %v2991 = vld [vmem:[%s2986 + $0x20] sm:$0xff]
        %v2992 = vld [vmem:[%s2986 + $0x28] sm:$0xff]
        %v2993 = vld [vmem:[%s2986 + $0x30] sm:$0xff]
        %v2994 = vld [vmem:[%s2986 + $0x38] sm:$0xff]
        %v2995 = vld [vmem:[%s2986 + $0x40] sm:$0xff]
        %v2996 = vld [vmem:[%s2986 + $0x48] sm:$0xff]
        %v2997 = vld [vmem:[%s2986 + $0x50] sm:$0xff]
        %v2998 = vld [vmem:[%s2986 + $0x58] sm:$0xff]
        %v2999 = vld [vmem:[%s2986 + $0x60] sm:$0xff]
        %v3000 = vld [vmem:[%s2986 + $0x68] sm:$0xff]
        %v3001 = vld [vmem:[%s2986 + $0x70] sm:$0xff]
        %v3002 = vld [vmem:[%s2986 + $0x78] sm:$0xff]
        %v3003 = vld [vmem:[%s2986 + $0x80] sm:$0xff]
        %v3004 = vld [vmem:[%s2986 + $0x88] sm:$0xff]
        %v3005 = vld [vmem:[%s2986 + $0x90] sm:$0xff]
        %v3006 = vld [vmem:[%s2986 + $0x98] sm:$0xff]
        %v3007 = vld [vmem:[%s2986 + $0xa0] sm:$0xff]
        %v3008 = vld [vmem:[%s2986 + $0xa8] sm:$0xff]
        %v3009 = vld [vmem:[%s2986 + $0xb0] sm:$0xff]
        %v3010 = vld [vmem:[%s2986 + $0xb8] sm:$0xff]
        %v3011 = vld [vmem:[%s2986 + $0xc0] sm:$0xff]
        %v3012 = vld [vmem:[%s2986 + $0xc8] sm:$0xff]
        %v3013 = vld [vmem:[%s2986 + $0xd0] sm:$0xff]
        %v3014 = vld [vmem:[%s2986 + $0xd8] sm:$0xff]
        %v3015 = vld [vmem:[%s2986 + $0xe0] sm:$0xff]
        %v3016 = vld [vmem:[%s2986 + $0xe8] sm:$0xff]
        %v3017 = vld [vmem:[%s2986 + $0xf0] sm:$0xff]
        %v3018 = vld [vmem:[%s2986 + $0xf8] sm:$0xff]
        %3019 = vmatprep.subr.mxu0 0.0
        %3020 = vmatpush1.msra.mxu0 %v2987
        %3021 = vmatprep.subr.mxu0 0.0
        %3022 = vmatpush1.msra.mxu0 %v2988
        %3023 = vmatprep.subr.mxu0 0.0
        %3024 = vmatpush1.msra.mxu0 %v2989
        %3025 = vmatprep.subr.mxu0 0.0
        %3026 = vmatpush1.msra.mxu0 %v2990
        %3027 = vmatprep.subr.mxu0 0.0
        %3028 = vmatpush1.msra.mxu0 %v2991
        %3029 = vmatprep.subr.mxu0 0.0
        %3030 = vmatpush1.msra.mxu0 %v2992
        %3031 = vmatprep.subr.mxu0 0.0
        %3032 = vmatpush1.msra.mxu0 %v2993
        %3033 = vmatprep.subr.mxu0 0.0
        %3034 = vmatpush1.msra.mxu0 %v2994
        %3035 = vmatprep.subr.mxu0 0.0
        %3036 = vmatpush1.msra.mxu0 %v2995
        %3037 = vmatprep.subr.mxu0 0.0
        %3038 = vmatpush1.msra.mxu0 %v2996
        %3039 = vmatprep.subr.mxu0 0.0
        %3040 = vmatpush1.msra.mxu0 %v2997
        %3041 = vmatprep.subr.mxu0 0.0
        %3042 = vmatpush1.msra.mxu0 %v2998
        %3043 = vmatprep.subr.mxu0 0.0
        %3044 = vmatpush1.msra.mxu0 %v2999
        %3045 = vmatprep.subr.mxu0 0.0
        %3046 = vmatpush1.msra.mxu0 %v3000
        %3047 = vmatprep.subr.mxu0 0.0
        %3048 = vmatpush1.msra.mxu0 %v3001
        %3049 = vmatprep.subr.mxu0 0.0
        %3050 = vmatpush1.msra.mxu0 %v3002
        %3051 = vmatprep.subr.mxu0 0.0
        %3052 = vmatpush1.msra.mxu0 %v3003
        %3053 = vmatprep.subr.mxu0 0.0
        %3054 = vmatpush1.msra.mxu0 %v3004
        %3055 = vmatprep.subr.mxu0 0.0
        %3056 = vmatpush1.msra.mxu0 %v3005
        %3057 = vmatprep.subr.mxu0 0.0
        %3058 = vmatpush1.msra.mxu0 %v3006
        %3059 = vmatprep.subr.mxu0 0.0
        %3060 = vmatpush1.msra.mxu0 %v3007
        %3061 = vmatprep.subr.mxu0 0.0
        %3062 = vmatpush1.msra.mxu0 %v3008
        %3063 = vmatprep.subr.mxu0 0.0
        %3064 = vmatpush1.msra.mxu0 %v3009
        %3065 = vmatprep.subr.mxu0 0.0
        %3066 = vmatpush1.msra.mxu0 %v3010
        %3067 = vmatprep.subr.mxu0 0.0
        %3068 = vmatpush1.msra.mxu0 %v3011
        %3069 = vmatprep.subr.mxu0 0.0
        %3070 = vmatpush1.msra.mxu0 %v3012
        %3071 = vmatprep.subr.mxu0 0.0
        %3072 = vmatpush1.msra.mxu0 %v3013
        %3073 = vmatprep.subr.mxu0 0.0
        %3074 = vmatpush1.msra.mxu0 %v3014
        %3075 = vmatprep.subr.mxu0 0.0
        %3076 = vmatpush1.msra.mxu0 %v3015
        %3077 = vmatprep.subr.mxu0 0.0
        %3078 = vmatpush1.msra.mxu0 %v3016
        %3079 = vmatprep.subr.mxu0 0.0
        %3080 = vmatpush1.msra.mxu0 %v3017
        %3081 = vmatprep.subr.mxu0 0.0
        %3082 = vmatpush1.msra.mxu0 %v3018
        %3083 = vmatprep.mubr.f32.mxu0 %v1407
        %3084 = vmatmul.mubr.f32.gmra.mrb[0].mxu0 %v1406
        %v3085 = vpop.f32.mrb[0].mxu0
        %v3086 = vadd.f32 0.0, %v3085
        %v3087 = vpop.f32.mrb[0].mxu0
        %3088 = vmatprep.mubr.f32.mxu0 %v1409
        %3089 = vmatmul.mubr.f32.gmra.mrb[0].mxu0 %v1408
        %v3090 = vpop.f32.mrb[0].mxu0
        %v3091 = vadd.f32 0.0, %v3090
        %v3092 = vpop.f32.mrb[0].mxu0
        %3093 = vmatprep.mubr.f32.mxu0 %v1411
        %3094 = vmatmul.mubr.f32.gmra.mrb[0].mxu0 %v1410
        %v3095 = vpop.f32.mrb[0].mxu0
        %v3096 = vadd.f32 0.0, %v3095
        %v3097 = vpop.f32.mrb[0].mxu0
        %3098 = vmatprep.mubr.f32.mxu0 %v1413
        %3099 = vmatmul.mubr.f32.gmra.mrb[0].mxu0 %v1412
        %v3100 = vpop.f32.mrb[0].mxu0
        %v3101 = vadd.f32 0.0, %v3100
        %v3102 = vpop.f32.mrb[0].mxu0
        %3103 = vmatprep.mubr.f32.mxu0 %v1415
        %3104 = vmatmul.mubr.f32.gmra.mrb[0].mxu0 %v1414
        %v3105 = vpop.f32.mrb[0].mxu0
        %v3106 = vadd.f32 0.0, %v3105
        %v3107 = vpop.f32.mrb[0].mxu0
        %3108 = vmatprep.mubr.f32.mxu0 %v1417
        %3109 = vmatmul.mubr.f32.gmra.mrb[0].mxu0 %v1416
        %v3110 = vpop.f32.mrb[0].mxu0
        %v3111 = vadd.f32 0.0, %v3110
        %v3112 = vpop.f32.mrb[0].mxu0
        %3113 = vmatprep.mubr.f32.mxu0 %v1419
        %3114 = vmatmul.mubr.f32.gmra.mrb[0].mxu0 %v1418
        %v3115 = vpop.f32.mrb[0].mxu0
        %v3116 = vadd.f32 0.0, %v3115
        %v3117 = vpop.f32.mrb[0].mxu0
        %3118 = vmatprep.mubr.f32.mxu0 %v1421
        %3119 = vmatmul.mubr.f32.gmra.mrb[0].mxu0 %v1420
        %v3120 = vpop.f32.mrb[0].mxu0
        %v3121 = vadd.f32 0.0, %v3120
        %v3122 = vpop.f32.mrb[0].mxu0
        %3123 = vmatprep.mubr.f32.mxu0 %v1423
        %3124 = vmatmul.mubr.f32.gmra.mrb[0].mxu0 %v1422
        %v3125 = vpop.f32.mrb[0].mxu0
        %v3126 = vadd.f32 0.0, %v3125
        %v3127 = vpop.f32.mrb[0].mxu0
        %3128 = vmatprep.mubr.f32.mxu0 %v1425
        %3129 = vmatmul.mubr.f32.gmra.mrb[0].mxu0 %v1424
        %v3130 = vpop.f32.mrb[0].mxu0
        %v3131 = vadd.f32 0.0, %v3130
        %v3132 = vpop.f32.mrb[0].mxu0
        %3133 = vmatprep.mubr.f32.mxu0 %v1427
        %3134 = vmatmul.mubr.f32.gmra.mrb[0].mxu0 %v1426
        %v3135 = vpop.f32.mrb[0].mxu0
        %v3136 = vadd.f32 0.0, %v3135
        %v3137 = vpop.f32.mrb[0].mxu0
        %3138 = vmatprep.mubr.f32.mxu0 %v1429
        %3139 = vmatmul.mubr.f32.gmra.mrb[0].mxu0 %v1428
        %v3140 = vpop.f32.mrb[0].mxu0
        %v3141 = vadd.f32 0.0, %v3140
        %v3142 = vpop.f32.mrb[0].mxu0
        %3143 = vmatprep.mubr.f32.mxu0 %v1431
        %3144 = vmatmul.mubr.f32.gmra.mrb[0].mxu0 %v1430
        %v3145 = vpop.f32.mrb[0].mxu0
        %v3146 = vadd.f32 0.0, %v3145
        %v3147 = vpop.f32.mrb[0].mxu0
        %3148 = vmatprep.mubr.f32.mxu0 %v1433
        %3149 = vmatmul.mubr.f32.gmra.mrb[0].mxu0 %v1432
        %v3150 = vpop.f32.mrb[0].mxu0
        %v3151 = vadd.f32 0.0, %v3150
        %v3152 = vpop.f32.mrb[0].mxu0
        %3153 = vmatprep.mubr.f32.mxu0 %v1435
        %3154 = vmatmul.mubr.f32.gmra.mrb[0].mxu0 %v1434
        %v3155 = vpop.f32.mrb[0].mxu0
        %v3156 = vadd.f32 0.0, %v3155
        %v3157 = vpop.f32.mrb[0].mxu0
        %3158 = vmatprep.mubr.f32.mxu0 %v1437
        %3159 = vmatmul.mubr.f32.gmra.mrb[0].mxu0 %v1436
        %v3160 = vpop.f32.mrb[0].mxu0
        %v3161 = vadd.f32 0.0, %v3160
        %v3162 = vpop.f32.mrb[0].mxu0
        %3163 = vdwg.mxu0
        %v3164 = vrot.slane %v3086, 1
        %v3165 = vrot.slane %v3091, 1
        %v3166 = vrot.slane %v3096, 1
        %v3167 = vrot.slane %v3101, 1
        %v3168 = vrot.slane %v3106, 1
        %v3169 = vrot.slane %v3111, 1
        %v3170 = vrot.slane %v3116, 1
        %v3171 = vrot.slane %v3121, 1
        %v3172 = vrot.slane %v3126, 1
        %v3173 = vrot.slane %v3131, 1
        %v3174 = vrot.slane %v3136, 1
        %v3175 = vrot.slane %v3141, 1
        %v3176 = vrot.slane %v3146, 1
        %v3177 = vrot.slane %v3151, 1
        %v3178 = vrot.slane %v3156, 1
        %v3179 = vrot.slane %v3161, 1
        %v3180 = vsel %vm2325, %v3178, %v3179
        %v3181 = vsel %vm2325, %v3177, %v3178
        %v3182 = vsel %vm2325, %v3176, %v3177
        %v3183 = vsel %vm2325, %v3175, %v3176
        %v3184 = vsel %vm2325, %v3174, %v3175
        %v3185 = vsel %vm2325, %v3173, %v3174
        %v3186 = vsel %vm2325, %v3172, %v3173
        %v3187 = vsel %vm2325, %v3171, %v3172
        %v3188 = vsel %vm2325, %v3170, %v3171
        %v3189 = vsel %vm2325, %v3169, %v3170
        %v3190 = vsel %vm2325, %v3168, %v3169
        %v3191 = vsel %vm2325, %v3167, %v3168
        %v3192 = vsel %vm2325, %v3166, %v3167
        %v3193 = vsel %vm2325, %v3165, %v3166
        %v3194 = vsel %vm2325, %v3164, %v3165
        %v3195 = vsel %vm2325, %v3179, %v3164
        %v3196 = vsel %vm1551, 1, 0
        %v3197 = vsel %vm1552, 1, 0
        %v3198 = vsel %vm1553, 1, 0
        %v3199 = vsel %vm1554, 1, 0
        %v3200 = vsel %vm1555, 1, 0
        %v3201 = vsel %vm1556, 1, 0
        %v3202 = vsel %vm1557, 1, 0
        %v3203 = vsel %vm1558, 1, 0
        %v3204 = vsel %vm1559, 1, 0
        %v3205 = vsel %vm1560, 1, 0
        %v3206 = vsel %vm1561, 1, 0
        %v3207 = vsel %vm1562, 1, 0
        %v3208 = vsel %vm1563, 1, 0
        %v3209 = vsel %vm1564, 1, 0
        %v3210 = vsel %vm1565, 1, 0
        %v3211 = vsel %vm1566, 1, 0
        %vm3212 = vcmp.eq.s32.totalorder %v3196, 1
        %vm3213 = vcmp.eq.s32.totalorder %v3197, 1
        %vm3214 = vcmp.eq.s32.totalorder %v3198, 1
        %vm3215 = vcmp.eq.s32.totalorder %v3199, 1
        %vm3216 = vcmp.eq.s32.totalorder %v3200, 1
        %vm3217 = vcmp.eq.s32.totalorder %v3201, 1
        %vm3218 = vcmp.eq.s32.totalorder %v3202, 1
        %vm3219 = vcmp.eq.s32.totalorder %v3203, 1
        %vm3220 = vcmp.eq.s32.totalorder %v3204, 1
        %vm3221 = vcmp.eq.s32.totalorder %v3205, 1
        %vm3222 = vcmp.eq.s32.totalorder %v3206, 1
        %vm3223 = vcmp.eq.s32.totalorder %v3207, 1
        %vm3224 = vcmp.eq.s32.totalorder %v3208, 1
        %vm3225 = vcmp.eq.s32.totalorder %v3209, 1
        %vm3226 = vcmp.eq.s32.totalorder %v3210, 1
        %vm3227 = vcmp.eq.s32.totalorder %v3211, 1
        %v3228 = vsel %vm3212, %v3194, 0.0
        %v3229 = vsel %vm3213, %v3193, 0.0
        %v3230 = vsel %vm3214, %v3192, 0.0
        %v3231 = vsel %vm3215, %v3191, 0.0
        %v3232 = vsel %vm3216, %v3190, 0.0
        %v3233 = vsel %vm3217, %v3189, 0.0
        %v3234 = vsel %vm3218, %v3188, 0.0
        %v3235 = vsel %vm3219, %v3187, 0.0
        %v3236 = vsel %vm3220, %v3186, 0.0
        %v3237 = vsel %vm3221, %v3185, 0.0
        %v3238 = vsel %vm3222, %v3184, 0.0
        %v3239 = vsel %vm3223, %v3183, 0.0
        %v3240 = vsel %vm3224, %v3182, 0.0
        %v3241 = vsel %vm3225, %v3181, 0.0
        %v3242 = vsel %vm3226, %v3180, 0.0
        %v3243 = vsel %vm3227, %v3195, 0.0
        %v3244 = vld [vmem:[#allocation2] sm:$0xff]
        %v3245 = vld [vmem:[#allocation2 + $0x8] sm:$0xff]
        %v3246 = vld [vmem:[#allocation2 + $0x10] sm:$0xff]
        %v3247 = vld [vmem:[#allocation2 + $0x18] sm:$0xff]
        %v3248 = vld [vmem:[#allocation2 + $0x20] sm:$0xff]
        %v3249 = vld [vmem:[#allocation2 + $0x28] sm:$0xff]
        %v3250 = vld [vmem:[#allocation2 + $0x30] sm:$0xff]
        %v3251 = vld [vmem:[#allocation2 + $0x38] sm:$0xff]
        %v3252 = vld [vmem:[#allocation2 + $0x40] sm:$0xff]
        %v3253 = vld [vmem:[#allocation2 + $0x48] sm:$0xff]
        %v3254 = vld [vmem:[#allocation2 + $0x50] sm:$0xff]
        %v3255 = vld [vmem:[#allocation2 + $0x58] sm:$0xff]
        %v3256 = vld [vmem:[#allocation2 + $0x60] sm:$0xff]
        %v3257 = vld [vmem:[#allocation2 + $0x68] sm:$0xff]
        %v3258 = vld [vmem:[#allocation2 + $0x70] sm:$0xff]
        %v3259 = vld [vmem:[#allocation2 + $0x78] sm:$0xff]
        %v3260 = vadd.f32 %v3244, %v3228
        %v3261 = vadd.f32 %v3245, %v3229
        %v3262 = vadd.f32 %v3246, %v3230
        %v3263 = vadd.f32 %v3247, %v3231
        %v3264 = vadd.f32 %v3248, %v3232
        %v3265 = vadd.f32 %v3249, %v3233
        %v3266 = vadd.f32 %v3250, %v3234
        %v3267 = vadd.f32 %v3251, %v3235
        %v3268 = vadd.f32 %v3252, %v3236
        %v3269 = vadd.f32 %v3253, %v3237
        %v3270 = vadd.f32 %v3254, %v3238
        %v3271 = vadd.f32 %v3255, %v3239
        %v3272 = vadd.f32 %v3256, %v3240
        %v3273 = vadd.f32 %v3257, %v3241
        %v3274 = vadd.f32 %v3258, %v3242
        %v3275 = vadd.f32 %v3259, %v3243
        %3276 = vst [vmem:[#allocation2] sm:$0xff] %v3260
        %3277 = vst [vmem:[#allocation2 + $0x8] sm:$0xff] %v3261
        %3278 = vst [vmem:[#allocation2 + $0x10] sm:$0xff] %v3262
        %3279 = vst [vmem:[#allocation2 + $0x18] sm:$0xff] %v3263
        %3280 = vst [vmem:[#allocation2 + $0x20] sm:$0xff] %v3264
        %3281 = vst [vmem:[#allocation2 + $0x28] sm:$0xff] %v3265
        %3282 = vst [vmem:[#allocation2 + $0x30] sm:$0xff] %v3266
        %3283 = vst [vmem:[#allocation2 + $0x38] sm:$0xff] %v3267
        %3284 = vst [vmem:[#allocation2 + $0x40] sm:$0xff] %v3268
        %3285 = vst [vmem:[#allocation2 + $0x48] sm:$0xff] %v3269
        %3286 = vst [vmem:[#allocation2 + $0x50] sm:$0xff] %v3270
        %3287 = vst [vmem:[#allocation2 + $0x58] sm:$0xff] %v3271
        %3288 = vst [vmem:[#allocation2 + $0x60] sm:$0xff] %v3272
        %3289 = vst [vmem:[#allocation2 + $0x68] sm:$0xff] %v3273
        %3290 = vst [vmem:[#allocation2 + $0x70] sm:$0xff] %v3274
        %3291 = vst [vmem:[#allocation2 + $0x78] sm:$0xff] %v3275
        %s3292 = scalar_lea.vmem %s1371, 1536 [#allocation3]
        %v3293 = vld [vmem:[%s3292] sm:$0xff]
        %v3294 = vld [vmem:[%s3292 + $0x8] sm:$0xff]
        %v3295 = vld [vmem:[%s3292 + $0x10] sm:$0xff]
        %v3296 = vld [vmem:[%s3292 + $0x18] sm:$0xff]
        %v3297 = vld [vmem:[%s3292 + $0x20] sm:$0xff]
        %v3298 = vld [vmem:[%s3292 + $0x28] sm:$0xff]
        %v3299 = vld [vmem:[%s3292 + $0x30] sm:$0xff]
        %v3300 = vld [vmem:[%s3292 + $0x38] sm:$0xff]
        %v3301 = vld [vmem:[%s3292 + $0x40] sm:$0xff]
        %v3302 = vld [vmem:[%s3292 + $0x48] sm:$0xff]
        %v3303 = vld [vmem:[%s3292 + $0x50] sm:$0xff]
        %v3304 = vld [vmem:[%s3292 + $0x58] sm:$0xff]
        %v3305 = vld [vmem:[%s3292 + $0x60] sm:$0xff]
        %v3306 = vld [vmem:[%s3292 + $0x68] sm:$0xff]
        %v3307 = vld [vmem:[%s3292 + $0x70] sm:$0xff]
        %v3308 = vld [vmem:[%s3292 + $0x78] sm:$0xff]
        %v3309 = vld [vmem:[%s3292 + $0x80] sm:$0xff]
        %v3310 = vld [vmem:[%s3292 + $0x88] sm:$0xff]
        %v3311 = vld [vmem:[%s3292 + $0x90] sm:$0xff]
        %v3312 = vld [vmem:[%s3292 + $0x98] sm:$0xff]
        %v3313 = vld [vmem:[%s3292 + $0xa0] sm:$0xff]
        %v3314 = vld [vmem:[%s3292 + $0xa8] sm:$0xff]
        %v3315 = vld [vmem:[%s3292 + $0xb0] sm:$0xff]
        %v3316 = vld [vmem:[%s3292 + $0xb8] sm:$0xff]
        %v3317 = vld [vmem:[%s3292 + $0xc0] sm:$0xff]
        %v3318 = vld [vmem:[%s3292 + $0xc8] sm:$0xff]
        %v3319 = vld [vmem:[%s3292 + $0xd0] sm:$0xff]
        %v3320 = vld [vmem:[%s3292 + $0xd8] sm:$0xff]
        %v3321 = vld [vmem:[%s3292 + $0xe0] sm:$0xff]
        %v3322 = vld [vmem:[%s3292 + $0xe8] sm:$0xff]
        %v3323 = vld [vmem:[%s3292 + $0xf0] sm:$0xff]
        %v3324 = vld [vmem:[%s3292 + $0xf8] sm:$0xff]
        %3325 = vmatprep.subr.mxu0 0.0
        %3326 = vmatpush1.msra.mxu0 %v3293
        %3327 = vmatprep.subr.mxu0 0.0
        %3328 = vmatpush1.msra.mxu0 %v3294
        %3329 = vmatprep.subr.mxu0 0.0
        %3330 = vmatpush1.msra.mxu0 %v3295
        %3331 = vmatprep.subr.mxu0 0.0
        %3332 = vmatpush1.msra.mxu0 %v3296
        %3333 = vmatprep.subr.mxu0 0.0
        %3334 = vmatpush1.msra.mxu0 %v3297
        %3335 = vmatprep.subr.mxu0 0.0
        %3336 = vmatpush1.msra.mxu0 %v3298
        %3337 = vmatprep.subr.mxu0 0.0
        %3338 = vmatpush1.msra.mxu0 %v3299
        %3339 = vmatprep.subr.mxu0 0.0
        %3340 = vmatpush1.msra.mxu0 %v3300
        %3341 = vmatprep.subr.mxu0 0.0
        %3342 = vmatpush1.msra.mxu0 %v3301
        %3343 = vmatprep.subr.mxu0 0.0
        %3344 = vmatpush1.msra.mxu0 %v3302
        %3345 = vmatprep.subr.mxu0 0.0
        %3346 = vmatpush1.msra.mxu0 %v3303
        %3347 = vmatprep.subr.mxu0 0.0
        %3348 = vmatpush1.msra.mxu0 %v3304
        %3349 = vmatprep.subr.mxu0 0.0
        %3350 = vmatpush1.msra.mxu0 %v3305
        %3351 = vmatprep.subr.mxu0 0.0
        %3352 = vmatpush1.msra.mxu0 %v3306
        %3353 = vmatprep.subr.mxu0 0.0
        %3354 = vmatpush1.msra.mxu0 %v3307
        %3355 = vmatprep.subr.mxu0 0.0
        %3356 = vmatpush1.msra.mxu0 %v3308
        %3357 = vmatprep.subr.mxu0 0.0
        %3358 = vmatpush1.msra.mxu0 %v3309
        %3359 = vmatprep.subr.mxu0 0.0
        %3360 = vmatpush1.msra.mxu0 %v3310
        %3361 = vmatprep.subr.mxu0 0.0
        %3362 = vmatpush1.msra.mxu0 %v3311
        %3363 = vmatprep.subr.mxu0 0.0
        %3364 = vmatpush1.msra.mxu0 %v3312
        %3365 = vmatprep.subr.mxu0 0.0
        %3366 = vmatpush1.msra.mxu0 %v3313
        %3367 = vmatprep.subr.mxu0 0.0
        %3368 = vmatpush1.msra.mxu0 %v3314
        %3369 = vmatprep.subr.mxu0 0.0
        %3370 = vmatpush1.msra.mxu0 %v3315
        %3371 = vmatprep.subr.mxu0 0.0
        %3372 = vmatpush1.msra.mxu0 %v3316
        %3373 = vmatprep.subr.mxu0 0.0
        %3374 = vmatpush1.msra.mxu0 %v3317
        %3375 = vmatprep.subr.mxu0 0.0
        %3376 = vmatpush1.msra.mxu0 %v3318
        %3377 = vmatprep.subr.mxu0 0.0
        %3378 = vmatpush1.msra.mxu0 %v3319
        %3379 = vmatprep.subr.mxu0 0.0
        %3380 = vmatpush1.msra.mxu0 %v3320
        %3381 = vmatprep.subr.mxu0 0.0
        %3382 = vmatpush1.msra.mxu0 %v3321
        %3383 = vmatprep.subr.mxu0 0.0
        %3384 = vmatpush1.msra.mxu0 %v3322
        %3385 = vmatprep.subr.mxu0 0.0
        %3386 = vmatpush1.msra.mxu0 %v3323
        %3387 = vmatprep.subr.mxu0 0.0
        %3388 = vmatpush1.msra.mxu0 %v3324
        %3389 = vmatprep.mubr.f32.mxu0 %v1407
        %3390 = vmatmul.mubr.f32.gmra.mrb[0].mxu0 %v1406
        %v3391 = vpop.f32.mrb[0].mxu0
        %v3392 = vadd.f32 0.0, %v3391
        %v3393 = vpop.f32.mrb[0].mxu0
        %3394 = vmatprep.mubr.f32.mxu0 %v1409
        %3395 = vmatmul.mubr.f32.gmra.mrb[0].mxu0 %v1408
        %v3396 = vpop.f32.mrb[0].mxu0
        %v3397 = vadd.f32 0.0, %v3396
        %v3398 = vpop.f32.mrb[0].mxu0
        %3399 = vmatprep.mubr.f32.mxu0 %v1411
        %3400 = vmatmul.mubr.f32.gmra.mrb[0].mxu0 %v1410
        %v3401 = vpop.f32.mrb[0].mxu0
        %v3402 = vadd.f32 0.0, %v3401
        %v3403 = vpop.f32.mrb[0].mxu0
        %3404 = vmatprep.mubr.f32.mxu0 %v1413
        %3405 = vmatmul.mubr.f32.gmra.mrb[0].mxu0 %v1412
        %v3406 = vpop.f32.mrb[0].mxu0
        %v3407 = vadd.f32 0.0, %v3406
        %v3408 = vpop.f32.mrb[0].mxu0
        %3409 = vmatprep.mubr.f32.mxu0 %v1415
        %3410 = vmatmul.mubr.f32.gmra.mrb[0].mxu0 %v1414
        %v3411 = vpop.f32.mrb[0].mxu0
        %v3412 = vadd.f32 0.0, %v3411
        %v3413 = vpop.f32.mrb[0].mxu0
        %3414 = vmatprep.mubr.f32.mxu0 %v1417
        %3415 = vmatmul.mubr.f32.gmra.mrb[0].mxu0 %v1416
        %v3416 = vpop.f32.mrb[0].mxu0
        %v3417 = vadd.f32 0.0, %v3416
        %v3418 = vpop.f32.mrb[0].mxu0
        %3419 = vmatprep.mubr.f32.mxu0 %v1419
        %3420 = vmatmul.mubr.f32.gmra.mrb[0].mxu0 %v1418
        %v3421 = vpop.f32.mrb[0].mxu0
        %v3422 = vadd.f32 0.0, %v3421
        %v3423 = vpop.f32.mrb[0].mxu0
        %3424 = vmatprep.mubr.f32.mxu0 %v1421
        %3425 = vmatmul.mubr.f32.gmra.mrb[0].mxu0 %v1420
        %v3426 = vpop.f32.mrb[0].mxu0
        %v3427 = vadd.f32 0.0, %v3426
        %v3428 = vpop.f32.mrb[0].mxu0
        %3429 = vmatprep.mubr.f32.mxu0 %v1423
        %3430 = vmatmul.mubr.f32.gmra.mrb[0].mxu0 %v1422
        %v3431 = vpop.f32.mrb[0].mxu0
        %v3432 = vadd.f32 0.0, %v3431
        %v3433 = vpop.f32.mrb[0].mxu0
        %3434 = vmatprep.mubr.f32.mxu0 %v1425
        %3435 = vmatmul.mubr.f32.gmra.mrb[0].mxu0 %v1424
        %v3436 = vpop.f32.mrb[0].mxu0
        %v3437 = vadd.f32 0.0, %v3436
        %v3438 = vpop.f32.mrb[0].mxu0
        %3439 = vmatprep.mubr.f32.mxu0 %v1427
        %3440 = vmatmul.mubr.f32.gmra.mrb[0].mxu0 %v1426
        %v3441 = vpop.f32.mrb[0].mxu0
        %v3442 = vadd.f32 0.0, %v3441
        %v3443 = vpop.f32.mrb[0].mxu0
        %3444 = vmatprep.mubr.f32.mxu0 %v1429
        %3445 = vmatmul.mubr.f32.gmra.mrb[0].mxu0 %v1428
        %v3446 = vpop.f32.mrb[0].mxu0
        %v3447 = vadd.f32 0.0, %v3446
        %v3448 = vpop.f32.mrb[0].mxu0
        %3449 = vmatprep.mubr.f32.mxu0 %v1431
        %3450 = vmatmul.mubr.f32.gmra.mrb[0].mxu0 %v1430
        %v3451 = vpop.f32.mrb[0].mxu0
        %v3452 = vadd.f32 0.0, %v3451
        %v3453 = vpop.f32.mrb[0].mxu0
        %3454 = vmatprep.mubr.f32.mxu0 %v1433
        %3455 = vmatmul.mubr.f32.gmra.mrb[0].mxu0 %v1432
        %v3456 = vpop.f32.mrb[0].mxu0
        %v3457 = vadd.f32 0.0, %v3456
        %v3458 = vpop.f32.mrb[0].mxu0
        %3459 = vmatprep.mubr.f32.mxu0 %v1435
        %3460 = vmatmul.mubr.f32.gmra.mrb[0].mxu0 %v1434
        %v3461 = vpop.f32.mrb[0].mxu0
        %v3462 = vadd.f32 0.0, %v3461
        %v3463 = vpop.f32.mrb[0].mxu0
        %3464 = vmatprep.mubr.f32.mxu0 %v1437
        %3465 = vmatmul.mubr.f32.gmra.mrb[0].mxu0 %v1436
        %v3466 = vpop.f32.mrb[0].mxu0
        %v3467 = vadd.f32 0.0, %v3466
        %v3468 = vpop.f32.mrb[0].mxu0
        %3469 = vdwg.mxu0
        %v3470 = vrot.slane %v3392, 7
        %v3471 = vrot.slane %v3397, 7
        %v3472 = vrot.slane %v3402, 7
        %v3473 = vrot.slane %v3407, 7
        %v3474 = vrot.slane %v3412, 7
        %v3475 = vrot.slane %v3417, 7
        %v3476 = vrot.slane %v3422, 7
        %v3477 = vrot.slane %v3427, 7
        %v3478 = vrot.slane %v3432, 7
        %v3479 = vrot.slane %v3437, 7
        %v3480 = vrot.slane %v3442, 7
        %v3481 = vrot.slane %v3447, 7
        %v3482 = vrot.slane %v3452, 7
        %v3483 = vrot.slane %v3457, 7
        %v3484 = vrot.slane %v3462, 7
        %v3485 = vrot.slane %v3467, 7
        %v3486 = vsel %vm1760, %v3484, %v3485
        %v3487 = vsel %vm1760, %v3483, %v3484
        %v3488 = vsel %vm1760, %v3482, %v3483
        %v3489 = vsel %vm1760, %v3481, %v3482
        %v3490 = vsel %vm1760, %v3480, %v3481
        %v3491 = vsel %vm1760, %v3479, %v3480
        %v3492 = vsel %vm1760, %v3478, %v3479
        %v3493 = vsel %vm1760, %v3477, %v3478
        %v3494 = vsel %vm1760, %v3476, %v3477
        %v3495 = vsel %vm1760, %v3475, %v3476
        %v3496 = vsel %vm1760, %v3474, %v3475
        %v3497 = vsel %vm1760, %v3473, %v3474
        %v3498 = vsel %vm1760, %v3472, %v3473
        %v3499 = vsel %vm1760, %v3471, %v3472
        %v3500 = vsel %vm1760, %v3470, %v3471
        %v3501 = vsel %vm1760, %v3485, %v3470
        %vm3502 = vmand %vm1519, %vm1535
        %vm3503 = vmand %vm1520, %vm1536
        %vm3504 = vmand %vm1521, %vm1537
        %vm3505 = vmand %vm1522, %vm1538
        %vm3506 = vmand %vm1523, %vm1539
        %vm3507 = vmand %vm1524, %vm1540
        %vm3508 = vmand %vm1525, %vm1541
        %vm3509 = vmand %vm1526, %vm1542
        %vm3510 = vmand %vm1527, %vm1543
        %vm3511 = vmand %vm1528, %vm1544
        %vm3512 = vmand %vm1529, %vm1545
        %vm3513 = vmand %vm1530, %vm1546
        %vm3514 = vmand %vm1531, %vm1547
        %vm3515 = vmand %vm1532, %vm1548
        %vm3516 = vmand %vm1533, %vm1549
        %vm3517 = vmand %vm1534, %vm1550
        %v3518 = vsel %vm3502, 1, 0
        %v3519 = vsel %vm3503, 1, 0
        %v3520 = vsel %vm3504, 1, 0
        %v3521 = vsel %vm3505, 1, 0
        %v3522 = vsel %vm3506, 1, 0
        %v3523 = vsel %vm3507, 1, 0
        %v3524 = vsel %vm3508, 1, 0
        %v3525 = vsel %vm3509, 1, 0
        %v3526 = vsel %vm3510, 1, 0
        %v3527 = vsel %vm3511, 1, 0
        %v3528 = vsel %vm3512, 1, 0
        %v3529 = vsel %vm3513, 1, 0
        %v3530 = vsel %vm3514, 1, 0
        %v3531 = vsel %vm3515, 1, 0
        %v3532 = vsel %vm3516, 1, 0
        %v3533 = vsel %vm3517, 1, 0
        %vm3534 = vcmp.eq.s32.totalorder %v3518, 1
        %vm3535 = vcmp.eq.s32.totalorder %v3519, 1
        %vm3536 = vcmp.eq.s32.totalorder %v3520, 1
        %vm3537 = vcmp.eq.s32.totalorder %v3521, 1
        %vm3538 = vcmp.eq.s32.totalorder %v3522, 1
        %vm3539 = vcmp.eq.s32.totalorder %v3523, 1
        %vm3540 = vcmp.eq.s32.totalorder %v3524, 1
        %vm3541 = vcmp.eq.s32.totalorder %v3525, 1
        %vm3542 = vcmp.eq.s32.totalorder %v3526, 1
        %vm3543 = vcmp.eq.s32.totalorder %v3527, 1
        %vm3544 = vcmp.eq.s32.totalorder %v3528, 1
        %vm3545 = vcmp.eq.s32.totalorder %v3529, 1
        %vm3546 = vcmp.eq.s32.totalorder %v3530, 1
        %vm3547 = vcmp.eq.s32.totalorder %v3531, 1
        %vm3548 = vcmp.eq.s32.totalorder %v3532, 1
        %vm3549 = vcmp.eq.s32.totalorder %v3533, 1
        %v3550 = vsel %vm3534, %v3500, 0.0
        %v3551 = vsel %vm3535, %v3499, 0.0
        %v3552 = vsel %vm3536, %v3498, 0.0
        %v3553 = vsel %vm3537, %v3497, 0.0
        %v3554 = vsel %vm3538, %v3496, 0.0
        %v3555 = vsel %vm3539, %v3495, 0.0
        %v3556 = vsel %vm3540, %v3494, 0.0
        %v3557 = vsel %vm3541, %v3493, 0.0
        %v3558 = vsel %vm3542, %v3492, 0.0
        %v3559 = vsel %vm3543, %v3491, 0.0
        %v3560 = vsel %vm3544, %v3490, 0.0
        %v3561 = vsel %vm3545, %v3489, 0.0
        %v3562 = vsel %vm3546, %v3488, 0.0
        %v3563 = vsel %vm3547, %v3487, 0.0
        %v3564 = vsel %vm3548, %v3486, 0.0
        %v3565 = vsel %vm3549, %v3501, 0.0
        %v3566 = vld [vmem:[#allocation2] sm:$0xff]
        %v3567 = vld [vmem:[#allocation2 + $0x8] sm:$0xff]
        %v3568 = vld [vmem:[#allocation2 + $0x10] sm:$0xff]
        %v3569 = vld [vmem:[#allocation2 + $0x18] sm:$0xff]
        %v3570 = vld [vmem:[#allocation2 + $0x20] sm:$0xff]
        %v3571 = vld [vmem:[#allocation2 + $0x28] sm:$0xff]
        %v3572 = vld [vmem:[#allocation2 + $0x30] sm:$0xff]
        %v3573 = vld [vmem:[#allocation2 + $0x38] sm:$0xff]
        %v3574 = vld [vmem:[#allocation2 + $0x40] sm:$0xff]
        %v3575 = vld [vmem:[#allocation2 + $0x48] sm:$0xff]
        %v3576 = vld [vmem:[#allocation2 + $0x50] sm:$0xff]
        %v3577 = vld [vmem:[#allocation2 + $0x58] sm:$0xff]
        %v3578 = vld [vmem:[#allocation2 + $0x60] sm:$0xff]
        %v3579 = vld [vmem:[#allocation2 + $0x68] sm:$0xff]
        %v3580 = vld [vmem:[#allocation2 + $0x70] sm:$0xff]
        %v3581 = vld [vmem:[#allocation2 + $0x78] sm:$0xff]
        %v3582 = vadd.f32 %v3566, %v3550
        %v3583 = vadd.f32 %v3567, %v3551
        %v3584 = vadd.f32 %v3568, %v3552
        %v3585 = vadd.f32 %v3569, %v3553
        %v3586 = vadd.f32 %v3570, %v3554
        %v3587 = vadd.f32 %v3571, %v3555
        %v3588 = vadd.f32 %v3572, %v3556
        %v3589 = vadd.f32 %v3573, %v3557
        %v3590 = vadd.f32 %v3574, %v3558
        %v3591 = vadd.f32 %v3575, %v3559
        %v3592 = vadd.f32 %v3576, %v3560
        %v3593 = vadd.f32 %v3577, %v3561
        %v3594 = vadd.f32 %v3578, %v3562
        %v3595 = vadd.f32 %v3579, %v3563
        %v3596 = vadd.f32 %v3580, %v3564
        %v3597 = vadd.f32 %v3581, %v3565
        %3598 = vst [vmem:[#allocation2] sm:$0xff] %v3582
        %3599 = vst [vmem:[#allocation2 + $0x8] sm:$0xff] %v3583
        %3600 = vst [vmem:[#allocation2 + $0x10] sm:$0xff] %v3584
        %3601 = vst [vmem:[#allocation2 + $0x18] sm:$0xff] %v3585
        %3602 = vst [vmem:[#allocation2 + $0x20] sm:$0xff] %v3586
        %3603 = vst [vmem:[#allocation2 + $0x28] sm:$0xff] %v3587
        %3604 = vst [vmem:[#allocation2 + $0x30] sm:$0xff] %v3588
        %3605 = vst [vmem:[#allocation2 + $0x38] sm:$0xff] %v3589
        %3606 = vst [vmem:[#allocation2 + $0x40] sm:$0xff] %v3590
        %3607 = vst [vmem:[#allocation2 + $0x48] sm:$0xff] %v3591
        %3608 = vst [vmem:[#allocation2 + $0x50] sm:$0xff] %v3592
        %3609 = vst [vmem:[#allocation2 + $0x58] sm:$0xff] %v3593
        %3610 = vst [vmem:[#allocation2 + $0x60] sm:$0xff] %v3594
        %3611 = vst [vmem:[#allocation2 + $0x68] sm:$0xff] %v3595
        %3612 = vst [vmem:[#allocation2 + $0x70] sm:$0xff] %v3596
        %3613 = vst [vmem:[#allocation2 + $0x78] sm:$0xff] %v3597
        %s3614 = scalar_lea.vmem %s1371, 1792 [#allocation3]
        %v3615 = vld [vmem:[%s3614] sm:$0xff]
        %v3616 = vld [vmem:[%s3614 + $0x8] sm:$0xff]
        %v3617 = vld [vmem:[%s3614 + $0x10] sm:$0xff]
        %v3618 = vld [vmem:[%s3614 + $0x18] sm:$0xff]
        %v3619 = vld [vmem:[%s3614 + $0x20] sm:$0xff]
        %v3620 = vld [vmem:[%s3614 + $0x28] sm:$0xff]
        %v3621 = vld [vmem:[%s3614 + $0x30] sm:$0xff]
        %v3622 = vld [vmem:[%s3614 + $0x38] sm:$0xff]
        %v3623 = vld [vmem:[%s3614 + $0x40] sm:$0xff]
        %v3624 = vld [vmem:[%s3614 + $0x48] sm:$0xff]
        %v3625 = vld [vmem:[%s3614 + $0x50] sm:$0xff]
        %v3626 = vld [vmem:[%s3614 + $0x58] sm:$0xff]
        %v3627 = vld [vmem:[%s3614 + $0x60] sm:$0xff]
        %v3628 = vld [vmem:[%s3614 + $0x68] sm:$0xff]
        %v3629 = vld [vmem:[%s3614 + $0x70] sm:$0xff]
        %v3630 = vld [vmem:[%s3614 + $0x78] sm:$0xff]
        %v3631 = vld [vmem:[%s3614 + $0x80] sm:$0xff]
        %v3632 = vld [vmem:[%s3614 + $0x88] sm:$0xff]
        %v3633 = vld [vmem:[%s3614 + $0x90] sm:$0xff]
        %v3634 = vld [vmem:[%s3614 + $0x98] sm:$0xff]
        %v3635 = vld [vmem:[%s3614 + $0xa0] sm:$0xff]
        %v3636 = vld [vmem:[%s3614 + $0xa8] sm:$0xff]
        %v3637 = vld [vmem:[%s3614 + $0xb0] sm:$0xff]
        %v3638 = vld [vmem:[%s3614 + $0xb8] sm:$0xff]
        %v3639 = vld [vmem:[%s3614 + $0xc0] sm:$0xff]
        %v3640 = vld [vmem:[%s3614 + $0xc8] sm:$0xff]
        %v3641 = vld [vmem:[%s3614 + $0xd0] sm:$0xff]
        %v3642 = vld [vmem:[%s3614 + $0xd8] sm:$0xff]
        %v3643 = vld [vmem:[%s3614 + $0xe0] sm:$0xff]
        %v3644 = vld [vmem:[%s3614 + $0xe8] sm:$0xff]
        %v3645 = vld [vmem:[%s3614 + $0xf0] sm:$0xff]
        %v3646 = vld [vmem:[%s3614 + $0xf8] sm:$0xff]
        %3647 = vmatprep.subr.mxu0 0.0
        %3648 = vmatpush1.msra.mxu0 %v3615
        %3649 = vmatprep.subr.mxu0 0.0
        %3650 = vmatpush1.msra.mxu0 %v3616
        %3651 = vmatprep.subr.mxu0 0.0
        %3652 = vmatpush1.msra.mxu0 %v3617
        %3653 = vmatprep.subr.mxu0 0.0
        %3654 = vmatpush1.msra.mxu0 %v3618
        %3655 = vmatprep.subr.mxu0 0.0
        %3656 = vmatpush1.msra.mxu0 %v3619
        %3657 = vmatprep.subr.mxu0 0.0
        %3658 = vmatpush1.msra.mxu0 %v3620
        %3659 = vmatprep.subr.mxu0 0.0
        %3660 = vmatpush1.msra.mxu0 %v3621
        %3661 = vmatprep.subr.mxu0 0.0
        %3662 = vmatpush1.msra.mxu0 %v3622
        %3663 = vmatprep.subr.mxu0 0.0
        %3664 = vmatpush1.msra.mxu0 %v3623
        %3665 = vmatprep.subr.mxu0 0.0
        %3666 = vmatpush1.msra.mxu0 %v3624
        %3667 = vmatprep.subr.mxu0 0.0
        %3668 = vmatpush1.msra.mxu0 %v3625
        %3669 = vmatprep.subr.mxu0 0.0
        %3670 = vmatpush1.msra.mxu0 %v3626
        %3671 = vmatprep.subr.mxu0 0.0
        %3672 = vmatpush1.msra.mxu0 %v3627
        %3673 = vmatprep.subr.mxu0 0.0
        %3674 = vmatpush1.msra.mxu0 %v3628
        %3675 = vmatprep.subr.mxu0 0.0
        %3676 = vmatpush1.msra.mxu0 %v3629
        %3677 = vmatprep.subr.mxu0 0.0
        %3678 = vmatpush1.msra.mxu0 %v3630
        %3679 = vmatprep.subr.mxu0 0.0
        %3680 = vmatpush1.msra.mxu0 %v3631
        %3681 = vmatprep.subr.mxu0 0.0
        %3682 = vmatpush1.msra.mxu0 %v3632
        %3683 = vmatprep.subr.mxu0 0.0
        %3684 = vmatpush1.msra.mxu0 %v3633
        %3685 = vmatprep.subr.mxu0 0.0
        %3686 = vmatpush1.msra.mxu0 %v3634
        %3687 = vmatprep.subr.mxu0 0.0
        %3688 = vmatpush1.msra.mxu0 %v3635
        %3689 = vmatprep.subr.mxu0 0.0
        %3690 = vmatpush1.msra.mxu0 %v3636
        %3691 = vmatprep.subr.mxu0 0.0
        %3692 = vmatpush1.msra.mxu0 %v3637
        %3693 = vmatprep.subr.mxu0 0.0
        %3694 = vmatpush1.msra.mxu0 %v3638
        %3695 = vmatprep.subr.mxu0 0.0
        %3696 = vmatpush1.msra.mxu0 %v3639
        %3697 = vmatprep.subr.mxu0 0.0
        %3698 = vmatpush1.msra.mxu0 %v3640
        %3699 = vmatprep.subr.mxu0 0.0
        %3700 = vmatpush1.msra.mxu0 %v3641
        %3701 = vmatprep.subr.mxu0 0.0
        %3702 = vmatpush1.msra.mxu0 %v3642
        %3703 = vmatprep.subr.mxu0 0.0
        %3704 = vmatpush1.msra.mxu0 %v3643
        %3705 = vmatprep.subr.mxu0 0.0
        %3706 = vmatpush1.msra.mxu0 %v3644
        %3707 = vmatprep.subr.mxu0 0.0
        %3708 = vmatpush1.msra.mxu0 %v3645
        %3709 = vmatprep.subr.mxu0 0.0
        %3710 = vmatpush1.msra.mxu0 %v3646
        %3711 = vmatprep.mubr.f32.mxu0 %v1407
        %3712 = vmatmul.mubr.f32.gmra.mrb[0].mxu0 %v1406
        %v3713 = vpop.f32.mrb[0].mxu0
        %v3714 = vadd.f32 0.0, %v3713
        %v3715 = vpop.f32.mrb[0].mxu0
        %3716 = vmatprep.mubr.f32.mxu0 %v1409
        %3717 = vmatmul.mubr.f32.gmra.mrb[0].mxu0 %v1408
        %v3718 = vpop.f32.mrb[0].mxu0
        %v3719 = vadd.f32 0.0, %v3718
        %v3720 = vpop.f32.mrb[0].mxu0
        %3721 = vmatprep.mubr.f32.mxu0 %v1411
        %3722 = vmatmul.mubr.f32.gmra.mrb[0].mxu0 %v1410
        %v3723 = vpop.f32.mrb[0].mxu0
        %v3724 = vadd.f32 0.0, %v3723
        %v3725 = vpop.f32.mrb[0].mxu0
        %3726 = vmatprep.mubr.f32.mxu0 %v1413
        %3727 = vmatmul.mubr.f32.gmra.mrb[0].mxu0 %v1412
        %v3728 = vpop.f32.mrb[0].mxu0
        %v3729 = vadd.f32 0.0, %v3728
        %v3730 = vpop.f32.mrb[0].mxu0
        %3731 = vmatprep.mubr.f32.mxu0 %v1415
        %3732 = vmatmul.mubr.f32.gmra.mrb[0].mxu0 %v1414
        %v3733 = vpop.f32.mrb[0].mxu0
        %v3734 = vadd.f32 0.0, %v3733
        %v3735 = vpop.f32.mrb[0].mxu0
        %3736 = vmatprep.mubr.f32.mxu0 %v1417
        %3737 = vmatmul.mubr.f32.gmra.mrb[0].mxu0 %v1416
        %v3738 = vpop.f32.mrb[0].mxu0
        %v3739 = vadd.f32 0.0, %v3738
        %v3740 = vpop.f32.mrb[0].mxu0
        %3741 = vmatprep.mubr.f32.mxu0 %v1419
        %3742 = vmatmul.mubr.f32.gmra.mrb[0].mxu0 %v1418
        %v3743 = vpop.f32.mrb[0].mxu0
        %v3744 = vadd.f32 0.0, %v3743
        %v3745 = vpop.f32.mrb[0].mxu0
        %3746 = vmatprep.mubr.f32.mxu0 %v1421
        %3747 = vmatmul.mubr.f32.gmra.mrb[0].mxu0 %v1420
        %v3748 = vpop.f32.mrb[0].mxu0
        %v3749 = vadd.f32 0.0, %v3748
        %v3750 = vpop.f32.mrb[0].mxu0
        %3751 = vmatprep.mubr.f32.mxu0 %v1423
        %3752 = vmatmul.mubr.f32.gmra.mrb[0].mxu0 %v1422
        %v3753 = vpop.f32.mrb[0].mxu0
        %v3754 = vadd.f32 0.0, %v3753
        %v3755 = vpop.f32.mrb[0].mxu0
        %3756 = vmatprep.mubr.f32.mxu0 %v1425
        %3757 = vmatmul.mubr.f32.gmra.mrb[0].mxu0 %v1424
        %v3758 = vpop.f32.mrb[0].mxu0
        %v3759 = vadd.f32 0.0, %v3758
        %v3760 = vpop.f32.mrb[0].mxu0
        %3761 = vmatprep.mubr.f32.mxu0 %v1427
        %3762 = vmatmul.mubr.f32.gmra.mrb[0].mxu0 %v1426
        %v3763 = vpop.f32.mrb[0].mxu0
        %v3764 = vadd.f32 0.0, %v3763
        %v3765 = vpop.f32.mrb[0].mxu0
        %3766 = vmatprep.mubr.f32.mxu0 %v1429
        %3767 = vmatmul.mubr.f32.gmra.mrb[0].mxu0 %v1428
        %v3768 = vpop.f32.mrb[0].mxu0
        %v3769 = vadd.f32 0.0, %v3768
        %v3770 = vpop.f32.mrb[0].mxu0
        %3771 = vmatprep.mubr.f32.mxu0 %v1431
        %3772 = vmatmul.mubr.f32.gmra.mrb[0].mxu0 %v1430
        %v3773 = vpop.f32.mrb[0].mxu0
        %v3774 = vadd.f32 0.0, %v3773
        %v3775 = vpop.f32.mrb[0].mxu0
        %3776 = vmatprep.mubr.f32.mxu0 %v1433
        %3777 = vmatmul.mubr.f32.gmra.mrb[0].mxu0 %v1432
        %v3778 = vpop.f32.mrb[0].mxu0
        %v3779 = vadd.f32 0.0, %v3778
        %v3780 = vpop.f32.mrb[0].mxu0
        %3781 = vmatprep.mubr.f32.mxu0 %v1435
        %3782 = vmatmul.mubr.f32.gmra.mrb[0].mxu0 %v1434
        %v3783 = vpop.f32.mrb[0].mxu0
        %v3784 = vadd.f32 0.0, %v3783
        %v3785 = vpop.f32.mrb[0].mxu0
        %3786 = vmatprep.mubr.f32.mxu0 %v1437
        %3787 = vmatmul.mubr.f32.gmra.mrb[0].mxu0 %v1436
        %v3788 = vpop.f32.mrb[0].mxu0
        %v3789 = vadd.f32 0.0, %v3788
        %v3790 = vpop.f32.mrb[0].mxu0
        %3791 = vdwg.mxu0
        %v3792 = vsel %vm1519, 1, 0
        %v3793 = vsel %vm1520, 1, 0
        %v3794 = vsel %vm1521, 1, 0
        %v3795 = vsel %vm1522, 1, 0
        %v3796 = vsel %vm1523, 1, 0
        %v3797 = vsel %vm1524, 1, 0
        %v3798 = vsel %vm1525, 1, 0
        %v3799 = vsel %vm1526, 1, 0
        %v3800 = vsel %vm1527, 1, 0
        %v3801 = vsel %vm1528, 1, 0
        %v3802 = vsel %vm1529, 1, 0
        %v3803 = vsel %vm1530, 1, 0
        %v3804 = vsel %vm1531, 1, 0
        %v3805 = vsel %vm1532, 1, 0
        %v3806 = vsel %vm1533, 1, 0
        %v3807 = vsel %vm1534, 1, 0
        %vm3808 = vcmp.eq.s32.totalorder %v3792, 1
        %vm3809 = vcmp.eq.s32.totalorder %v3793, 1
        %vm3810 = vcmp.eq.s32.totalorder %v3794, 1
        %vm3811 = vcmp.eq.s32.totalorder %v3795, 1
        %vm3812 = vcmp.eq.s32.totalorder %v3796, 1
        %vm3813 = vcmp.eq.s32.totalorder %v3797, 1
        %vm3814 = vcmp.eq.s32.totalorder %v3798, 1
        %vm3815 = vcmp.eq.s32.totalorder %v3799, 1
        %vm3816 = vcmp.eq.s32.totalorder %v3800, 1
        %vm3817 = vcmp.eq.s32.totalorder %v3801, 1
        %vm3818 = vcmp.eq.s32.totalorder %v3802, 1
        %vm3819 = vcmp.eq.s32.totalorder %v3803, 1
        %vm3820 = vcmp.eq.s32.totalorder %v3804, 1
        %vm3821 = vcmp.eq.s32.totalorder %v3805, 1
        %vm3822 = vcmp.eq.s32.totalorder %v3806, 1
        %vm3823 = vcmp.eq.s32.totalorder %v3807, 1
        %v3824 = vsel %vm3808, %v3719, 0.0
        %v3825 = vsel %vm3809, %v3724, 0.0
        %v3826 = vsel %vm3810, %v3729, 0.0
        %v3827 = vsel %vm3811, %v3734, 0.0
        %v3828 = vsel %vm3812, %v3739, 0.0
        %v3829 = vsel %vm3813, %v3744, 0.0
        %v3830 = vsel %vm3814, %v3749, 0.0
        %v3831 = vsel %vm3815, %v3754, 0.0
        %v3832 = vsel %vm3816, %v3759, 0.0
        %v3833 = vsel %vm3817, %v3764, 0.0
        %v3834 = vsel %vm3818, %v3769, 0.0
        %v3835 = vsel %vm3819, %v3774, 0.0
        %v3836 = vsel %vm3820, %v3779, 0.0
        %v3837 = vsel %vm3821, %v3784, 0.0
        %v3838 = vsel %vm3822, %v3789, 0.0
        %v3839 = vsel %vm3823, %v3714, 0.0
        %v3840 = vld [vmem:[#allocation2] sm:$0xff]
        %v3841 = vld [vmem:[#allocation2 + $0x8] sm:$0xff]
        %v3842 = vld [vmem:[#allocation2 + $0x10] sm:$0xff]
        %v3843 = vld [vmem:[#allocation2 + $0x18] sm:$0xff]
        %v3844 = vld [vmem:[#allocation2 + $0x20] sm:$0xff]
        %v3845 = vld [vmem:[#allocation2 + $0x28] sm:$0xff]
        %v3846 = vld [vmem:[#allocation2 + $0x30] sm:$0xff]
        %v3847 = vld [vmem:[#allocation2 + $0x38] sm:$0xff]
        %v3848 = vld [vmem:[#allocation2 + $0x40] sm:$0xff]
        %v3849 = vld [vmem:[#allocation2 + $0x48] sm:$0xff]
        %v3850 = vld [vmem:[#allocation2 + $0x50] sm:$0xff]
        %v3851 = vld [vmem:[#allocation2 + $0x58] sm:$0xff]
        %v3852 = vld [vmem:[#allocation2 + $0x60] sm:$0xff]
        %v3853 = vld [vmem:[#allocation2 + $0x68] sm:$0xff]
        %v3854 = vld [vmem:[#allocation2 + $0x70] sm:$0xff]
        %v3855 = vld [vmem:[#allocation2 + $0x78] sm:$0xff]
        %v3856 = vadd.f32 %v3840, %v3824
        %v3857 = vadd.f32 %v3841, %v3825
        %v3858 = vadd.f32 %v3842, %v3826
        %v3859 = vadd.f32 %v3843, %v3827
        %v3860 = vadd.f32 %v3844, %v3828
        %v3861 = vadd.f32 %v3845, %v3829
        %v3862 = vadd.f32 %v3846, %v3830
        %v3863 = vadd.f32 %v3847, %v3831
        %v3864 = vadd.f32 %v3848, %v3832
        %v3865 = vadd.f32 %v3849, %v3833
        %v3866 = vadd.f32 %v3850, %v3834
        %v3867 = vadd.f32 %v3851, %v3835
        %v3868 = vadd.f32 %v3852, %v3836
        %v3869 = vadd.f32 %v3853, %v3837
        %v3870 = vadd.f32 %v3854, %v3838
        %v3871 = vadd.f32 %v3855, %v3839
        %3872 = vst [vmem:[#allocation2] sm:$0xff] %v3856
        %3873 = vst [vmem:[#allocation2 + $0x8] sm:$0xff] %v3857
        %3874 = vst [vmem:[#allocation2 + $0x10] sm:$0xff] %v3858
        %3875 = vst [vmem:[#allocation2 + $0x18] sm:$0xff] %v3859
        %3876 = vst [vmem:[#allocation2 + $0x20] sm:$0xff] %v3860
        %3877 = vst [vmem:[#allocation2 + $0x28] sm:$0xff] %v3861
        %3878 = vst [vmem:[#allocation2 + $0x30] sm:$0xff] %v3862
        %3879 = vst [vmem:[#allocation2 + $0x38] sm:$0xff] %v3863
        %3880 = vst [vmem:[#allocation2 + $0x40] sm:$0xff] %v3864
        %3881 = vst [vmem:[#allocation2 + $0x48] sm:$0xff] %v3865
        %3882 = vst [vmem:[#allocation2 + $0x50] sm:$0xff] %v3866
        %3883 = vst [vmem:[#allocation2 + $0x58] sm:$0xff] %v3867
        %3884 = vst [vmem:[#allocation2 + $0x60] sm:$0xff] %v3868
        %3885 = vst [vmem:[#allocation2 + $0x68] sm:$0xff] %v3869
        %3886 = vst [vmem:[#allocation2 + $0x70] sm:$0xff] %v3870
        %3887 = vst [vmem:[#allocation2 + $0x78] sm:$0xff] %v3871
        %s3888 = scalar_lea.vmem %s1371, 2048 [#allocation3]
        %v3889 = vld [vmem:[%s3888] sm:$0xff]
        %v3890 = vld [vmem:[%s3888 + $0x8] sm:$0xff]
        %v3891 = vld [vmem:[%s3888 + $0x10] sm:$0xff]
        %v3892 = vld [vmem:[%s3888 + $0x18] sm:$0xff]
        %v3893 = vld [vmem:[%s3888 + $0x20] sm:$0xff]
        %v3894 = vld [vmem:[%s3888 + $0x28] sm:$0xff]
        %v3895 = vld [vmem:[%s3888 + $0x30] sm:$0xff]
        %v3896 = vld [vmem:[%s3888 + $0x38] sm:$0xff]
        %v3897 = vld [vmem:[%s3888 + $0x40] sm:$0xff]
        %v3898 = vld [vmem:[%s3888 + $0x48] sm:$0xff]
        %v3899 = vld [vmem:[%s3888 + $0x50] sm:$0xff]
        %v3900 = vld [vmem:[%s3888 + $0x58] sm:$0xff]
        %v3901 = vld [vmem:[%s3888 + $0x60] sm:$0xff]
        %v3902 = vld [vmem:[%s3888 + $0x68] sm:$0xff]
        %v3903 = vld [vmem:[%s3888 + $0x70] sm:$0xff]
        %v3904 = vld [vmem:[%s3888 + $0x78] sm:$0xff]
        %v3905 = vld [vmem:[%s3888 + $0x80] sm:$0xff]
        %v3906 = vld [vmem:[%s3888 + $0x88] sm:$0xff]
        %v3907 = vld [vmem:[%s3888 + $0x90] sm:$0xff]
        %v3908 = vld [vmem:[%s3888 + $0x98] sm:$0xff]
        %v3909 = vld [vmem:[%s3888 + $0xa0] sm:$0xff]
        %v3910 = vld [vmem:[%s3888 + $0xa8] sm:$0xff]
        %v3911 = vld [vmem:[%s3888 + $0xb0] sm:$0xff]
        %v3912 = vld [vmem:[%s3888 + $0xb8] sm:$0xff]
        %v3913 = vld [vmem:[%s3888 + $0xc0] sm:$0xff]
        %v3914 = vld [vmem:[%s3888 + $0xc8] sm:$0xff]
        %v3915 = vld [vmem:[%s3888 + $0xd0] sm:$0xff]
        %v3916 = vld [vmem:[%s3888 + $0xd8] sm:$0xff]
        %v3917 = vld [vmem:[%s3888 + $0xe0] sm:$0xff]
        %v3918 = vld [vmem:[%s3888 + $0xe8] sm:$0xff]
        %v3919 = vld [vmem:[%s3888 + $0xf0] sm:$0xff]
        %v3920 = vld [vmem:[%s3888 + $0xf8] sm:$0xff]
        %3921 = vmatprep.subr.mxu0 0.0
        %3922 = vmatpush1.msra.mxu0 %v3889
        %3923 = vmatprep.subr.mxu0 0.0
        %3924 = vmatpush1.msra.mxu0 %v3890
        %3925 = vmatprep.subr.mxu0 0.0
        %3926 = vmatpush1.msra.mxu0 %v3891
        %3927 = vmatprep.subr.mxu0 0.0
        %3928 = vmatpush1.msra.mxu0 %v3892
        %3929 = vmatprep.subr.mxu0 0.0
        %3930 = vmatpush1.msra.mxu0 %v3893
        %3931 = vmatprep.subr.mxu0 0.0
        %3932 = vmatpush1.msra.mxu0 %v3894
        %3933 = vmatprep.subr.mxu0 0.0
        %3934 = vmatpush1.msra.mxu0 %v3895
        %3935 = vmatprep.subr.mxu0 0.0
        %3936 = vmatpush1.msra.mxu0 %v3896
        %3937 = vmatprep.subr.mxu0 0.0
        %3938 = vmatpush1.msra.mxu0 %v3897
        %3939 = vmatprep.subr.mxu0 0.0
        %3940 = vmatpush1.msra.mxu0 %v3898
        %3941 = vmatprep.subr.mxu0 0.0
        %3942 = vmatpush1.msra.mxu0 %v3899
        %3943 = vmatprep.subr.mxu0 0.0
        %3944 = vmatpush1.msra.mxu0 %v3900
        %3945 = vmatprep.subr.mxu0 0.0
        %3946 = vmatpush1.msra.mxu0 %v3901
        %3947 = vmatprep.subr.mxu0 0.0
        %3948 = vmatpush1.msra.mxu0 %v3902
        %3949 = vmatprep.subr.mxu0 0.0
        %3950 = vmatpush1.msra.mxu0 %v3903
        %3951 = vmatprep.subr.mxu0 0.0
        %3952 = vmatpush1.msra.mxu0 %v3904
        %3953 = vmatprep.subr.mxu0 0.0
        %3954 = vmatpush1.msra.mxu0 %v3905
        %3955 = vmatprep.subr.mxu0 0.0
        %3956 = vmatpush1.msra.mxu0 %v3906
        %3957 = vmatprep.subr.mxu0 0.0
        %3958 = vmatpush1.msra.mxu0 %v3907
        %3959 = vmatprep.subr.mxu0 0.0
        %3960 = vmatpush1.msra.mxu0 %v3908
        %3961 = vmatprep.subr.mxu0 0.0
        %3962 = vmatpush1.msra.mxu0 %v3909
        %3963 = vmatprep.subr.mxu0 0.0
        %3964 = vmatpush1.msra.mxu0 %v3910
        %3965 = vmatprep.subr.mxu0 0.0
        %3966 = vmatpush1.msra.mxu0 %v3911
        %3967 = vmatprep.subr.mxu0 0.0
        %3968 = vmatpush1.msra.mxu0 %v3912
        %3969 = vmatprep.subr.mxu0 0.0
        %3970 = vmatpush1.msra.mxu0 %v3913
        %3971 = vmatprep.subr.mxu0 0.0
        %3972 = vmatpush1.msra.mxu0 %v3914
        %3973 = vmatprep.subr.mxu0 0.0
        %3974 = vmatpush1.msra.mxu0 %v3915
        %3975 = vmatprep.subr.mxu0 0.0
        %3976 = vmatpush1.msra.mxu0 %v3916
        %3977 = vmatprep.subr.mxu0 0.0
        %3978 = vmatpush1.msra.mxu0 %v3917
        %3979 = vmatprep.subr.mxu0 0.0
        %3980 = vmatpush1.msra.mxu0 %v3918
        %3981 = vmatprep.subr.mxu0 0.0
        %3982 = vmatpush1.msra.mxu0 %v3919
        %3983 = vmatprep.subr.mxu0 0.0
        %3984 = vmatpush1.msra.mxu0 %v3920
        %3985 = vmatprep.mubr.f32.mxu0 %v1407
        %3986 = vmatmul.mubr.f32.gmra.mrb[0].mxu0 %v1406
        %v3987 = vpop.f32.mrb[0].mxu0
        %v3988 = vadd.f32 0.0, %v3987
        %v3989 = vpop.f32.mrb[0].mxu0
        %3990 = vmatprep.mubr.f32.mxu0 %v1409
        %3991 = vmatmul.mubr.f32.gmra.mrb[0].mxu0 %v1408
        %v3992 = vpop.f32.mrb[0].mxu0
        %v3993 = vadd.f32 0.0, %v3992
        %v3994 = vpop.f32.mrb[0].mxu0
        %3995 = vmatprep.mubr.f32.mxu0 %v1411
        %3996 = vmatmul.mubr.f32.gmra.mrb[0].mxu0 %v1410
        %v3997 = vpop.f32.mrb[0].mxu0
        %v3998 = vadd.f32 0.0, %v3997
        %v3999 = vpop.f32.mrb[0].mxu0
        %4000 = vmatprep.mubr.f32.mxu0 %v1413
        %4001 = vmatmul.mubr.f32.gmra.mrb[0].mxu0 %v1412
        %v4002 = vpop.f32.mrb[0].mxu0
        %v4003 = vadd.f32 0.0, %v4002
        %v4004 = vpop.f32.mrb[0].mxu0
        %4005 = vmatprep.mubr.f32.mxu0 %v1415
        %4006 = vmatmul.mubr.f32.gmra.mrb[0].mxu0 %v1414
        %v4007 = vpop.f32.mrb[0].mxu0
        %v4008 = vadd.f32 0.0, %v4007
        %v4009 = vpop.f32.mrb[0].mxu0
        %4010 = vmatprep.mubr.f32.mxu0 %v1417
        %4011 = vmatmul.mubr.f32.gmra.mrb[0].mxu0 %v1416
        %v4012 = vpop.f32.mrb[0].mxu0
        %v4013 = vadd.f32 0.0, %v4012
        %v4014 = vpop.f32.mrb[0].mxu0
        %4015 = vmatprep.mubr.f32.mxu0 %v1419
        %4016 = vmatmul.mubr.f32.gmra.mrb[0].mxu0 %v1418
        %v4017 = vpop.f32.mrb[0].mxu0
        %v4018 = vadd.f32 0.0, %v4017
        %v4019 = vpop.f32.mrb[0].mxu0
        %4020 = vmatprep.mubr.f32.mxu0 %v1421
        %4021 = vmatmul.mubr.f32.gmra.mrb[0].mxu0 %v1420
        %v4022 = vpop.f32.mrb[0].mxu0
        %v4023 = vadd.f32 0.0, %v4022
        %v4024 = vpop.f32.mrb[0].mxu0
        %4025 = vmatprep.mubr.f32.mxu0 %v1423
        %4026 = vmatmul.mubr.f32.gmra.mrb[0].mxu0 %v1422
        %v4027 = vpop.f32.mrb[0].mxu0
        %v4028 = vadd.f32 0.0, %v4027
        %v4029 = vpop.f32.mrb[0].mxu0
        %4030 = vmatprep.mubr.f32.mxu0 %v1425
        %4031 = vmatmul.mubr.f32.gmra.mrb[0].mxu0 %v1424
        %v4032 = vpop.f32.mrb[0].mxu0
        %v4033 = vadd.f32 0.0, %v4032
        %v4034 = vpop.f32.mrb[0].mxu0
        %4035 = vmatprep.mubr.f32.mxu0 %v1427
        %4036 = vmatmul.mubr.f32.gmra.mrb[0].mxu0 %v1426
        %v4037 = vpop.f32.mrb[0].mxu0
        %v4038 = vadd.f32 0.0, %v4037
        %v4039 = vpop.f32.mrb[0].mxu0
        %4040 = vmatprep.mubr.f32.mxu0 %v1429
        %4041 = vmatmul.mubr.f32.gmra.mrb[0].mxu0 %v1428
        %v4042 = vpop.f32.mrb[0].mxu0
        %v4043 = vadd.f32 0.0, %v4042
        %v4044 = vpop.f32.mrb[0].mxu0
        %4045 = vmatprep.mubr.f32.mxu0 %v1431
        %4046 = vmatmul.mubr.f32.gmra.mrb[0].mxu0 %v1430
        %v4047 = vpop.f32.mrb[0].mxu0
        %v4048 = vadd.f32 0.0, %v4047
        %v4049 = vpop.f32.mrb[0].mxu0
        %4050 = vmatprep.mubr.f32.mxu0 %v1433
        %4051 = vmatmul.mubr.f32.gmra.mrb[0].mxu0 %v1432
        %v4052 = vpop.f32.mrb[0].mxu0
        %v4053 = vadd.f32 0.0, %v4052
        %v4054 = vpop.f32.mrb[0].mxu0
        %4055 = vmatprep.mubr.f32.mxu0 %v1435
        %4056 = vmatmul.mubr.f32.gmra.mrb[0].mxu0 %v1434
        %v4057 = vpop.f32.mrb[0].mxu0
        %v4058 = vadd.f32 0.0, %v4057
        %v4059 = vpop.f32.mrb[0].mxu0
        %4060 = vmatprep.mubr.f32.mxu0 %v1437
        %4061 = vmatmul.mubr.f32.gmra.mrb[0].mxu0 %v1436
        %v4062 = vpop.f32.mrb[0].mxu0
        %v4063 = vadd.f32 0.0, %v4062
        %v4064 = vpop.f32.mrb[0].mxu0
        %4065 = vdwg.mxu0
        %v4066 = vrot.slane %v3988, 1
        %v4067 = vrot.slane %v3993, 1
        %v4068 = vrot.slane %v3998, 1
        %v4069 = vrot.slane %v4003, 1
        %v4070 = vrot.slane %v4008, 1
        %v4071 = vrot.slane %v4013, 1
        %v4072 = vrot.slane %v4018, 1
        %v4073 = vrot.slane %v4023, 1
        %v4074 = vrot.slane %v4028, 1
        %v4075 = vrot.slane %v4033, 1
        %v4076 = vrot.slane %v4038, 1
        %v4077 = vrot.slane %v4043, 1
        %v4078 = vrot.slane %v4048, 1
        %v4079 = vrot.slane %v4053, 1
        %v4080 = vrot.slane %v4058, 1
        %v4081 = vrot.slane %v4063, 1
        %v4082 = vsel %vm2325, %v4080, %v4081
        %v4083 = vsel %vm2325, %v4079, %v4080
        %v4084 = vsel %vm2325, %v4078, %v4079
        %v4085 = vsel %vm2325, %v4077, %v4078
        %v4086 = vsel %vm2325, %v4076, %v4077
        %v4087 = vsel %vm2325, %v4075, %v4076
        %v4088 = vsel %vm2325, %v4074, %v4075
        %v4089 = vsel %vm2325, %v4073, %v4074
        %v4090 = vsel %vm2325, %v4072, %v4073
        %v4091 = vsel %vm2325, %v4071, %v4072
        %v4092 = vsel %vm2325, %v4070, %v4071
        %v4093 = vsel %vm2325, %v4069, %v4070
        %v4094 = vsel %vm2325, %v4068, %v4069
        %v4095 = vsel %vm2325, %v4067, %v4068
        %v4096 = vsel %vm2325, %v4066, %v4067
        %v4097 = vsel %vm2325, %v4081, %v4066
        %vm4098 = vmand %vm1519, %vm1551
        %vm4099 = vmand %vm1520, %vm1552
        %vm4100 = vmand %vm1521, %vm1553
        %vm4101 = vmand %vm1522, %vm1554
        %vm4102 = vmand %vm1523, %vm1555
        %vm4103 = vmand %vm1524, %vm1556
        %vm4104 = vmand %vm1525, %vm1557
        %vm4105 = vmand %vm1526, %vm1558
        %vm4106 = vmand %vm1527, %vm1559
        %vm4107 = vmand %vm1528, %vm1560
        %vm4108 = vmand %vm1529, %vm1561
        %vm4109 = vmand %vm1530, %vm1562
        %vm4110 = vmand %vm1531, %vm1563
        %vm4111 = vmand %vm1532, %vm1564
        %vm4112 = vmand %vm1533, %vm1565
        %vm4113 = vmand %vm1534, %vm1566
        %v4114 = vsel %vm4098, 1, 0
        %v4115 = vsel %vm4099, 1, 0
        %v4116 = vsel %vm4100, 1, 0
        %v4117 = vsel %vm4101, 1, 0
        %v4118 = vsel %vm4102, 1, 0
        %v4119 = vsel %vm4103, 1, 0
        %v4120 = vsel %vm4104, 1, 0
        %v4121 = vsel %vm4105, 1, 0
        %v4122 = vsel %vm4106, 1, 0
        %v4123 = vsel %vm4107, 1, 0
        %v4124 = vsel %vm4108, 1, 0
        %v4125 = vsel %vm4109, 1, 0
        %v4126 = vsel %vm4110, 1, 0
        %v4127 = vsel %vm4111, 1, 0
        %v4128 = vsel %vm4112, 1, 0
        %v4129 = vsel %vm4113, 1, 0
        %vm4130 = vcmp.eq.s32.totalorder %v4114, 1
        %vm4131 = vcmp.eq.s32.totalorder %v4115, 1
        %vm4132 = vcmp.eq.s32.totalorder %v4116, 1
        %vm4133 = vcmp.eq.s32.totalorder %v4117, 1
        %vm4134 = vcmp.eq.s32.totalorder %v4118, 1
        %vm4135 = vcmp.eq.s32.totalorder %v4119, 1
        %vm4136 = vcmp.eq.s32.totalorder %v4120, 1
        %vm4137 = vcmp.eq.s32.totalorder %v4121, 1
        %vm4138 = vcmp.eq.s32.totalorder %v4122, 1
        %vm4139 = vcmp.eq.s32.totalorder %v4123, 1
        %vm4140 = vcmp.eq.s32.totalorder %v4124, 1
        %vm4141 = vcmp.eq.s32.totalorder %v4125, 1
        %vm4142 = vcmp.eq.s32.totalorder %v4126, 1
        %vm4143 = vcmp.eq.s32.totalorder %v4127, 1
        %vm4144 = vcmp.eq.s32.totalorder %v4128, 1
        %vm4145 = vcmp.eq.s32.totalorder %v4129, 1
        %v4146 = vsel %vm4130, %v4095, 0.0
        %v4147 = vsel %vm4131, %v4094, 0.0
        %v4148 = vsel %vm4132, %v4093, 0.0
        %v4149 = vsel %vm4133, %v4092, 0.0
        %v4150 = vsel %vm4134, %v4091, 0.0
        %v4151 = vsel %vm4135, %v4090, 0.0
        %v4152 = vsel %vm4136, %v4089, 0.0
        %v4153 = vsel %vm4137, %v4088, 0.0
        %v4154 = vsel %vm4138, %v4087, 0.0
        %v4155 = vsel %vm4139, %v4086, 0.0
        %v4156 = vsel %vm4140, %v4085, 0.0
        %v4157 = vsel %vm4141, %v4084, 0.0
        %v4158 = vsel %vm4142, %v4083, 0.0
        %v4159 = vsel %vm4143, %v4082, 0.0
        %v4160 = vsel %vm4144, %v4097, 0.0
        %v4161 = vsel %vm4145, %v4096, 0.0
        %v4162 = vld [vmem:[#allocation2] sm:$0xff]
        %v4163 = vld [vmem:[#allocation2 + $0x8] sm:$0xff]
        %v4164 = vld [vmem:[#allocation2 + $0x10] sm:$0xff]
        %v4165 = vld [vmem:[#allocation2 + $0x18] sm:$0xff]
        %v4166 = vld [vmem:[#allocation2 + $0x20] sm:$0xff]
        %v4167 = vld [vmem:[#allocation2 + $0x28] sm:$0xff]
        %v4168 = vld [vmem:[#allocation2 + $0x30] sm:$0xff]
        %v4169 = vld [vmem:[#allocation2 + $0x38] sm:$0xff]
        %v4170 = vld [vmem:[#allocation2 + $0x40] sm:$0xff]
        %v4171 = vld [vmem:[#allocation2 + $0x48] sm:$0xff]
        %v4172 = vld [vmem:[#allocation2 + $0x50] sm:$0xff]
        %v4173 = vld [vmem:[#allocation2 + $0x58] sm:$0xff]
        %v4174 = vld [vmem:[#allocation2 + $0x60] sm:$0xff]
        %v4175 = vld [vmem:[#allocation2 + $0x68] sm:$0xff]
        %v4176 = vld [vmem:[#allocation2 + $0x70] sm:$0xff]
        %v4177 = vld [vmem:[#allocation2 + $0x78] sm:$0xff]
        %v4178 = vadd.f32 %v4162, %v4146
        %v4179 = vadd.f32 %v4163, %v4147
        %v4180 = vadd.f32 %v4164, %v4148
        %v4181 = vadd.f32 %v4165, %v4149
        %v4182 = vadd.f32 %v4166, %v4150
        %v4183 = vadd.f32 %v4167, %v4151
        %v4184 = vadd.f32 %v4168, %v4152
        %v4185 = vadd.f32 %v4169, %v4153
        %v4186 = vadd.f32 %v4170, %v4154
        %v4187 = vadd.f32 %v4171, %v4155
        %v4188 = vadd.f32 %v4172, %v4156
        %v4189 = vadd.f32 %v4173, %v4157
        %v4190 = vadd.f32 %v4174, %v4158
        %v4191 = vadd.f32 %v4175, %v4159
        %v4192 = vadd.f32 %v4176, %v4160
        %v4193 = vadd.f32 %v4177, %v4161
        %4194 = vst [vmem:[#allocation2] sm:$0xff] %v4178
        %4195 = vst [vmem:[#allocation2 + $0x8] sm:$0xff] %v4179
        %4196 = vst [vmem:[#allocation2 + $0x10] sm:$0xff] %v4180
        %4197 = vst [vmem:[#allocation2 + $0x18] sm:$0xff] %v4181
        %4198 = vst [vmem:[#allocation2 + $0x20] sm:$0xff] %v4182
        %4199 = vst [vmem:[#allocation2 + $0x28] sm:$0xff] %v4183
        %4200 = vst [vmem:[#allocation2 + $0x30] sm:$0xff] %v4184
        %4201 = vst [vmem:[#allocation2 + $0x38] sm:$0xff] %v4185
        %4202 = vst [vmem:[#allocation2 + $0x40] sm:$0xff] %v4186
        %4203 = vst [vmem:[#allocation2 + $0x48] sm:$0xff] %v4187
        %4204 = vst [vmem:[#allocation2 + $0x50] sm:$0xff] %v4188
        %4205 = vst [vmem:[#allocation2 + $0x58] sm:$0xff] %v4189
        %4206 = vst [vmem:[#allocation2 + $0x60] sm:$0xff] %v4190
        %4207 = vst [vmem:[#allocation2 + $0x68] sm:$0xff] %v4191
        %4208 = vst [vmem:[#allocation2 + $0x70] sm:$0xff] %v4192
        %4209 = vst [vmem:[#allocation2 + $0x78] sm:$0xff] %v4193
        %v4210 = vld [vmem:[#allocation2] sm:$0xff]
        %v4211 = vld [vmem:[#allocation2 + $0x8] sm:$0xff]
        %v4212 = vld [vmem:[#allocation2 + $0x10] sm:$0xff]
        %v4213 = vld [vmem:[#allocation2 + $0x18] sm:$0xff]
        %v4214 = vld [vmem:[#allocation2 + $0x20] sm:$0xff]
        %v4215 = vld [vmem:[#allocation2 + $0x28] sm:$0xff]
        %v4216 = vld [vmem:[#allocation2 + $0x30] sm:$0xff]
        %v4217 = vld [vmem:[#allocation2 + $0x38] sm:$0xff]
        %v4218 = vld [vmem:[#allocation2 + $0x40] sm:$0xff]
        %v4219 = vld [vmem:[#allocation2 + $0x48] sm:$0xff]
        %v4220 = vld [vmem:[#allocation2 + $0x50] sm:$0xff]
        %v4221 = vld [vmem:[#allocation2 + $0x58] sm:$0xff]
        %v4222 = vld [vmem:[#allocation2 + $0x60] sm:$0xff]
        %v4223 = vld [vmem:[#allocation2 + $0x68] sm:$0xff]
        %v4224 = vld [vmem:[#allocation2 + $0x70] sm:$0xff]
        %v4225 = vld [vmem:[#allocation2 + $0x78] sm:$0xff]
        %v4226 = vadd.f32 %v4210, %v4211
        %v4227 = vadd.f32 %v4226, %v4212
        %v4228 = vadd.f32 %v4227, %v4213
        %v4229 = vadd.f32 %v4228, %v4214
        %v4230 = vadd.f32 %v4229, %v4215
        %v4231 = vadd.f32 %v4230, %v4216
        %v4232 = vadd.f32 %v4231, %v4217
        %v4233 = vadd.f32 %v4232, %v4218
        %v4234 = vadd.f32 %v4233, %v4219
        %v4235 = vadd.f32 %v4234, %v4220
        %v4236 = vadd.f32 %v4235, %v4221
        %v4237 = vadd.f32 %v4236, %v4222
        %v4238 = vadd.f32 %v4237, %v4223
        %v4239 = vadd.f32 %v4238, %v4224
        %v4240 = vadd.f32 %v4239, %v4225
        %v4241 = vrot.slane %v4240, 4
        %v4242 = vadd.f32 %v4240, %v4241
        %v4243 = vrot.slane %v4242, 2
        %v4244 = vadd.f32 %v4242, %v4243
        %v4245 = vrot.slane %v4244, 1
        %v4246 = vadd.f32 %v4244, %v4245
        %v4247 = vrcp.pop 128.0
        %v4248 = vmul.f32 %v4246, %v4247
        %v4249 = vsub.f32 %v4210, %v4248
        %v4250 = vsub.f32 %v4211, %v4248
        %v4251 = vsub.f32 %v4212, %v4248
        %v4252 = vsub.f32 %v4213, %v4248
        %v4253 = vsub.f32 %v4214, %v4248
        %v4254 = vsub.f32 %v4215, %v4248
        %v4255 = vsub.f32 %v4216, %v4248
        %v4256 = vsub.f32 %v4217, %v4248
        %v4257 = vsub.f32 %v4218, %v4248
        %v4258 = vsub.f32 %v4219, %v4248
        %v4259 = vsub.f32 %v4220, %v4248
        %v4260 = vsub.f32 %v4221, %v4248
        %v4261 = vsub.f32 %v4222, %v4248
        %v4262 = vsub.f32 %v4223, %v4248
        %v4263 = vsub.f32 %v4224, %v4248
        %v4264 = vsub.f32 %v4225, %v4248
        %v4265 = vmul.f32 %v4249, %v4249
        %v4266 = vmul.f32 %v4250, %v4250
        %v4267 = vmul.f32 %v4251, %v4251
        %v4268 = vmul.f32 %v4252, %v4252
        %v4269 = vmul.f32 %v4253, %v4253
        %v4270 = vmul.f32 %v4254, %v4254
        %v4271 = vmul.f32 %v4255, %v4255
        %v4272 = vmul.f32 %v4256, %v4256
        %v4273 = vmul.f32 %v4257, %v4257
        %v4274 = vmul.f32 %v4258, %v4258
        %v4275 = vmul.f32 %v4259, %v4259
        %v4276 = vmul.f32 %v4260, %v4260
        %v4277 = vmul.f32 %v4261, %v4261
        %v4278 = vmul.f32 %v4262, %v4262
        %v4279 = vmul.f32 %v4263, %v4263
        %v4280 = vmul.f32 %v4264, %v4264
        %v4281 = vadd.f32 %v4265, %v4266
        %v4282 = vadd.f32 %v4281, %v4267
        %v4283 = vadd.f32 %v4282, %v4268
        %v4284 = vadd.f32 %v4283, %v4269
        %v4285 = vadd.f32 %v4284, %v4270
        %v4286 = vadd.f32 %v4285, %v4271
        %v4287 = vadd.f32 %v4286, %v4272
        %v4288 = vadd.f32 %v4287, %v4273
        %v4289 = vadd.f32 %v4288, %v4274
        %v4290 = vadd.f32 %v4289, %v4275
        %v4291 = vadd.f32 %v4290, %v4276
        %v4292 = vadd.f32 %v4291, %v4277
        %v4293 = vadd.f32 %v4292, %v4278
        %v4294 = vadd.f32 %v4293, %v4279
        %v4295 = vadd.f32 %v4294, %v4280
        %v4296 = vrot.slane %v4295, 4
        %v4297 = vadd.f32 %v4295, %v4296
        %v4298 = vrot.slane %v4297, 2
        %v4299 = vadd.f32 %v4297, %v4298
        %v4300 = vrot.slane %v4299, 1
        %v4301 = vadd.f32 %v4299, %v4300
        %v4302 = vmul.f32 %v4301, %v4247
        %v4303 = vld [vmem:[%s1402] sm:$0x1]
        %v4304 = vadd.f32 %v4302, 1e-05
        %v4305 = vrsqrt.pop %v4304
        %v4306 = vmul.f32 %v4303, %v4305
        %v4308 = vlaneseq
        %v4309 = vshrl.u32 %v4308, 7
        %v4310 = vsub.s32 0, %v4309
        %v4311 = vrot.slane %v4306, %v4310
        %v4313 = vmul.f32 %v4249, %v4311
        %v4314 = vmul.f32 %v4250, %v4311
        %v4315 = vmul.f32 %v4251, %v4311
        %v4316 = vmul.f32 %v4252, %v4311
        %v4317 = vmul.f32 %v4253, %v4311
        %v4318 = vmul.f32 %v4254, %v4311
        %v4319 = vmul.f32 %v4255, %v4311
        %v4320 = vmul.f32 %v4256, %v4311
        %v4321 = vmul.f32 %v4257, %v4311
        %v4322 = vmul.f32 %v4258, %v4311
        %v4323 = vmul.f32 %v4259, %v4311
        %v4324 = vmul.f32 %v4260, %v4311
        %v4325 = vmul.f32 %v4261, %v4311
        %v4326 = vmul.f32 %v4262, %v4311
        %v4327 = vmul.f32 %v4263, %v4311
        %v4328 = vmul.f32 %v4264, %v4311
        %v4329 = vld [vmem:[%s1405] sm:$0x1]
        %v4331 = vlaneseq
        %v4332 = vshrl.u32 %v4331, 7
        %v4333 = vsub.s32 0, %v4332
        %v4334 = vrot.slane %v4329, %v4333
        %v4336 = vadd.f32 %v4313, %v4334
        %v4337 = vadd.f32 %v4314, %v4334
        %v4338 = vadd.f32 %v4315, %v4334
        %v4339 = vadd.f32 %v4316, %v4334
        %v4340 = vadd.f32 %v4317, %v4334
        %v4341 = vadd.f32 %v4318, %v4334
        %v4342 = vadd.f32 %v4319, %v4334
        %v4343 = vadd.f32 %v4320, %v4334
        %v4344 = vadd.f32 %v4321, %v4334
        %v4345 = vadd.f32 %v4322, %v4334
        %v4346 = vadd.f32 %v4323, %v4334
        %v4347 = vadd.f32 %v4324, %v4334
        %v4348 = vadd.f32 %v4325, %v4334
        %v4349 = vadd.f32 %v4326, %v4334
        %v4350 = vadd.f32 %v4327, %v4334
        %v4351 = vadd.f32 %v4328, %v4334
        %v4352 = vmax.f32 %v4336, 0.0
        %v4353 = vmax.f32 %v4337, 0.0
        %v4354 = vmax.f32 %v4338, 0.0
        %v4355 = vmax.f32 %v4339, 0.0
        %v4356 = vmax.f32 %v4340, 0.0
        %v4357 = vmax.f32 %v4341, 0.0
        %v4358 = vmax.f32 %v4342, 0.0
        %v4359 = vmax.f32 %v4343, 0.0
        %v4360 = vmax.f32 %v4344, 0.0
        %v4361 = vmax.f32 %v4345, 0.0
        %v4362 = vmax.f32 %v4346, 0.0
        %v4363 = vmax.f32 %v4347, 0.0
        %v4364 = vmax.f32 %v4348, 0.0
        %v4365 = vmax.f32 %v4349, 0.0
        %v4366 = vmax.f32 %v4350, 0.0
        %v4367 = vmax.f32 %v4351, 0.0
        %4368 = vst [vmem:[%s1399] sm:$0xff] %v4352
        %4369 = vst [vmem:[%s1399 + $0x8] sm:$0xff] %v4353
        %4370 = vst [vmem:[%s1399 + $0x10] sm:$0xff] %v4354
        %4371 = vst [vmem:[%s1399 + $0x18] sm:$0xff] %v4355
        %4372 = vst [vmem:[%s1399 + $0x20] sm:$0xff] %v4356
        %4373 = vst [vmem:[%s1399 + $0x28] sm:$0xff] %v4357
        %4374 = vst [vmem:[%s1399 + $0x30] sm:$0xff] %v4358
        %4375 = vst [vmem:[%s1399 + $0x38] sm:$0xff] %v4359
        %4376 = vst [vmem:[%s1399 + $0x40] sm:$0xff] %v4360
        %4377 = vst [vmem:[%s1399 + $0x48] sm:$0xff] %v4361
        %4378 = vst [vmem:[%s1399 + $0x50] sm:$0xff] %v4362
        %4379 = vst [vmem:[%s1399 + $0x58] sm:$0xff] %v4363
        %4380 = vst [vmem:[%s1399 + $0x60] sm:$0xff] %v4364
        %4381 = vst [vmem:[%s1399 + $0x68] sm:$0xff] %v4365
        %4382 = vst [vmem:[%s1399 + $0x70] sm:$0xff] %v4366
        %4383 = vst [vmem:[%s1399 + $0x78] sm:$0xff] %v4367
        %s4384 = sand.u32 %s125, 1
        %s4385 = scalar_lea.sflag [#allocation5], %s4384
        %s4386 = sand.u32 %s125, 1
        %s4387 = smul.addr %s4386, 128
        %s4388 = scalar_lea.vmem [#allocation4], %s4387
        // Predicated region
        $region75: #{block_of_dmt3.1} parent=69 // pred_check
          %p4389 = pneg %p135
        $region76: #{block_of_dmt3.1} parent=69 // pred_check_branch
          %4391 = sbr.rel (%p4389) target = $region78
        $region77: #{block_of_dmt3.1} parent=69 // pred_region
          %s4393 = ssub.s32 2048, 2048
          %4394 = vsyncadd %s4385, %s4393
          %s4395 = smul.addr %s18, 128
          %s4396 = scalar_lea.hbm %s4, %s4395
          %s4397 = sshll.u32 %s4388, 4
          %s4398 = int_to_ptr.vmem [resolvable:$true] %s4397
          %4403 = dma.vmem_to_hbm [thread:$0]  %s4398, 2048, %s4396, %s4385, 128, 256, 8
        $region78: #{block_of_dmt3.1} parent=69 // pred_fallthru
          _
      $region70: #{block_of_dmt3.1} parent=5 // pred_fallthru
        _
      %p4404 = scmp.le.s32.totalorder 2, %s13
      // Predicated region
      $region79: #{block_of_dmt3.1} parent=5 // pred_check
        %p4405 = pneg %p4404
      $region80: #{block_of_dmt3.1} parent=5 // pred_check_branch
        %4407 = sbr.rel (%p4405) target = $region82
      $region81: #{block_of_dmt3.1} parent=5 // pred_region
        %s4408 = ssub.s32 %s13, 2
        // Predicated region
        $region83: #{block_of_dmt3.1} parent=81 // pred_check
          %p4409 = pneg %p141
        $region84: #{block_of_dmt3.1} parent=81 // pred_check_branch
          %4411 = sbr.rel (%p4409) target = $region86
        $region85: #{block_of_dmt3.1} parent=81 // pred_region
          %s4412 = sand.u32 %s126, 1
          %s4413 = scalar_lea.sflag [#allocation5], %s4412
          %s4414 = sand.u32 %s126, 1
          %s4415 = smul.addr %s4414, 128
          %s4416 = scalar_lea.vmem [#allocation4], %s4415
          %4417 = dma.done %s4413, 2048
        $region86: #{block_of_dmt3.1} parent=81 // pred_fallthru
          _
      $region82: #{block_of_dmt3.1} parent=5 // pred_fallthru
        _
    $region6: #{block_of_dmt3.1} parent=1 // loop_footer
      %s17 = sadd.s32 1, %s13
    $region7: #{block_of_dmt3.1} parent=1 // loop_footer_branch
      %12 = sbr.rel target = $region3
    $region8: #{block_of_dmt3.1} parent=1 // loop_exit
      _
    %4418 = vsyncpa [#allocation5], 1
    %s4419 = scalar_lea.sflag [#allocation5], 1
    %4420 = vsyncpa %s4419, 1

</llo_original>
